<compile_context>
chip_gen: v7x
topology: tpu7x:2x2x1
jax: 0.10.0
libtpu: 0.0.40
codegen_flags: <defaults>
</compile_context>

<pallas_src>
import jax
import jax.numpy as jnp
from jax.experimental import pallas as pl
from jax.experimental.pallas import tpu as pltpu

_SOFTPLUS_THRESHOLD = 20.0  # matches torch.nn.functional.softplus default


def _mish(x):
    # x * tanh(softplus(x)) with PyTorch's threshold=20 behaviour (f32 EUP).
    sp = jnp.where(x > _SOFTPLUS_THRESHOLD, x,
                   jnp.log1p(jnp.exp(jnp.minimum(x, _SOFTPLUS_THRESHOLD))))
    return x * jnp.tanh(sp)


def _se_resblock_kernel(x_ref, wb1_ref, b1_ref, wb2_ref, b2_ref, a1_ref, a2_ref,
                        o_ref, src_ref, acc_ref):
    NB, H, WC = x_ref.shape
    M = NB * H

    # Per-sample row-boundary masks for the H-direction halo (replaces a padded
    # scratch + misaligned kh slices).  f32, shape (M, 1).
    row = jax.lax.broadcasted_iota(jnp.int32, (M, 1), 0) % H
    keep_first = jnp.where(row != 0, 1.0, 0.0).astype(jnp.float32)        # zero: first row of each sample
    keep_last = jnp.where(row != (H - 1), 1.0, 0.0).astype(jnp.float32)   # zero: last row of each sample

    def conv3x3(wb_ref):
        # src_ref holds the bf16 conv input (M, WC); wb_ref is (3, WC, WCo) banded
        # (kw taps + Cin fused into K = W*C; BN scale pre-folded).  The kh = +-1 taps
        # are applied by rolling the f32 partials one sublane (XLU slot) and masking
        # the per-sample boundary rows, so every matmul operand read is (8,128)-aligned.
        xb = src_ref[...]
        acc_ref[...] = jnp.dot(xb, wb_ref[1], preferred_element_type=jnp.float32)
        y0 = jnp.dot(xb, wb_ref[0], preferred_element_type=jnp.float32)
        acc_ref[...] += pltpu.roll(y0, shift=1, axis=0) * keep_first       # out[h] += x[h-1] @ W[kh=0]
        y2 = jnp.dot(xb, wb_ref[2], preferred_element_type=jnp.float32)
        acc_ref[...] += pltpu.roll(y2, shift=M - 1, axis=0) * keep_last    # out[h] += x[h+1] @ W[kh=2]

    # ---- conv1 (bn1 scale folded into weights) -> +bias -> mish ----
    src_ref[...] = x_ref[...].reshape(M, WC).astype(jnp.bfloat16)
    conv3x3(wb1_ref)
    out1 = _mish(acc_ref[...] + b1_ref[...])

    # ---- conv2 (bn2 scale folded) -> +bias ----
    src_ref[...] = out1.astype(jnp.bfloat16)
    conv3x3(wb2_ref)
    acc_ref[...] += b2_ref[...]            # acc_ref now holds out2, staged in VMEM

    # ---- SE block ----
    # avg-pool over W + fc1 are folded into a1 (includes 1/(H*W)); fc2 + channel
    # tiling back to W*C lanes are folded into a2 (both zero-padded along Cr->128).
    pooled = jnp.sum(acc_ref[...].reshape(NB, H, WC), axis=1)             # (NB, W*C)
    y = jnp.maximum(
        jnp.dot(pooled, a1_ref[...], preferred_element_type=jnp.float32), 0.0)
    y = jax.nn.sigmoid(
        jnp.dot(y, a2_ref[...], preferred_element_type=jnp.float32))      # (NB, W*C)

    # ---- channel scale + residual (identity = raw input) + mish ----
    out = acc_ref[...].reshape(NB, H, WC) * y[:, None, :] + x_ref[...]
    o_ref[...] = _mish(out).astype(o_ref.dtype)


def _band_weight(w_hwio, W):
    """(3,3,Ci,Co) HWIO -> (3, W*Ci, W*Co) banded weight (W-padding baked in)."""
    KH, KW, Ci, Co = w_hwio.shape
    wb = jnp.zeros((KH, W * Ci, W * Co), w_hwio.dtype)
    for kw in range(KW):
        for w in range(W):
            iw = w + kw - 1
            if 0 <= iw < W:
                wb = wb.at[:, iw * Ci:(iw + 1) * Ci,
                           w * Co:(w + 1) * Co].set(w_hwio[:, kw])
    return wb


def _pick_batch_tile(n, h, target_rows=256):
    """Samples per grid step: fill the MXU rows (M = nb*h ~ 256 for v6e/v7x, >=128
    for v5e) while keeping >= 2 grid steps so v7x's two TensorCores both get work."""
    nb = max(1, min(n, target_rows // max(1, h)))
    if n >= 2:
        nb = min(nb, n // 2)
    nb = max(nb, 1)
    while n % nb:
        nb -= 1
    return nb


@jax.jit
def se_residual_block(x_nhwc, w1, scale1, bias1, w2, scale2, bias2, fc1_t, fc2_t):
    """x_nhwc: (N,H,W,C) f32 (channels-last); conv weights HWIO; fc*_t transposed."""
    N, H, W, C = x_nhwc.shape
    Co = w1.shape[-1]                 # identity residual => C == Co, stride 1
    Cr = fc1_t.shape[-1]
    WC = W * C
    WCo = W * Co

    nb = _pick_batch_tile(N, H)
    M = nb * H

    x_flat = x_nhwc.reshape(N, H, WC)                        # byte-identical view

    # Fold BN scale (per output channel) into the conv weights in f32, then band +
    # cast to bf16; only the bias add remains in-kernel.
    wb1 = _band_weight(w1 * scale1, W).astype(jnp.bfloat16)  # (3, W*C, W*Co)
    wb2 = _band_weight(w2 * scale2, W).astype(jnp.bfloat16)
    b1 = jnp.tile(bias1, W).reshape(1, WCo)
    b2 = jnp.tile(bias2, W).reshape(1, WCo)

    # SE folding: pool-over-W + 1/(H*W) + fc1 -> a1; fc2 + channel tiling -> a2.
    # Zero-pad the tiny reduction dim Cr to a full lane extent (unmasked loads).
    CrP = 128
    eye = jnp.eye(Co, dtype=jnp.float32)
    a1 = (jnp.tile(eye, (W, 1)) @ fc1_t) * (1.0 / (H * W))   # (W*Co, Cr)
    a2 = fc2_t @ jnp.tile(eye, (1, W))                       # (Cr, W*Co)
    a1p = jnp.zeros((WCo, CrP), jnp.float32).at[:, :Cr].set(a1)
    a2p = jnp.zeros((CrP, WCo), jnp.float32).at[:Cr, :].set(a2)

    out = pl.pallas_call(
        _se_resblock_kernel,
        out_shape=jax.ShapeDtypeStruct((N, H, WCo), jnp.float32),
        grid=(N // nb,),
        in_specs=[
            pl.BlockSpec((nb, H, WC), lambda n: (n, 0, 0)),         # x
            pl.BlockSpec((3, WC, WCo), lambda n: (0, 0, 0)),        # wb1 (scale folded)
            pl.BlockSpec((1, WCo), lambda n: (0, 0)),               # b1
            pl.BlockSpec((3, WCo, WCo), lambda n: (0, 0, 0)),       # wb2 (scale folded)
            pl.BlockSpec((1, WCo), lambda n: (0, 0)),               # b2
            pl.BlockSpec((WCo, CrP), lambda n: (0, 0)),             # a1 (pool+fc1)
            pl.BlockSpec((CrP, WCo), lambda n: (0, 0)),             # a2 (fc2+tile)
        ],
        out_specs=pl.BlockSpec((nb, H, WCo), lambda n: (n, 0, 0)),
        scratch_shapes=[
            pltpu.VMEM((M, WC), jnp.bfloat16),   # bf16 conv input (reused by both convs)
            pltpu.VMEM((M, WCo), jnp.float32),   # f32 conv accumulator / staged out2
        ],
        compiler_params=pltpu.CompilerParams(
            dimension_semantics=("parallel",)),
    )(x_flat, wb1, b1, wb2, b2, a1p, a2p)

    return out.reshape(N, H, W, Co)


def _reference_nhwc(x, w1, s1, b1, w2, s2, b2, fc1_t, fc2_t,
                    conv_dtype=jnp.float32, fold_scale=False):
    dn = ('NHWC', 'HWIO', 'NHWC')

    def conv(a, w):
        return jax.lax.conv_general_dilated(
            a.astype(conv_dtype), w.astype(conv_dtype), (1, 1), 'SAME',
            dimension_numbers=dn, preferred_element_type=jnp.float32)

    if fold_scale:   # matches the kernel's scale-into-weight (rounded once in bf16)
        o = conv(x, w1 * s1) + b1
    else:
        o = conv(x, w1) * s1 + b1
    o = _mish(o)
    if fold_scale:
        o = conv(o, w2 * s2) + b2
    else:
        o = conv(o, w2) * s2 + b2
    y = jnp.mean(o, axis=(1, 2))
    y = jnp.maximum(y @ fc1_t, 0.0)
    y = jax.nn.sigmoid(y @ fc2_t)
    o = o * y[:, None, None, :]
    return _mish(o + x)


if __name__ == "__main__":
    N, H, W, C = 8, 8, 8, 32          # in_channels == out_channels, stride=1
    reduction = 16
    Cr = C // reduction
    eps = 1e-5

    key = jax.random.PRNGKey(0)
    ks = jax.random.split(key, 13)

    x = jax.random.normal(ks[0], (N, H, W, C), jnp.float32)        # NHWC

    # conv weights in HWIO layout (torch OIHW transposed).
    w1 = 0.1 * jax.random.normal(ks[1], (3, 3, C, C), jnp.float32)
    w2 = 0.1 * jax.random.normal(ks[2], (3, 3, C, C), jnp.float32)

    # BatchNorm params + running stats (inference mode), folded to scale/bias.
    g1 = 1.0 + 0.1 * jax.random.normal(ks[3], (C,), jnp.float32)
    be1 = 0.1 * jax.random.normal(ks[4], (C,), jnp.float32)
    rm1 = 0.1 * jax.random.normal(ks[5], (C,), jnp.float32)
    rv1 = jax.random.uniform(ks[6], (C,), jnp.float32, 0.5, 1.5)
    g2 = 1.0 + 0.1 * jax.random.normal(ks[7], (C,), jnp.float32)
    be2 = 0.1 * jax.random.normal(ks[8], (C,), jnp.float32)
    rm2 = 0.1 * jax.random.normal(ks[9], (C,), jnp.float32)
    rv2 = jax.random.uniform(ks[10], (C,), jnp.float32, 0.5, 1.5)
    scale1 = g1 / jnp.sqrt(rv1 + eps)
    bias1 = be1 - rm1 * scale1
    scale2 = g2 / jnp.sqrt(rv2 + eps)
    bias2 = be2 - rm2 * scale2

    # SE fc weights: torch Linear weight is (out, in); pass transposed.
    fc1_w = 0.3 * jax.random.normal(ks[11], (Cr, C), jnp.float32)  # Linear(C, Cr)
    fc2_w = 0.3 * jax.random.normal(ks[12], (C, Cr), jnp.float32)  # Linear(Cr, C)
    fc1_t = fc1_w.T  # (C, Cr)
    fc2_t = fc2_w.T  # (Cr, C)

    out = se_residual_block(x, w1, scale1, bias1, w2, scale2, bias2, fc1_t, fc2_t)
    out = jax.block_until_ready(out)

    # Tight check vs a reference using the same bf16-rounded, scale-folded conv
    # weights / f32 accumulation as the kernel, plus a loose sanity check vs pure f32.
    ref_bf16 = _reference_nhwc(x, w1, scale1, bias1, w2, scale2, bias2,
                               fc1_t, fc2_t, conv_dtype=jnp.bfloat16,
                               fold_scale=True)
    ref_f32 = _reference_nhwc(x, w1, scale1, bias1, w2, scale2, bias2,
                              fc1_t, fc2_t, conv_dtype=jnp.float32,
                              fold_scale=False)
    err = float(jnp.max(jnp.abs(out - ref_bf16)))
    err_f32 = float(jnp.max(jnp.abs(out - ref_f32)))
    if err > 5e-3:
        raise AssertionError(f"Pallas kernel mismatch vs bf16-matched ref: {err}")
    if err_f32 > 0.5:
        raise AssertionError(f"Pallas kernel far from f32 reference: {err_f32}")

    print("KERNEL_OK")
</pallas_src>

<mosaic_0001>
module attributes {stable_mosaic.version = 11 : i64} {
  func.func @_se_resblock_kernel(%arg0: i32, %arg1: memref<4x8x256xf32, #tpu.memory_space<vmem>>, %arg2: memref<3x256x256xbf16, #tpu.memory_space<vmem>>, %arg3: memref<1x256xf32, #tpu.memory_space<vmem>>, %arg4: memref<3x256x256xbf16, #tpu.memory_space<vmem>>, %arg5: memref<1x256xf32, #tpu.memory_space<vmem>>, %arg6: memref<256x128xf32, #tpu.memory_space<vmem>>, %arg7: memref<128x256xf32, #tpu.memory_space<vmem>>, %arg8: memref<4x8x256xf32, #tpu.memory_space<vmem>>, %arg9: memref<32x256xbf16, #tpu.memory_space<vmem>>, %arg10: memref<32x256xf32, #tpu.memory_space<vmem>>) attributes {dimension_semantics = [#tpu.dimension_semantics<parallel>], iteration_bounds = array<i64: 2>, scalar_prefetch = 0 : i64, scratch_operands = 2 : i64, tpu.core_type = #tpu.core_type<tc>, window_params = [{transform_indices = @transform_0, window_bounds = array<i64: 4, 8, 256>}, {pipeline_mode = #tpu.pipeline_mode<synchronous>, transform_indices = @transform_1, window_bounds = array<i64: 3, 256, 256>}, {pipeline_mode = #tpu.pipeline_mode<synchronous>, transform_indices = @transform_2, window_bounds = array<i64: 1, 256>}, {pipeline_mode = #tpu.pipeline_mode<synchronous>, transform_indices = @transform_3, window_bounds = array<i64: 3, 256, 256>}, {pipeline_mode = #tpu.pipeline_mode<synchronous>, transform_indices = @transform_4, window_bounds = array<i64: 1, 256>}, {pipeline_mode = #tpu.pipeline_mode<synchronous>, transform_indices = @transform_5, window_bounds = array<i64: 256, 128>}, {pipeline_mode = #tpu.pipeline_mode<synchronous>, transform_indices = @transform_6, window_bounds = array<i64: 128, 256>}, {transform_indices = @transform_7, window_bounds = array<i64: 4, 8, 256>}]} {
    %0 = tpu.iota {dimensions = array<i32: 0>} : vector<32x1xi32>
    %c8_i32 = arith.constant 8 : i32
    %c0_i32 = arith.constant 0 : i32
    %1 = arith.cmpi eq, %c8_i32, %c0_i32 : i32
    %c1_i32 = arith.constant 1 : i32
    %2 = arith.select %1, %c1_i32, %c8_i32 : i32
    %3 = vector.broadcast %2 : i32 to vector<32x1xi32>
    %4 = arith.remsi %0, %3 : vector<32x1xi32>
    %c0_i32_0 = arith.constant 0 : i32
    %5 = vector.broadcast %c0_i32_0 : i32 to vector<32x1xi32>
    %6 = arith.cmpi ne, %4, %5 : vector<32x1xi32>
    %c0_i32_1 = arith.constant 0 : i32
    %7 = vector.broadcast %c0_i32_1 : i32 to vector<32x1xi32>
    %8 = arith.cmpi slt, %4, %7 : vector<32x1xi32>
    %c0_i32_2 = arith.constant 0 : i32
    %9 = arith.cmpi slt, %2, %c0_i32_2 : i32
    %10 = vector.broadcast %9 : i1 to vector<32x1xi1>
    %11 = vector.broadcast %10 : vector<32x1xi1> to vector<32x1xi1>
    %12 = arith.xori %8, %11 : vector<32x1xi1>
    %13 = arith.andi %12, %6 : vector<32x1xi1>
    %14 = vector.broadcast %2 : i32 to vector<32x1xi32>
    %15 = arith.addi %4, %14 : vector<32x1xi32>
    %16 = arith.select %13, %15, %4 : vector<32x1xi1>, vector<32x1xi32>
    %c0_i32_3 = arith.constant 0 : i32
    %17 = vector.broadcast %c0_i32_3 : i32 to vector<32x1xi32>
    %18 = arith.cmpi ne, %16, %17 : vector<32x1xi32>
    %cst = arith.constant 1.000000e+00 : f32
    %cst_4 = arith.constant 0.000000e+00 : f32
    %19 = vector.broadcast %cst : f32 to vector<32x1xf32>
    %20 = vector.broadcast %cst_4 : f32 to vector<32x1xf32>
    %21 = arith.select %18, %19, %20 : vector<32x1xi1>, vector<32x1xf32>
    %c7_i32 = arith.constant 7 : i32
    %22 = vector.broadcast %c7_i32 : i32 to vector<32x1xi32>
    %23 = arith.cmpi ne, %16, %22 : vector<32x1xi32>
    %cst_5 = arith.constant 1.000000e+00 : f32
    %cst_6 = arith.constant 0.000000e+00 : f32
    %24 = vector.broadcast %cst_5 : f32 to vector<32x1xf32>
    %25 = vector.broadcast %cst_6 : f32 to vector<32x1xf32>
    %26 = arith.select %23, %24, %25 : vector<32x1xi1>, vector<32x1xf32>
    %c0 = arith.constant 0 : index
    %c0_7 = arith.constant 0 : index
    %c0_8 = arith.constant 0 : index
    %27 = vector.load %arg1[%c0, %c0_7, %c0_8] : memref<4x8x256xf32, #tpu.memory_space<vmem>>, vector<4x8x256xf32>
    %28 = vector.shape_cast %27 : vector<4x8x256xf32> to vector<32x256xf32>
    %29 = arith.truncf %28 : vector<32x256xf32> to vector<32x256xbf16>
    %c0_9 = arith.constant 0 : index
    %c0_10 = arith.constant 0 : index
    %30 = vector.load %arg9[%c0_9, %c0_10] : memref<32x256xbf16, #tpu.memory_space<vmem>>, vector<32x256xbf16>
    tpu.vector_store %arg9[%c0_9, %c0_10], %29 {strides = array<i32>} : memref<32x256xbf16, #tpu.memory_space<vmem>>, vector<32x256xbf16>,
    %c0_11 = arith.constant 0 : index
    %c0_12 = arith.constant 0 : index
    %31 = vector.load %arg9[%c0_11, %c0_12] : memref<32x256xbf16, #tpu.memory_space<vmem>>, vector<32x256xbf16>
    %c1 = arith.constant 1 : index
    %c0_13 = arith.constant 0 : index
    %c0_14 = arith.constant 0 : index
    %32 = vector.load %arg2[%c1, %c0_13, %c0_14] : memref<3x256x256xbf16, #tpu.memory_space<vmem>>, vector<1x256x256xbf16>
    %33 = vector.shape_cast %32 : vector<1x256x256xbf16> to vector<256x256xbf16>
    %cst_15 = arith.constant dense<0.000000e+00> : vector<32x256xf32>
    %34 = tpu.matmul %31, %33, %cst_15 {dimension_numbers = #tpu.dot_dimension_numbers<[1], [0], [0], [1], [0, 0, 1, 1], [], []>} : vector<32x256xbf16>, vector<256x256xbf16>, vector<32x256xf32> -> vector<32x256xf32>
    %c0_16 = arith.constant 0 : index
    %c0_17 = arith.constant 0 : index
    %35 = vector.load %arg10[%c0_16, %c0_17] : memref<32x256xf32, #tpu.memory_space<vmem>>, vector<32x256xf32>
    tpu.vector_store %arg10[%c0_16, %c0_17], %34 {strides = array<i32>} : memref<32x256xf32, #tpu.memory_space<vmem>>, vector<32x256xf32>,
    %c0_18 = arith.constant 0 : index
    %c0_19 = arith.constant 0 : index
    %c0_20 = arith.constant 0 : index
    %36 = vector.load %arg2[%c0_18, %c0_19, %c0_20] : memref<3x256x256xbf16, #tpu.memory_space<vmem>>, vector<1x256x256xbf16>
    %37 = vector.shape_cast %36 : vector<1x256x256xbf16> to vector<256x256xbf16>
    %cst_21 = arith.constant dense<0.000000e+00> : vector<32x256xf32>
    %38 = tpu.matmul %31, %37, %cst_21 {dimension_numbers = #tpu.dot_dimension_numbers<[1], [0], [0], [1], [0, 0, 1, 1], [], []>} : vector<32x256xbf16>, vector<256x256xbf16>, vector<32x256xf32> -> vector<32x256xf32>
    %c0_22 = arith.constant 0 : index
    %c0_23 = arith.constant 0 : index
    %39 = vector.load %arg10[%c0_22, %c0_23] : memref<32x256xf32, #tpu.memory_space<vmem>>, vector<32x256xf32>
    %c1_i32_24 = arith.constant 1 : i32
    %40 = tpu.dynamic_rotate %38 by %c1_i32_24 dim 0 : vector<32x256xf32>, i32 -> vector<32x256xf32>
    %41 = vector.broadcast %21 : vector<32x1xf32> to vector<32x256xf32>
    %42 = arith.mulf %40, %41 : vector<32x256xf32>
    %43 = arith.addf %39, %42 : vector<32x256xf32>
    %c0_25 = arith.constant 0 : index
    %c0_26 = arith.constant 0 : index
    %44 = vector.load %arg10[%c0_25, %c0_26] : memref<32x256xf32, #tpu.memory_space<vmem>>, vector<32x256xf32>
    tpu.vector_store %arg10[%c0_25, %c0_26], %43 {strides = array<i32>} : memref<32x256xf32, #tpu.memory_space<vmem>>, vector<32x256xf32>,
    %c2 = arith.constant 2 : index
    %c0_27 = arith.constant 0 : index
    %c0_28 = arith.constant 0 : index
    %45 = vector.load %arg2[%c2, %c0_27, %c0_28] : memref<3x256x256xbf16, #tpu.memory_space<vmem>>, vector<1x256x256xbf16>
    %46 = vector.shape_cast %45 : vector<1x256x256xbf16> to vector<256x256xbf16>
    %cst_29 = arith.constant dense<0.000000e+00> : vector<32x256xf32>
    %47 = tpu.matmul %31, %46, %cst_29 {dimension_numbers = #tpu.dot_dimension_numbers<[1], [0], [0], [1], [0, 0, 1, 1], [], []>} : vector<32x256xbf16>, vector<256x256xbf16>, vector<32x256xf32> -> vector<32x256xf32>
    %c0_30 = arith.constant 0 : index
    %c0_31 = arith.constant 0 : index
    %48 = vector.load %arg10[%c0_30, %c0_31] : memref<32x256xf32, #tpu.memory_space<vmem>>, vector<32x256xf32>
    %c31_i32 = arith.constant 31 : i32
    %49 = tpu.dynamic_rotate %47 by %c31_i32 dim 0 : vector<32x256xf32>, i32 -> vector<32x256xf32>
    %50 = vector.broadcast %26 : vector<32x1xf32> to vector<32x256xf32>
    %51 = arith.mulf %49, %50 : vector<32x256xf32>
    %52 = arith.addf %48, %51 : vector<32x256xf32>
    %c0_32 = arith.constant 0 : index
    %c0_33 = arith.constant 0 : index
    %53 = vector.load %arg10[%c0_32, %c0_33] : memref<32x256xf32, #tpu.memory_space<vmem>>, vector<32x256xf32>
    tpu.vector_store %arg10[%c0_32, %c0_33], %52 {strides = array<i32>} : memref<32x256xf32, #tpu.memory_space<vmem>>, vector<32x256xf32>,
    %c0_34 = arith.constant 0 : index
    %c0_35 = arith.constant 0 : index
    %54 = vector.load %arg10[%c0_34, %c0_35] : memref<32x256xf32, #tpu.memory_space<vmem>>, vector<32x256xf32>
    %c0_36 = arith.constant 0 : index
    %c0_37 = arith.constant 0 : index
    %55 = vector.load %arg3[%c0_36, %c0_37] : memref<1x256xf32, #tpu.memory_space<vmem>>, vector<1x256xf32>
    %56 = vector.broadcast %55 : vector<1x256xf32> to vector<32x256xf32>
    %57 = arith.addf %54, %56 : vector<32x256xf32>
    %cst_38 = arith.constant 2.000000e+01 : f32
    %58 = vector.broadcast %cst_38 : f32 to vector<32x256xf32>
    %59 = arith.cmpf ogt, %57, %58 : vector<32x256xf32>
    %cst_39 = arith.constant 2.000000e+01 : f32
    %60 = vector.broadcast %cst_39 : f32 to vector<32x256xf32>
    %61 = arith.minimumf %57, %60 : vector<32x256xf32>
    %62 = math.exp %61 : vector<32x256xf32>
    %63 = math.log1p %62 : vector<32x256xf32>
    %64 = arith.select %59, %57, %63 : vector<32x256xi1>, vector<32x256xf32>
    %65 = math.tanh %64 : vector<32x256xf32>
    %66 = arith.mulf %57, %65 : vector<32x256xf32>
    %67 = arith.truncf %66 : vector<32x256xf32> to vector<32x256xbf16>
    %c0_40 = arith.constant 0 : index
    %c0_41 = arith.constant 0 : index
    %68 = vector.load %arg9[%c0_40, %c0_41] : memref<32x256xbf16, #tpu.memory_space<vmem>>, vector<32x256xbf16>
    tpu.vector_store %arg9[%c0_40, %c0_41], %67 {strides = array<i32>} : memref<32x256xbf16, #tpu.memory_space<vmem>>, vector<32x256xbf16>,
    %c0_42 = arith.constant 0 : index
    %c0_43 = arith.constant 0 : index
    %69 = vector.load %arg9[%c0_42, %c0_43] : memref<32x256xbf16, #tpu.memory_space<vmem>>, vector<32x256xbf16>
    %c1_44 = arith.constant 1 : index
    %c0_45 = arith.constant 0 : index
    %c0_46 = arith.constant 0 : index
    %70 = vector.load %arg4[%c1_44, %c0_45, %c0_46] : memref<3x256x256xbf16, #tpu.memory_space<vmem>>, vector<1x256x256xbf16>
    %71 = vector.shape_cast %70 : vector<1x256x256xbf16> to vector<256x256xbf16>
    %cst_47 = arith.constant dense<0.000000e+00> : vector<32x256xf32>
    %72 = tpu.matmul %69, %71, %cst_47 {dimension_numbers = #tpu.dot_dimension_numbers<[1], [0], [0], [1], [0, 0, 1, 1], [], []>} : vector<32x256xbf16>, vector<256x256xbf16>, vector<32x256xf32> -> vector<32x256xf32>
    %c0_48 = arith.constant 0 : index
    %c0_49 = arith.constant 0 : index
    %73 = vector.load %arg10[%c0_48, %c0_49] : memref<32x256xf32, #tpu.memory_space<vmem>>, vector<32x256xf32>
    tpu.vector_store %arg10[%c0_48, %c0_49], %72 {strides = array<i32>} : memref<32x256xf32, #tpu.memory_space<vmem>>, vector<32x256xf32>,
    %c0_50 = arith.constant 0 : index
    %c0_51 = arith.constant 0 : index
    %c0_52 = arith.constant 0 : index
    %74 = vector.load %arg4[%c0_50, %c0_51, %c0_52] : memref<3x256x256xbf16, #tpu.memory_space<vmem>>, vector<1x256x256xbf16>
    %75 = vector.shape_cast %74 : vector<1x256x256xbf16> to vector<256x256xbf16>
    %cst_53 = arith.constant dense<0.000000e+00> : vector<32x256xf32>
    %76 = tpu.matmul %69, %75, %cst_53 {dimension_numbers = #tpu.dot_dimension_numbers<[1], [0], [0], [1], [0, 0, 1, 1], [], []>} : vector<32x256xbf16>, vector<256x256xbf16>, vector<32x256xf32> -> vector<32x256xf32>
    %c0_54 = arith.constant 0 : index
    %c0_55 = arith.constant 0 : index
    %77 = vector.load %arg10[%c0_54, %c0_55] : memref<32x256xf32, #tpu.memory_space<vmem>>, vector<32x256xf32>
    %c1_i32_56 = arith.constant 1 : i32
    %78 = tpu.dynamic_rotate %76 by %c1_i32_56 dim 0 : vector<32x256xf32>, i32 -> vector<32x256xf32>
    %79 = vector.broadcast %21 : vector<32x1xf32> to vector<32x256xf32>
    %80 = arith.mulf %78, %79 : vector<32x256xf32>
    %81 = arith.addf %77, %80 : vector<32x256xf32>
    %c0_57 = arith.constant 0 : index
    %c0_58 = arith.constant 0 : index
    %82 = vector.load %arg10[%c0_57, %c0_58] : memref<32x256xf32, #tpu.memory_space<vmem>>, vector<32x256xf32>
    tpu.vector_store %arg10[%c0_57, %c0_58], %81 {strides = array<i32>} : memref<32x256xf32, #tpu.memory_space<vmem>>, vector<32x256xf32>,
    %c2_59 = arith.constant 2 : index
    %c0_60 = arith.constant 0 : index
    %c0_61 = arith.constant 0 : index
    %83 = vector.load %arg4[%c2_59, %c0_60, %c0_61] : memref<3x256x256xbf16, #tpu.memory_space<vmem>>, vector<1x256x256xbf16>
    %84 = vector.shape_cast %83 : vector<1x256x256xbf16> to vector<256x256xbf16>
    %cst_62 = arith.constant dense<0.000000e+00> : vector<32x256xf32>
    %85 = tpu.matmul %69, %84, %cst_62 {dimension_numbers = #tpu.dot_dimension_numbers<[1], [0], [0], [1], [0, 0, 1, 1], [], []>} : vector<32x256xbf16>, vector<256x256xbf16>, vector<32x256xf32> -> vector<32x256xf32>
    %c0_63 = arith.constant 0 : index
    %c0_64 = arith.constant 0 : index
    %86 = vector.load %arg10[%c0_63, %c0_64] : memref<32x256xf32, #tpu.memory_space<vmem>>, vector<32x256xf32>
    %c31_i32_65 = arith.constant 31 : i32
    %87 = tpu.dynamic_rotate %85 by %c31_i32_65 dim 0 : vector<32x256xf32>, i32 -> vector<32x256xf32>
    %88 = vector.broadcast %26 : vector<32x1xf32> to vector<32x256xf32>
    %89 = arith.mulf %87, %88 : vector<32x256xf32>
    %90 = arith.addf %86, %89 : vector<32x256xf32>
    %c0_66 = arith.constant 0 : index
    %c0_67 = arith.constant 0 : index
    %91 = vector.load %arg10[%c0_66, %c0_67] : memref<32x256xf32, #tpu.memory_space<vmem>>, vector<32x256xf32>
    tpu.vector_store %arg10[%c0_66, %c0_67], %90 {strides = array<i32>} : memref<32x256xf32, #tpu.memory_space<vmem>>, vector<32x256xf32>,
    %c0_68 = arith.constant 0 : index
    %c0_69 = arith.constant 0 : index
    %92 = vector.load %arg10[%c0_68, %c0_69] : memref<32x256xf32, #tpu.memory_space<vmem>>, vector<32x256xf32>
    %c0_70 = arith.constant 0 : index
    %c0_71 = arith.constant 0 : index
    %93 = vector.load %arg5[%c0_70, %c0_71] : memref<1x256xf32, #tpu.memory_space<vmem>>, vector<1x256xf32>
    %94 = vector.broadcast %93 : vector<1x256xf32> to vector<32x256xf32>
    %95 = arith.addf %92, %94 : vector<32x256xf32>
    %c0_72 = arith.constant 0 : index
    %c0_73 = arith.constant 0 : index
    %96 = vector.load %arg10[%c0_72, %c0_73] : memref<32x256xf32, #tpu.memory_space<vmem>>, vector<32x256xf32>
    tpu.vector_store %arg10[%c0_72, %c0_73], %95 {strides = array<i32>} : memref<32x256xf32, #tpu.memory_space<vmem>>, vector<32x256xf32>,
    %c0_74 = arith.constant 0 : index
    %c0_75 = arith.constant 0 : index
    %97 = vector.load %arg10[%c0_74, %c0_75] : memref<32x256xf32, #tpu.memory_space<vmem>>, vector<32x256xf32>
    %98 = vector.shape_cast %97 : vector<32x256xf32> to vector<4x8x256xf32>
    %cst_76 = arith.constant dense<0.000000e+00> : vector<4x256xf32>
    %99 = vector.multi_reduction <add>, %98, %cst_76 [1] : vector<4x8x256xf32> to vector<4x256xf32>
    %c0_77 = arith.constant 0 : index
    %c0_78 = arith.constant 0 : index
    %100 = vector.load %arg6[%c0_77, %c0_78] : memref<256x128xf32, #tpu.memory_space<vmem>>, vector<256x128xf32>
    %cst_79 = arith.constant dense<0.000000e+00> : vector<4x128xf32>
    %101 = tpu.matmul %99, %100, %cst_79 {dimension_numbers = #tpu.dot_dimension_numbers<[1], [0], [0], [1], [0, 0, 1, 1], [], []>} : vector<4x256xf32>, vector<256x128xf32>, vector<4x128xf32> -> vector<4x128xf32>
    %cst_80 = arith.constant 0.000000e+00 : f32
    %102 = vector.broadcast %cst_80 : f32 to vector<4x128xf32>
    %103 = arith.maximumf %101, %102 : vector<4x128xf32>
    %c0_81 = arith.constant 0 : index
    %c0_82 = arith.constant 0 : index
    %104 = vector.load %arg7[%c0_81, %c0_82] : memref<128x256xf32, #tpu.memory_space<vmem>>, vector<128x256xf32>
    %cst_83 = arith.constant dense<0.000000e+00> : vector<4x256xf32>
    %105 = tpu.matmul %103, %104, %cst_83 {dimension_numbers = #tpu.dot_dimension_numbers<[1], [0], [0], [1], [0, 0, 1, 1], [], []>} : vector<4x128xf32>, vector<128x256xf32>, vector<4x256xf32> -> vector<4x256xf32>
    %106 = arith.negf %105 : vector<4x256xf32>
    %107 = math.exp %106 : vector<4x256xf32>
    %cst_84 = arith.constant 1.000000e+00 : f32
    %108 = vector.broadcast %cst_84 : f32 to vector<4x256xf32>
    %109 = arith.addf %108, %107 : vector<4x256xf32>
    %110 = arith.divf %108, %109 : vector<4x256xf32>
    %c0_85 = arith.constant 0 : index
    %c0_86 = arith.constant 0 : index
    %111 = vector.load %arg10[%c0_85, %c0_86] : memref<32x256xf32, #tpu.memory_space<vmem>>, vector<32x256xf32>
    %112 = vector.shape_cast %111 : vector<32x256xf32> to vector<4x8x256xf32>
    %113 = vector.shape_cast %110 : vector<4x256xf32> to vector<4x1x256xf32>
    %114 = vector.broadcast %113 : vector<4x1x256xf32> to vector<4x8x256xf32>
    %115 = arith.mulf %112, %114 : vector<4x8x256xf32>
    %c0_87 = arith.constant 0 : index
    %c0_88 = arith.constant 0 : index
    %c0_89 = arith.constant 0 : index
    %116 = vector.load %arg1[%c0_87, %c0_88, %c0_89] : memref<4x8x256xf32, #tpu.memory_space<vmem>>, vector<4x8x256xf32>
    %117 = arith.addf %115, %116 : vector<4x8x256xf32>
    %cst_90 = arith.constant 2.000000e+01 : f32
    %118 = vector.broadcast %cst_90 : f32 to vector<4x8x256xf32>
    %119 = arith.cmpf ogt, %117, %118 : vector<4x8x256xf32>
    %cst_91 = arith.constant 2.000000e+01 : f32
    %120 = vector.broadcast %cst_91 : f32 to vector<4x8x256xf32>
    %121 = arith.minimumf %117, %120 : vector<4x8x256xf32>
    %122 = math.exp %121 : vector<4x8x256xf32>
    %123 = math.log1p %122 : vector<4x8x256xf32>
    %124 = arith.select %119, %117, %123 : vector<4x8x256xi1>, vector<4x8x256xf32>
    %125 = math.tanh %124 : vector<4x8x256xf32>
    %126 = arith.mulf %117, %125 : vector<4x8x256xf32>
    %c0_92 = arith.constant 0 : index
    %c0_93 = arith.constant 0 : index
    %c0_94 = arith.constant 0 : index
    %127 = vector.load %arg8[%c0_92, %c0_93, %c0_94] : memref<4x8x256xf32, #tpu.memory_space<vmem>>, vector<4x8x256xf32>
    tpu.vector_store %arg8[%c0_92, %c0_93, %c0_94], %126 {strides = array<i32>} : memref<4x8x256xf32, #tpu.memory_space<vmem>>, vector<4x8x256xf32>,
    return
  }
  func.func @transform_0(%arg0: i32) -> (i32, i32, i32) {
    %c0_i32 = arith.constant 0 : i32
    %c0_i32_0 = arith.constant 0 : i32
    %c0_i32_1 = arith.constant 0 : i32
    return %arg0, %c0_i32, %c0_i32_0 : i32, i32, i32
  }
  func.func @transform_1(%arg0: i32) -> (i32, i32, i32) {
    %c0_i32 = arith.constant 0 : i32
    %c0_i32_0 = arith.constant 0 : i32
    %c0_i32_1 = arith.constant 0 : i32
    %c0_i32_2 = arith.constant 0 : i32
    return %c0_i32, %c0_i32_0, %c0_i32_1 : i32, i32, i32
  }
  func.func @transform_2(%arg0: i32) -> (i32, i32) {
    %c0_i32 = arith.constant 0 : i32
    %c0_i32_0 = arith.constant 0 : i32
    %c0_i32_1 = arith.constant 0 : i32
    return %c0_i32, %c0_i32_0 : i32, i32
  }
  func.func @transform_3(%arg0: i32) -> (i32, i32, i32) {
    %c0_i32 = arith.constant 0 : i32
    %c0_i32_0 = arith.constant 0 : i32
    %c0_i32_1 = arith.constant 0 : i32
    %c0_i32_2 = arith.constant 0 : i32
    return %c0_i32, %c0_i32_0, %c0_i32_1 : i32, i32, i32
  }
  func.func @transform_4(%arg0: i32) -> (i32, i32) {
    %c0_i32 = arith.constant 0 : i32
    %c0_i32_0 = arith.constant 0 : i32
    %c0_i32_1 = arith.constant 0 : i32
    return %c0_i32, %c0_i32_0 : i32, i32
  }
  func.func @transform_5(%arg0: i32) -> (i32, i32) {
    %c0_i32 = arith.constant 0 : i32
    %c0_i32_0 = arith.constant 0 : i32
    %c0_i32_1 = arith.constant 0 : i32
    return %c0_i32, %c0_i32_0 : i32, i32
  }
  func.func @transform_6(%arg0: i32) -> (i32, i32) {
    %c0_i32 = arith.constant 0 : i32
    %c0_i32_0 = arith.constant 0 : i32
    %c0_i32_1 = arith.constant 0 : i32
    return %c0_i32, %c0_i32_0 : i32, i32
  }
  func.func @transform_7(%arg0: i32) -> (i32, i32, i32) {
    %c0_i32 = arith.constant 0 : i32
    %c0_i32_0 = arith.constant 0 : i32
    %c0_i32_1 = arith.constant 0 : i32
    return %arg0, %c0_i32, %c0_i32_0 : i32, i32, i32
  }
}

</mosaic_0001>

<llo_original>
// kernel: tile.39
$region0: #{tile.39}
  %s0 = inlined_call_operand.vmem [shape: bf16[32,8,32], index: 0, kind: input, shape index: {}]
  %s1 = inlined_call_operand.vmem [shape: bf16[32,256], index: 1, kind: output, shape index: {}]
  $region1: #{tile.39} parent=0
    #allocation0 [shape = 'u8[32768]{0}', space=vmem, size = 0x8000, scoped, tag = 'scoped mem for output reshape']
    #allocation1 [shape = 'u8[131072]{0}', space=vmem, size = 0x20000, scoped, tag = 'scoped mem for input reshape']
    %s3 = smul.u32 4, 2
    %s4 = sshllo.u32 0, %s3
    %s5 = smul.addr 4, 31
    %s6 = scalar_lea.vmem %s0, %s5
    %s7 = sshrl.u32 %s4, 1
    %s8 = sor.u32 %s4, %s7
    %s9 = sand.u32 %s8, 85
    %s10 = sshrl.u32 %s9, 1
    %s11 = sor.u32 %s9, %s10
    %s12 = sand.u32 51, %s11
    %s13 = sshrl.u32 %s12, 2
    %s14 = sor.u32 %s12, %s13
    %s15 = sand.u32 15, %s14
    %v16 = vld [vmem:[%s6] sm:%s15]
    %v17 = vunpack.c.l.bf16 %v16
    %v18 = vunpack.c.h.bf16 %v16
    %s19 = scalar_lea.vmem [#allocation1], 248
    %20 = vst [vmem:[%s19] sm:%s4] %v17
    %s21 = smul.addr 4, 30
    %s22 = scalar_lea.vmem %s0, %s21
    %s23 = sshrl.u32 %s4, 1
    %s24 = sor.u32 %s4, %s23
    %s25 = sand.u32 %s24, 85
    %s26 = sshrl.u32 %s25, 1
    %s27 = sor.u32 %s25, %s26
    %s28 = sand.u32 51, %s27
    %s29 = sshrl.u32 %s28, 2
    %s30 = sor.u32 %s28, %s29
    %s31 = sand.u32 15, %s30
    %v32 = vld [vmem:[%s22] sm:%s31]
    %v33 = vunpack.c.l.bf16 %v32
    %v34 = vunpack.c.h.bf16 %v32
    %s35 = scalar_lea.vmem [#allocation1], 240
    %36 = vst [vmem:[%s35] sm:%s4] %v33
    %s37 = smul.addr 4, 29
    %s38 = scalar_lea.vmem %s0, %s37
    %s39 = sshrl.u32 %s4, 1
    %s40 = sor.u32 %s4, %s39
    %s41 = sand.u32 %s40, 85
    %s42 = sshrl.u32 %s41, 1
    %s43 = sor.u32 %s41, %s42
    %s44 = sand.u32 51, %s43
    %s45 = sshrl.u32 %s44, 2
    %s46 = sor.u32 %s44, %s45
    %s47 = sand.u32 15, %s46
    %v48 = vld [vmem:[%s38] sm:%s47]
    %v49 = vunpack.c.l.bf16 %v48
    %v50 = vunpack.c.h.bf16 %v48
    %s51 = scalar_lea.vmem [#allocation1], 232
    %52 = vst [vmem:[%s51] sm:%s4] %v49
    %s53 = smul.addr 4, 28
    %s54 = scalar_lea.vmem %s0, %s53
    %s55 = sshrl.u32 %s4, 1
    %s56 = sor.u32 %s4, %s55
    %s57 = sand.u32 %s56, 85
    %s58 = sshrl.u32 %s57, 1
    %s59 = sor.u32 %s57, %s58
    %s60 = sand.u32 51, %s59
    %s61 = sshrl.u32 %s60, 2
    %s62 = sor.u32 %s60, %s61
    %s63 = sand.u32 15, %s62
    %v64 = vld [vmem:[%s54] sm:%s63]
    %v65 = vunpack.c.l.bf16 %v64
    %v66 = vunpack.c.h.bf16 %v64
    %s67 = scalar_lea.vmem [#allocation1], 224
    %68 = vst [vmem:[%s67] sm:%s4] %v65
    %s69 = smul.addr 4, 27
    %s70 = scalar_lea.vmem %s0, %s69
    %s71 = sshrl.u32 %s4, 1
    %s72 = sor.u32 %s4, %s71
    %s73 = sand.u32 %s72, 85
    %s74 = sshrl.u32 %s73, 1
    %s75 = sor.u32 %s73, %s74
    %s76 = sand.u32 51, %s75
    %s77 = sshrl.u32 %s76, 2
    %s78 = sor.u32 %s76, %s77
    %s79 = sand.u32 15, %s78
    %v80 = vld [vmem:[%s70] sm:%s79]
    %v81 = vunpack.c.l.bf16 %v80
    %v82 = vunpack.c.h.bf16 %v80
    %s83 = scalar_lea.vmem [#allocation1], 216
    %84 = vst [vmem:[%s83] sm:%s4] %v81
    %s85 = smul.addr 4, 26
    %s86 = scalar_lea.vmem %s0, %s85
    %s87 = sshrl.u32 %s4, 1
    %s88 = sor.u32 %s4, %s87
    %s89 = sand.u32 %s88, 85
    %s90 = sshrl.u32 %s89, 1
    %s91 = sor.u32 %s89, %s90
    %s92 = sand.u32 51, %s91
    %s93 = sshrl.u32 %s92, 2
    %s94 = sor.u32 %s92, %s93
    %s95 = sand.u32 15, %s94
    %v96 = vld [vmem:[%s86] sm:%s95]
    %v97 = vunpack.c.l.bf16 %v96
    %v98 = vunpack.c.h.bf16 %v96
    %s99 = scalar_lea.vmem [#allocation1], 208
    %100 = vst [vmem:[%s99] sm:%s4] %v97
    %s101 = smul.addr 4, 25
    %s102 = scalar_lea.vmem %s0, %s101
    %s103 = sshrl.u32 %s4, 1
    %s104 = sor.u32 %s4, %s103
    %s105 = sand.u32 %s104, 85
    %s106 = sshrl.u32 %s105, 1
    %s107 = sor.u32 %s105, %s106
    %s108 = sand.u32 51, %s107
    %s109 = sshrl.u32 %s108, 2
    %s110 = sor.u32 %s108, %s109
    %s111 = sand.u32 15, %s110
    %v112 = vld [vmem:[%s102] sm:%s111]
    %v113 = vunpack.c.l.bf16 %v112
    %v114 = vunpack.c.h.bf16 %v112
    %s115 = scalar_lea.vmem [#allocation1], 200
    %116 = vst [vmem:[%s115] sm:%s4] %v113
    %s117 = smul.addr 4, 24
    %s118 = scalar_lea.vmem %s0, %s117
    %s119 = sshrl.u32 %s4, 1
    %s120 = sor.u32 %s4, %s119
    %s121 = sand.u32 %s120, 85
    %s122 = sshrl.u32 %s121, 1
    %s123 = sor.u32 %s121, %s122
    %s124 = sand.u32 51, %s123
    %s125 = sshrl.u32 %s124, 2
    %s126 = sor.u32 %s124, %s125
    %s127 = sand.u32 15, %s126
    %v128 = vld [vmem:[%s118] sm:%s127]
    %v129 = vunpack.c.l.bf16 %v128
    %v130 = vunpack.c.h.bf16 %v128
    %s131 = scalar_lea.vmem [#allocation1], 192
    %132 = vst [vmem:[%s131] sm:%s4] %v129
    %s133 = smul.addr 4, 23
    %s134 = scalar_lea.vmem %s0, %s133
    %s135 = sshrl.u32 %s4, 1
    %s136 = sor.u32 %s4, %s135
    %s137 = sand.u32 %s136, 85
    %s138 = sshrl.u32 %s137, 1
    %s139 = sor.u32 %s137, %s138
    %s140 = sand.u32 51, %s139
    %s141 = sshrl.u32 %s140, 2
    %s142 = sor.u32 %s140, %s141
    %s143 = sand.u32 15, %s142
    %v144 = vld [vmem:[%s134] sm:%s143]
    %v145 = vunpack.c.l.bf16 %v144
    %v146 = vunpack.c.h.bf16 %v144
    %s147 = scalar_lea.vmem [#allocation1], 184
    %148 = vst [vmem:[%s147] sm:%s4] %v145
    %s149 = smul.addr 4, 22
    %s150 = scalar_lea.vmem %s0, %s149
    %s151 = sshrl.u32 %s4, 1
    %s152 = sor.u32 %s4, %s151
    %s153 = sand.u32 %s152, 85
    %s154 = sshrl.u32 %s153, 1
    %s155 = sor.u32 %s153, %s154
    %s156 = sand.u32 51, %s155
    %s157 = sshrl.u32 %s156, 2
    %s158 = sor.u32 %s156, %s157
    %s159 = sand.u32 15, %s158
    %v160 = vld [vmem:[%s150] sm:%s159]
    %v161 = vunpack.c.l.bf16 %v160
    %v162 = vunpack.c.h.bf16 %v160
    %s163 = scalar_lea.vmem [#allocation1], 176
    %164 = vst [vmem:[%s163] sm:%s4] %v161
    %s165 = smul.addr 4, 21
    %s166 = scalar_lea.vmem %s0, %s165
    %s167 = sshrl.u32 %s4, 1
    %s168 = sor.u32 %s4, %s167
    %s169 = sand.u32 %s168, 85
    %s170 = sshrl.u32 %s169, 1
    %s171 = sor.u32 %s169, %s170
    %s172 = sand.u32 51, %s171
    %s173 = sshrl.u32 %s172, 2
    %s174 = sor.u32 %s172, %s173
    %s175 = sand.u32 15, %s174
    %v176 = vld [vmem:[%s166] sm:%s175]
    %v177 = vunpack.c.l.bf16 %v176
    %v178 = vunpack.c.h.bf16 %v176
    %s179 = scalar_lea.vmem [#allocation1], 168
    %180 = vst [vmem:[%s179] sm:%s4] %v177
    %s181 = smul.addr 4, 20
    %s182 = scalar_lea.vmem %s0, %s181
    %s183 = sshrl.u32 %s4, 1
    %s184 = sor.u32 %s4, %s183
    %s185 = sand.u32 %s184, 85
    %s186 = sshrl.u32 %s185, 1
    %s187 = sor.u32 %s185, %s186
    %s188 = sand.u32 51, %s187
    %s189 = sshrl.u32 %s188, 2
    %s190 = sor.u32 %s188, %s189
    %s191 = sand.u32 15, %s190
    %v192 = vld [vmem:[%s182] sm:%s191]
    %v193 = vunpack.c.l.bf16 %v192
    %v194 = vunpack.c.h.bf16 %v192
    %s195 = scalar_lea.vmem [#allocation1], 160
    %196 = vst [vmem:[%s195] sm:%s4] %v193
    %s197 = smul.addr 4, 19
    %s198 = scalar_lea.vmem %s0, %s197
    %s199 = sshrl.u32 %s4, 1
    %s200 = sor.u32 %s4, %s199
    %s201 = sand.u32 %s200, 85
    %s202 = sshrl.u32 %s201, 1
    %s203 = sor.u32 %s201, %s202
    %s204 = sand.u32 51, %s203
    %s205 = sshrl.u32 %s204, 2
    %s206 = sor.u32 %s204, %s205
    %s207 = sand.u32 15, %s206
    %v208 = vld [vmem:[%s198] sm:%s207]
    %v209 = vunpack.c.l.bf16 %v208
    %v210 = vunpack.c.h.bf16 %v208
    %s211 = scalar_lea.vmem [#allocation1], 152
    %212 = vst [vmem:[%s211] sm:%s4] %v209
    %s213 = smul.addr 4, 18
    %s214 = scalar_lea.vmem %s0, %s213
    %s215 = sshrl.u32 %s4, 1
    %s216 = sor.u32 %s4, %s215
    %s217 = sand.u32 %s216, 85
    %s218 = sshrl.u32 %s217, 1
    %s219 = sor.u32 %s217, %s218
    %s220 = sand.u32 51, %s219
    %s221 = sshrl.u32 %s220, 2
    %s222 = sor.u32 %s220, %s221
    %s223 = sand.u32 15, %s222
    %v224 = vld [vmem:[%s214] sm:%s223]
    %v225 = vunpack.c.l.bf16 %v224
    %v226 = vunpack.c.h.bf16 %v224
    %s227 = scalar_lea.vmem [#allocation1], 144
    %228 = vst [vmem:[%s227] sm:%s4] %v225
    %s229 = smul.addr 4, 17
    %s230 = scalar_lea.vmem %s0, %s229
    %s231 = sshrl.u32 %s4, 1
    %s232 = sor.u32 %s4, %s231
    %s233 = sand.u32 %s232, 85
    %s234 = sshrl.u32 %s233, 1
    %s235 = sor.u32 %s233, %s234
    %s236 = sand.u32 51, %s235
    %s237 = sshrl.u32 %s236, 2
    %s238 = sor.u32 %s236, %s237
    %s239 = sand.u32 15, %s238
    %v240 = vld [vmem:[%s230] sm:%s239]
    %v241 = vunpack.c.l.bf16 %v240
    %v242 = vunpack.c.h.bf16 %v240
    %s243 = scalar_lea.vmem [#allocation1], 136
    %244 = vst [vmem:[%s243] sm:%s4] %v241
    %s245 = smul.addr 4, 16
    %s246 = scalar_lea.vmem %s0, %s245
    %s247 = sshrl.u32 %s4, 1
    %s248 = sor.u32 %s4, %s247
    %s249 = sand.u32 %s248, 85
    %s250 = sshrl.u32 %s249, 1
    %s251 = sor.u32 %s249, %s250
    %s252 = sand.u32 51, %s251
    %s253 = sshrl.u32 %s252, 2
    %s254 = sor.u32 %s252, %s253
    %s255 = sand.u32 15, %s254
    %v256 = vld [vmem:[%s246] sm:%s255]
    %v257 = vunpack.c.l.bf16 %v256
    %v258 = vunpack.c.h.bf16 %v256
    %s259 = scalar_lea.vmem [#allocation1], 128
    %260 = vst [vmem:[%s259] sm:%s4] %v257
    %s261 = smul.addr 4, 15
    %s262 = scalar_lea.vmem %s0, %s261
    %s263 = sshrl.u32 %s4, 1
    %s264 = sor.u32 %s4, %s263
    %s265 = sand.u32 %s264, 85
    %s266 = sshrl.u32 %s265, 1
    %s267 = sor.u32 %s265, %s266
    %s268 = sand.u32 51, %s267
    %s269 = sshrl.u32 %s268, 2
    %s270 = sor.u32 %s268, %s269
    %s271 = sand.u32 15, %s270
    %v272 = vld [vmem:[%s262] sm:%s271]
    %v273 = vunpack.c.l.bf16 %v272
    %v274 = vunpack.c.h.bf16 %v272
    %s275 = scalar_lea.vmem [#allocation1], 120
    %276 = vst [vmem:[%s275] sm:%s4] %v273
    %s277 = smul.addr 4, 14
    %s278 = scalar_lea.vmem %s0, %s277
    %s279 = sshrl.u32 %s4, 1
    %s280 = sor.u32 %s4, %s279
    %s281 = sand.u32 %s280, 85
    %s282 = sshrl.u32 %s281, 1
    %s283 = sor.u32 %s281, %s282
    %s284 = sand.u32 51, %s283
    %s285 = sshrl.u32 %s284, 2
    %s286 = sor.u32 %s284, %s285
    %s287 = sand.u32 15, %s286
    %v288 = vld [vmem:[%s278] sm:%s287]
    %v289 = vunpack.c.l.bf16 %v288
    %v290 = vunpack.c.h.bf16 %v288
    %s291 = scalar_lea.vmem [#allocation1], 112
    %292 = vst [vmem:[%s291] sm:%s4] %v289
    %s293 = smul.addr 4, 13
    %s294 = scalar_lea.vmem %s0, %s293
    %s295 = sshrl.u32 %s4, 1
    %s296 = sor.u32 %s4, %s295
    %s297 = sand.u32 %s296, 85
    %s298 = sshrl.u32 %s297, 1
    %s299 = sor.u32 %s297, %s298
    %s300 = sand.u32 51, %s299
    %s301 = sshrl.u32 %s300, 2
    %s302 = sor.u32 %s300, %s301
    %s303 = sand.u32 15, %s302
    %v304 = vld [vmem:[%s294] sm:%s303]
    %v305 = vunpack.c.l.bf16 %v304
    %v306 = vunpack.c.h.bf16 %v304
    %s307 = scalar_lea.vmem [#allocation1], 104
    %308 = vst [vmem:[%s307] sm:%s4] %v305
    %s309 = smul.addr 4, 12
    %s310 = scalar_lea.vmem %s0, %s309
    %s311 = sshrl.u32 %s4, 1
    %s312 = sor.u32 %s4, %s311
    %s313 = sand.u32 %s312, 85
    %s314 = sshrl.u32 %s313, 1
    %s315 = sor.u32 %s313, %s314
    %s316 = sand.u32 51, %s315
    %s317 = sshrl.u32 %s316, 2
    %s318 = sor.u32 %s316, %s317
    %s319 = sand.u32 15, %s318
    %v320 = vld [vmem:[%s310] sm:%s319]
    %v321 = vunpack.c.l.bf16 %v320
    %v322 = vunpack.c.h.bf16 %v320
    %s323 = scalar_lea.vmem [#allocation1], 96
    %324 = vst [vmem:[%s323] sm:%s4] %v321
    %s325 = smul.addr 4, 11
    %s326 = scalar_lea.vmem %s0, %s325
    %s327 = sshrl.u32 %s4, 1
    %s328 = sor.u32 %s4, %s327
    %s329 = sand.u32 %s328, 85
    %s330 = sshrl.u32 %s329, 1
    %s331 = sor.u32 %s329, %s330
    %s332 = sand.u32 51, %s331
    %s333 = sshrl.u32 %s332, 2
    %s334 = sor.u32 %s332, %s333
    %s335 = sand.u32 15, %s334
    %v336 = vld [vmem:[%s326] sm:%s335]
    %v337 = vunpack.c.l.bf16 %v336
    %v338 = vunpack.c.h.bf16 %v336
    %s339 = scalar_lea.vmem [#allocation1], 88
    %340 = vst [vmem:[%s339] sm:%s4] %v337
    %s341 = smul.addr 4, 10
    %s342 = scalar_lea.vmem %s0, %s341
    %s343 = sshrl.u32 %s4, 1
    %s344 = sor.u32 %s4, %s343
    %s345 = sand.u32 %s344, 85
    %s346 = sshrl.u32 %s345, 1
    %s347 = sor.u32 %s345, %s346
    %s348 = sand.u32 51, %s347
    %s349 = sshrl.u32 %s348, 2
    %s350 = sor.u32 %s348, %s349
    %s351 = sand.u32 15, %s350
    %v352 = vld [vmem:[%s342] sm:%s351]
    %v353 = vunpack.c.l.bf16 %v352
    %v354 = vunpack.c.h.bf16 %v352
    %s355 = scalar_lea.vmem [#allocation1], 80
    %356 = vst [vmem:[%s355] sm:%s4] %v353
    %s357 = smul.addr 4, 9
    %s358 = scalar_lea.vmem %s0, %s357
    %s359 = sshrl.u32 %s4, 1
    %s360 = sor.u32 %s4, %s359
    %s361 = sand.u32 %s360, 85
    %s362 = sshrl.u32 %s361, 1
    %s363 = sor.u32 %s361, %s362
    %s364 = sand.u32 51, %s363
    %s365 = sshrl.u32 %s364, 2
    %s366 = sor.u32 %s364, %s365
    %s367 = sand.u32 15, %s366
    %v368 = vld [vmem:[%s358] sm:%s367]
    %v369 = vunpack.c.l.bf16 %v368
    %v370 = vunpack.c.h.bf16 %v368
    %s371 = scalar_lea.vmem [#allocation1], 72
    %372 = vst [vmem:[%s371] sm:%s4] %v369
    %s373 = smul.addr 4, 8
    %s374 = scalar_lea.vmem %s0, %s373
    %s375 = sshrl.u32 %s4, 1
    %s376 = sor.u32 %s4, %s375
    %s377 = sand.u32 %s376, 85
    %s378 = sshrl.u32 %s377, 1
    %s379 = sor.u32 %s377, %s378
    %s380 = sand.u32 51, %s379
    %s381 = sshrl.u32 %s380, 2
    %s382 = sor.u32 %s380, %s381
    %s383 = sand.u32 15, %s382
    %v384 = vld [vmem:[%s374] sm:%s383]
    %v385 = vunpack.c.l.bf16 %v384
    %v386 = vunpack.c.h.bf16 %v384
    %s387 = scalar_lea.vmem [#allocation1], 64
    %388 = vst [vmem:[%s387] sm:%s4] %v385
    %s389 = smul.addr 4, 7
    %s390 = scalar_lea.vmem %s0, %s389
    %s391 = sshrl.u32 %s4, 1
    %s392 = sor.u32 %s4, %s391
    %s393 = sand.u32 %s392, 85
    %s394 = sshrl.u32 %s393, 1
    %s395 = sor.u32 %s393, %s394
    %s396 = sand.u32 51, %s395
    %s397 = sshrl.u32 %s396, 2
    %s398 = sor.u32 %s396, %s397
    %s399 = sand.u32 15, %s398
    %v400 = vld [vmem:[%s390] sm:%s399]
    %v401 = vunpack.c.l.bf16 %v400
    %v402 = vunpack.c.h.bf16 %v400
    %s403 = scalar_lea.vmem [#allocation1], 56
    %404 = vst [vmem:[%s403] sm:%s4] %v401
    %s405 = smul.addr 4, 6
    %s406 = scalar_lea.vmem %s0, %s405
    %s407 = sshrl.u32 %s4, 1
    %s408 = sor.u32 %s4, %s407
    %s409 = sand.u32 %s408, 85
    %s410 = sshrl.u32 %s409, 1
    %s411 = sor.u32 %s409, %s410
    %s412 = sand.u32 51, %s411
    %s413 = sshrl.u32 %s412, 2
    %s414 = sor.u32 %s412, %s413
    %s415 = sand.u32 15, %s414
    %v416 = vld [vmem:[%s406] sm:%s415]
    %v417 = vunpack.c.l.bf16 %v416
    %v418 = vunpack.c.h.bf16 %v416
    %s419 = scalar_lea.vmem [#allocation1], 48
    %420 = vst [vmem:[%s419] sm:%s4] %v417
    %s421 = smul.addr 4, 5
    %s422 = scalar_lea.vmem %s0, %s421
    %s423 = sshrl.u32 %s4, 1
    %s424 = sor.u32 %s4, %s423
    %s425 = sand.u32 %s424, 85
    %s426 = sshrl.u32 %s425, 1
    %s427 = sor.u32 %s425, %s426
    %s428 = sand.u32 51, %s427
    %s429 = sshrl.u32 %s428, 2
    %s430 = sor.u32 %s428, %s429
    %s431 = sand.u32 15, %s430
    %v432 = vld [vmem:[%s422] sm:%s431]
    %v433 = vunpack.c.l.bf16 %v432
    %v434 = vunpack.c.h.bf16 %v432
    %s435 = scalar_lea.vmem [#allocation1], 40
    %436 = vst [vmem:[%s435] sm:%s4] %v433
    %s437 = smul.addr 4, 4
    %s438 = scalar_lea.vmem %s0, %s437
    %s439 = sshrl.u32 %s4, 1
    %s440 = sor.u32 %s4, %s439
    %s441 = sand.u32 %s440, 85
    %s442 = sshrl.u32 %s441, 1
    %s443 = sor.u32 %s441, %s442
    %s444 = sand.u32 51, %s443
    %s445 = sshrl.u32 %s444, 2
    %s446 = sor.u32 %s444, %s445
    %s447 = sand.u32 15, %s446
    %v448 = vld [vmem:[%s438] sm:%s447]
    %v449 = vunpack.c.l.bf16 %v448
    %v450 = vunpack.c.h.bf16 %v448
    %s451 = scalar_lea.vmem [#allocation1], 32
    %452 = vst [vmem:[%s451] sm:%s4] %v449
    %s453 = smul.addr 4, 3
    %s454 = scalar_lea.vmem %s0, %s453
    %s455 = sshrl.u32 %s4, 1
    %s456 = sor.u32 %s4, %s455
    %s457 = sand.u32 %s456, 85
    %s458 = sshrl.u32 %s457, 1
    %s459 = sor.u32 %s457, %s458
    %s460 = sand.u32 51, %s459
    %s461 = sshrl.u32 %s460, 2
    %s462 = sor.u32 %s460, %s461
    %s463 = sand.u32 15, %s462
    %v464 = vld [vmem:[%s454] sm:%s463]
    %v465 = vunpack.c.l.bf16 %v464
    %v466 = vunpack.c.h.bf16 %v464
    %s467 = scalar_lea.vmem [#allocation1], 24
    %468 = vst [vmem:[%s467] sm:%s4] %v465
    %s469 = smul.addr 4, 2
    %s470 = scalar_lea.vmem %s0, %s469
    %s471 = sshrl.u32 %s4, 1
    %s472 = sor.u32 %s4, %s471
    %s473 = sand.u32 %s472, 85
    %s474 = sshrl.u32 %s473, 1
    %s475 = sor.u32 %s473, %s474
    %s476 = sand.u32 51, %s475
    %s477 = sshrl.u32 %s476, 2
    %s478 = sor.u32 %s476, %s477
    %s479 = sand.u32 15, %s478
    %v480 = vld [vmem:[%s470] sm:%s479]
    %v481 = vunpack.c.l.bf16 %v480
    %v482 = vunpack.c.h.bf16 %v480
    %s483 = scalar_lea.vmem [#allocation1], 16
    %484 = vst [vmem:[%s483] sm:%s4] %v481
    %s485 = scalar_lea.vmem %s0, 4
    %s486 = sshrl.u32 %s4, 1
    %s487 = sor.u32 %s4, %s486
    %s488 = sand.u32 %s487, 85
    %s489 = sshrl.u32 %s488, 1
    %s490 = sor.u32 %s488, %s489
    %s491 = sand.u32 51, %s490
    %s492 = sshrl.u32 %s491, 2
    %s493 = sor.u32 %s491, %s492
    %s494 = sand.u32 15, %s493
    %v495 = vld [vmem:[%s485] sm:%s494]
    %v496 = vunpack.c.l.bf16 %v495
    %v497 = vunpack.c.h.bf16 %v495
    %s498 = scalar_lea.vmem [#allocation1], 8
    %499 = vst [vmem:[%s498] sm:%s4] %v496
    %s500 = sshrl.u32 %s4, 1
    %s501 = sor.u32 %s4, %s500
    %s502 = sand.u32 %s501, 85
    %s503 = sshrl.u32 %s502, 1
    %s504 = sor.u32 %s502, %s503
    %s505 = sand.u32 51, %s504
    %s506 = sshrl.u32 %s505, 2
    %s507 = sor.u32 %s505, %s506
    %s508 = sand.u32 15, %s507
    %v509 = vld [vmem:[%s0] sm:%s508]
    %v510 = vunpack.c.l.bf16 %v509
    %v511 = vunpack.c.h.bf16 %v509
    %512 = vst [vmem:[#allocation1] sm:%s4] %v510
    %v513 = vld [vmem:[#allocation1] ss:$4 sm:$0xff]
    %vm514 = vcmask 261120
    %515 = vst.msk [vmem:[#allocation0] ss:$16 sm:$0x3] %vm514, %v513
    %s516 = scalar_lea.vmem [#allocation0], 4294967265
    %517 = vst.msk [vmem:[%s516] ss:$16 sm:$0xc] %vm514, %v513
    %s518 = scalar_lea.vmem [#allocation0], 4294967234
    %519 = vst.msk [vmem:[%s518] ss:$16 sm:$0x30] %vm514, %v513
    %s520 = scalar_lea.vmem [#allocation0], 4294967203
    %521 = vst.msk [vmem:[%s520] ss:$16 sm:$0xc0] %vm514, %v513
    %s522 = scalar_lea.vmem [#allocation1], 32
    %v523 = vld [vmem:[%s522] ss:$4 sm:$0xff]
    %vm524 = vcmask 261120
    %s525 = scalar_lea.vmem [#allocation0], 4
    %526 = vst.msk [vmem:[%s525] ss:$16 sm:$0x3] %vm524, %v523
    %s527 = scalar_lea.vmem [#allocation0], 4294967269
    %528 = vst.msk [vmem:[%s527] ss:$16 sm:$0xc] %vm524, %v523
    %s529 = scalar_lea.vmem [#allocation0], 4294967238
    %530 = vst.msk [vmem:[%s529] ss:$16 sm:$0x30] %vm524, %v523
    %s531 = scalar_lea.vmem [#allocation0], 4294967207
    %532 = vst.msk [vmem:[%s531] ss:$16 sm:$0xc0] %vm524, %v523
    %s533 = scalar_lea.vmem [#allocation1], 64
    %v534 = vld [vmem:[%s533] ss:$4 sm:$0xff]
    %vm535 = vcmask 261120
    %s536 = scalar_lea.vmem [#allocation0], 8
    %537 = vst.msk [vmem:[%s536] ss:$16 sm:$0x3] %vm535, %v534
    %s538 = scalar_lea.vmem [#allocation0], 4294967273
    %539 = vst.msk [vmem:[%s538] ss:$16 sm:$0xc] %vm535, %v534
    %s540 = scalar_lea.vmem [#allocation0], 4294967242
    %541 = vst.msk [vmem:[%s540] ss:$16 sm:$0x30] %vm535, %v534
    %s542 = scalar_lea.vmem [#allocation0], 4294967211
    %543 = vst.msk [vmem:[%s542] ss:$16 sm:$0xc0] %vm535, %v534
    %s544 = scalar_lea.vmem [#allocation1], 96
    %v545 = vld [vmem:[%s544] ss:$4 sm:$0xff]
    %vm546 = vcmask 261120
    %s547 = scalar_lea.vmem [#allocation0], 12
    %548 = vst.msk [vmem:[%s547] ss:$16 sm:$0x3] %vm546, %v545
    %s549 = scalar_lea.vmem [#allocation0], 4294967277
    %550 = vst.msk [vmem:[%s549] ss:$16 sm:$0xc] %vm546, %v545
    %s551 = scalar_lea.vmem [#allocation0], 4294967246
    %552 = vst.msk [vmem:[%s551] ss:$16 sm:$0x30] %vm546, %v545
    %s553 = scalar_lea.vmem [#allocation0], 4294967215
    %554 = vst.msk [vmem:[%s553] ss:$16 sm:$0xc0] %vm546, %v545
    %s555 = scalar_lea.vmem [#allocation1], 128
    %v556 = vld [vmem:[%s555] ss:$4 sm:$0xff]
    %vm557 = vcmask 261120
    %s558 = scalar_lea.vmem [#allocation0], 32
    %559 = vst.msk [vmem:[%s558] ss:$16 sm:$0x3] %vm557, %v556
    %s560 = scalar_lea.vmem [#allocation0], 1
    %561 = vst.msk [vmem:[%s560] ss:$16 sm:$0xc] %vm557, %v556
    %s562 = scalar_lea.vmem [#allocation0], 4294967266
    %563 = vst.msk [vmem:[%s562] ss:$16 sm:$0x30] %vm557, %v556
    %s564 = scalar_lea.vmem [#allocation0], 4294967235
    %565 = vst.msk [vmem:[%s564] ss:$16 sm:$0xc0] %vm557, %v556
    %s566 = scalar_lea.vmem [#allocation1], 160
    %v567 = vld [vmem:[%s566] ss:$4 sm:$0xff]
    %vm568 = vcmask 261120
    %s569 = scalar_lea.vmem [#allocation0], 36
    %570 = vst.msk [vmem:[%s569] ss:$16 sm:$0x3] %vm568, %v567
    %s571 = scalar_lea.vmem [#allocation0], 5
    %572 = vst.msk [vmem:[%s571] ss:$16 sm:$0xc] %vm568, %v567
    %s573 = scalar_lea.vmem [#allocation0], 4294967270
    %574 = vst.msk [vmem:[%s573] ss:$16 sm:$0x30] %vm568, %v567
    %s575 = scalar_lea.vmem [#allocation0], 4294967239
    %576 = vst.msk [vmem:[%s575] ss:$16 sm:$0xc0] %vm568, %v567
    %s577 = scalar_lea.vmem [#allocation1], 192
    %v578 = vld [vmem:[%s577] ss:$4 sm:$0xff]
    %vm579 = vcmask 261120
    %s580 = scalar_lea.vmem [#allocation0], 40
    %581 = vst.msk [vmem:[%s580] ss:$16 sm:$0x3] %vm579, %v578
    %s582 = scalar_lea.vmem [#allocation0], 9
    %583 = vst.msk [vmem:[%s582] ss:$16 sm:$0xc] %vm579, %v578
    %s584 = scalar_lea.vmem [#allocation0], 4294967274
    %585 = vst.msk [vmem:[%s584] ss:$16 sm:$0x30] %vm579, %v578
    %s586 = scalar_lea.vmem [#allocation0], 4294967243
    %587 = vst.msk [vmem:[%s586] ss:$16 sm:$0xc0] %vm579, %v578
    %s588 = scalar_lea.vmem [#allocation1], 224
    %v589 = vld [vmem:[%s588] ss:$4 sm:$0xff]
    %vm590 = vcmask 261120
    %s591 = scalar_lea.vmem [#allocation0], 44
    %592 = vst.msk [vmem:[%s591] ss:$16 sm:$0x3] %vm590, %v589
    %s593 = scalar_lea.vmem [#allocation0], 13
    %594 = vst.msk [vmem:[%s593] ss:$16 sm:$0xc] %vm590, %v589
    %s595 = scalar_lea.vmem [#allocation0], 4294967278
    %596 = vst.msk [vmem:[%s595] ss:$16 sm:$0x30] %vm590, %v589
    %s597 = scalar_lea.vmem [#allocation0], 4294967247
    %598 = vst.msk [vmem:[%s597] ss:$16 sm:$0xc0] %vm590, %v589
    %s599 = scalar_lea.vmem [#allocation1], 3
    %v600 = vld [vmem:[%s599] ss:$8 sm:$0xf]
    %s601 = scalar_lea.vmem [#allocation1], 3
    %v602 = vld [vmem:[%s601] ss:$8 sm:$0xf0]
    %vm603 = vcmask 1047556
    %v604 = vsel %vm603, %v602, %v600
    %605 = vrot.lane.b32.xlu0 %v604, 96
    %v606 = vpop.permute.xlu0 %605
    %vm607 = vcmask 1048320
    %608 = vst.msk [vmem:[#allocation0] sm:$0xff] %vm607, %v606
    %s609 = scalar_lea.vmem [#allocation1], 131
    %v610 = vld [vmem:[%s609] ss:$8 sm:$0xf]
    %s611 = scalar_lea.vmem [#allocation1], 131
    %v612 = vld [vmem:[%s611] ss:$8 sm:$0xf0]
    %vm613 = vcmask 1047556
    %v614 = vsel %vm613, %v612, %v610
    %615 = vrot.lane.b32.xlu0 %v614, 96
    %v616 = vpop.permute.xlu0 %615
    %vm617 = vcmask 1048320
    %s618 = scalar_lea.vmem [#allocation0], 32
    %619 = vst.msk [vmem:[%s618] sm:$0xff] %vm617, %v616
    %s620 = scalar_lea.vmem [#allocation1], 67
    %v621 = vld [vmem:[%s620] ss:$8 sm:$0xf]
    %s622 = scalar_lea.vmem [#allocation1], 67
    %v623 = vld [vmem:[%s622] ss:$8 sm:$0xf0]
    %vm624 = vcmask 1047556
    %v625 = vsel %vm624, %v623, %v621
    %626 = vrot.lane.b32.xlu0 %v625, 96
    %v627 = vpop.permute.xlu0 %626
    %vm628 = vcmask 1048320
    %s629 = scalar_lea.vmem [#allocation0], 8
    %630 = vst.msk [vmem:[%s629] sm:$0xff] %vm628, %v627
    %s631 = scalar_lea.vmem [#allocation1], 195
    %v632 = vld [vmem:[%s631] ss:$8 sm:$0xf]
    %s633 = scalar_lea.vmem [#allocation1], 195
    %v634 = vld [vmem:[%s633] ss:$8 sm:$0xf0]
    %vm635 = vcmask 1047556
    %v636 = vsel %vm635, %v634, %v632
    %637 = vrot.lane.b32.xlu0 %v636, 96
    %v638 = vpop.permute.xlu0 %637
    %vm639 = vcmask 1048320
    %s640 = scalar_lea.vmem [#allocation0], 40
    %641 = vst.msk [vmem:[%s640] sm:$0xff] %vm639, %v638
    %s642 = scalar_lea.vmem [#allocation1], 7
    %v643 = vld [vmem:[%s642] ss:$8 sm:$0xf]
    %s644 = scalar_lea.vmem [#allocation1], 7
    %v645 = vld [vmem:[%s644] ss:$8 sm:$0xf0]
    %vm646 = vcmask 1047556
    %v647 = vsel %vm646, %v645, %v643
    %648 = vrot.lane.b32.xlu0 %v647, 96
    %v649 = vpop.permute.xlu0 %648
    %vm650 = vcmask 1048320
    %s651 = scalar_lea.vmem [#allocation0], 16
    %652 = vst.msk [vmem:[%s651] sm:$0xff] %vm650, %v649
    %s653 = scalar_lea.vmem [#allocation1], 135
    %v654 = vld [vmem:[%s653] ss:$8 sm:$0xf]
    %s655 = scalar_lea.vmem [#allocation1], 135
    %v656 = vld [vmem:[%s655] ss:$8 sm:$0xf0]
    %vm657 = vcmask 1047556
    %v658 = vsel %vm657, %v656, %v654
    %659 = vrot.lane.b32.xlu0 %v658, 96
    %v660 = vpop.permute.xlu0 %659
    %vm661 = vcmask 1048320
    %s662 = scalar_lea.vmem [#allocation0], 48
    %663 = vst.msk [vmem:[%s662] sm:$0xff] %vm661, %v660
    %s664 = scalar_lea.vmem [#allocation1], 71
    %v665 = vld [vmem:[%s664] ss:$8 sm:$0xf]
    %s666 = scalar_lea.vmem [#allocation1], 71
    %v667 = vld [vmem:[%s666] ss:$8 sm:$0xf0]
    %vm668 = vcmask 1047556
    %v669 = vsel %vm668, %v667, %v665
    %670 = vrot.lane.b32.xlu0 %v669, 96
    %v671 = vpop.permute.xlu0 %670
    %vm672 = vcmask 1048320
    %s673 = scalar_lea.vmem [#allocation0], 24
    %674 = vst.msk [vmem:[%s673] sm:$0xff] %vm672, %v671
    %s675 = scalar_lea.vmem [#allocation1], 199
    %v676 = vld [vmem:[%s675] ss:$8 sm:$0xf]
    %s677 = scalar_lea.vmem [#allocation1], 199
    %v678 = vld [vmem:[%s677] ss:$8 sm:$0xf0]
    %vm679 = vcmask 1047556
    %v680 = vsel %vm679, %v678, %v676
    %681 = vrot.lane.b32.xlu0 %v680, 96
    %v682 = vpop.permute.xlu0 %681
    %vm683 = vcmask 1048320
    %s684 = scalar_lea.vmem [#allocation0], 56
    %685 = vst.msk [vmem:[%s684] sm:$0xff] %vm683, %v682
    %s686 = scalar_lea.vmem [#allocation1], 2
    %v687 = vld [vmem:[%s686] ss:$8 sm:$0xf]
    %s688 = scalar_lea.vmem [#allocation1], 2
    %v689 = vld [vmem:[%s688] ss:$8 sm:$0xf0]
    %vm690 = vcmask 1047556
    %v691 = vsel %vm690, %v689, %v687
    %692 = vrot.lane.b32.xlu0 %v691, 64
    %v693 = vpop.permute.xlu0 %692
    %vm694 = vcmask 785920
    %695 = vst.msk [vmem:[#allocation0] sm:$0xff] %vm694, %v693
    %s696 = scalar_lea.vmem [#allocation1], 130
    %v697 = vld [vmem:[%s696] ss:$8 sm:$0xf]
    %s698 = scalar_lea.vmem [#allocation1], 130
    %v699 = vld [vmem:[%s698] ss:$8 sm:$0xf0]
    %vm700 = vcmask 1047556
    %v701 = vsel %vm700, %v699, %v697
    %702 = vrot.lane.b32.xlu0 %v701, 64
    %v703 = vpop.permute.xlu0 %702
    %vm704 = vcmask 785920
    %s705 = scalar_lea.vmem [#allocation0], 32
    %706 = vst.msk [vmem:[%s705] sm:$0xff] %vm704, %v703
    %s707 = scalar_lea.vmem [#allocation1], 66
    %v708 = vld [vmem:[%s707] ss:$8 sm:$0xf]
    %s709 = scalar_lea.vmem [#allocation1], 66
    %v710 = vld [vmem:[%s709] ss:$8 sm:$0xf0]
    %vm711 = vcmask 1047556
    %v712 = vsel %vm711, %v710, %v708
    %713 = vrot.lane.b32.xlu0 %v712, 64
    %v714 = vpop.permute.xlu0 %713
    %vm715 = vcmask 785920
    %s716 = scalar_lea.vmem [#allocation0], 8
    %717 = vst.msk [vmem:[%s716] sm:$0xff] %vm715, %v714
    %s718 = scalar_lea.vmem [#allocation1], 194
    %v719 = vld [vmem:[%s718] ss:$8 sm:$0xf]
    %s720 = scalar_lea.vmem [#allocation1], 194
    %v721 = vld [vmem:[%s720] ss:$8 sm:$0xf0]
    %vm722 = vcmask 1047556
    %v723 = vsel %vm722, %v721, %v719
    %724 = vrot.lane.b32.xlu0 %v723, 64
    %v725 = vpop.permute.xlu0 %724
    %vm726 = vcmask 785920
    %s727 = scalar_lea.vmem [#allocation0], 40
    %728 = vst.msk [vmem:[%s727] sm:$0xff] %vm726, %v725
    %s729 = scalar_lea.vmem [#allocation1], 6
    %v730 = vld [vmem:[%s729] ss:$8 sm:$0xf]
    %s731 = scalar_lea.vmem [#allocation1], 6
    %v732 = vld [vmem:[%s731] ss:$8 sm:$0xf0]
    %vm733 = vcmask 1047556
    %v734 = vsel %vm733, %v732, %v730
    %735 = vrot.lane.b32.xlu0 %v734, 64
    %v736 = vpop.permute.xlu0 %735
    %vm737 = vcmask 785920
    %s738 = scalar_lea.vmem [#allocation0], 16
    %739 = vst.msk [vmem:[%s738] sm:$0xff] %vm737, %v736
    %s740 = scalar_lea.vmem [#allocation1], 134
    %v741 = vld [vmem:[%s740] ss:$8 sm:$0xf]
    %s742 = scalar_lea.vmem [#allocation1], 134
    %v743 = vld [vmem:[%s742] ss:$8 sm:$0xf0]
    %vm744 = vcmask 1047556
    %v745 = vsel %vm744, %v743, %v741
    %746 = vrot.lane.b32.xlu0 %v745, 64
    %v747 = vpop.permute.xlu0 %746
    %vm748 = vcmask 785920
    %s749 = scalar_lea.vmem [#allocation0], 48
    %750 = vst.msk [vmem:[%s749] sm:$0xff] %vm748, %v747
    %s751 = scalar_lea.vmem [#allocation1], 70
    %v752 = vld [vmem:[%s751] ss:$8 sm:$0xf]
    %s753 = scalar_lea.vmem [#allocation1], 70
    %v754 = vld [vmem:[%s753] ss:$8 sm:$0xf0]
    %vm755 = vcmask 1047556
    %v756 = vsel %vm755, %v754, %v752
    %757 = vrot.lane.b32.xlu0 %v756, 64
    %v758 = vpop.permute.xlu0 %757
    %vm759 = vcmask 785920
    %s760 = scalar_lea.vmem [#allocation0], 24
    %761 = vst.msk [vmem:[%s760] sm:$0xff] %vm759, %v758
    %s762 = scalar_lea.vmem [#allocation1], 198
    %v763 = vld [vmem:[%s762] ss:$8 sm:$0xf]
    %s764 = scalar_lea.vmem [#allocation1], 198
    %v765 = vld [vmem:[%s764] ss:$8 sm:$0xf0]
    %vm766 = vcmask 1047556
    %v767 = vsel %vm766, %v765, %v763
    %768 = vrot.lane.b32.xlu0 %v767, 64
    %v769 = vpop.permute.xlu0 %768
    %vm770 = vcmask 785920
    %s771 = scalar_lea.vmem [#allocation0], 56
    %772 = vst.msk [vmem:[%s771] sm:$0xff] %vm770, %v769
    %s773 = scalar_lea.vmem [#allocation1], 1
    %v774 = vld [vmem:[%s773] ss:$8 sm:$0xf]
    %s775 = scalar_lea.vmem [#allocation1], 1
    %v776 = vld [vmem:[%s775] ss:$8 sm:$0xf0]
    %vm777 = vcmask 1047556
    %v778 = vsel %vm777, %v776, %v774
    %779 = vrot.lane.b32.xlu0 %v778, 32
    %v780 = vpop.permute.xlu0 %779
    %vm781 = vcmask 523520
    %782 = vst.msk [vmem:[#allocation0] sm:$0xff] %vm781, %v780
    %s783 = scalar_lea.vmem [#allocation1], 129
    %v784 = vld [vmem:[%s783] ss:$8 sm:$0xf]
    %s785 = scalar_lea.vmem [#allocation1], 129
    %v786 = vld [vmem:[%s785] ss:$8 sm:$0xf0]
    %vm787 = vcmask 1047556
    %v788 = vsel %vm787, %v786, %v784
    %789 = vrot.lane.b32.xlu0 %v788, 32
    %v790 = vpop.permute.xlu0 %789
    %vm791 = vcmask 523520
    %s792 = scalar_lea.vmem [#allocation0], 32
    %793 = vst.msk [vmem:[%s792] sm:$0xff] %vm791, %v790
    %s794 = scalar_lea.vmem [#allocation1], 65
    %v795 = vld [vmem:[%s794] ss:$8 sm:$0xf]
    %s796 = scalar_lea.vmem [#allocation1], 65
    %v797 = vld [vmem:[%s796] ss:$8 sm:$0xf0]
    %vm798 = vcmask 1047556
    %v799 = vsel %vm798, %v797, %v795
    %800 = vrot.lane.b32.xlu0 %v799, 32
    %v801 = vpop.permute.xlu0 %800
    %vm802 = vcmask 523520
    %s803 = scalar_lea.vmem [#allocation0], 8
    %804 = vst.msk [vmem:[%s803] sm:$0xff] %vm802, %v801
    %s805 = scalar_lea.vmem [#allocation1], 193
    %v806 = vld [vmem:[%s805] ss:$8 sm:$0xf]
    %s807 = scalar_lea.vmem [#allocation1], 193
    %v808 = vld [vmem:[%s807] ss:$8 sm:$0xf0]
    %vm809 = vcmask 1047556
    %v810 = vsel %vm809, %v808, %v806
    %811 = vrot.lane.b32.xlu0 %v810, 32
    %v812 = vpop.permute.xlu0 %811
    %vm813 = vcmask 523520
    %s814 = scalar_lea.vmem [#allocation0], 40
    %815 = vst.msk [vmem:[%s814] sm:$0xff] %vm813, %v812
    %s816 = scalar_lea.vmem [#allocation1], 5
    %v817 = vld [vmem:[%s816] ss:$8 sm:$0xf]
    %s818 = scalar_lea.vmem [#allocation1], 5
    %v819 = vld [vmem:[%s818] ss:$8 sm:$0xf0]
    %vm820 = vcmask 1047556
    %v821 = vsel %vm820, %v819, %v817
    %822 = vrot.lane.b32.xlu0 %v821, 32
    %v823 = vpop.permute.xlu0 %822
    %vm824 = vcmask 523520
    %s825 = scalar_lea.vmem [#allocation0], 16
    %826 = vst.msk [vmem:[%s825] sm:$0xff] %vm824, %v823
    %s827 = scalar_lea.vmem [#allocation1], 133
    %v828 = vld [vmem:[%s827] ss:$8 sm:$0xf]
    %s829 = scalar_lea.vmem [#allocation1], 133
    %v830 = vld [vmem:[%s829] ss:$8 sm:$0xf0]
    %vm831 = vcmask 1047556
    %v832 = vsel %vm831, %v830, %v828
    %833 = vrot.lane.b32.xlu0 %v832, 32
    %v834 = vpop.permute.xlu0 %833
    %vm835 = vcmask 523520
    %s836 = scalar_lea.vmem [#allocation0], 48
    %837 = vst.msk [vmem:[%s836] sm:$0xff] %vm835, %v834
    %s838 = scalar_lea.vmem [#allocation1], 69
    %v839 = vld [vmem:[%s838] ss:$8 sm:$0xf]
    %s840 = scalar_lea.vmem [#allocation1], 69
    %v841 = vld [vmem:[%s840] ss:$8 sm:$0xf0]
    %vm842 = vcmask 1047556
    %v843 = vsel %vm842, %v841, %v839
    %844 = vrot.lane.b32.xlu0 %v843, 32
    %v845 = vpop.permute.xlu0 %844
    %vm846 = vcmask 523520
    %s847 = scalar_lea.vmem [#allocation0], 24
    %848 = vst.msk [vmem:[%s847] sm:$0xff] %vm846, %v845
    %s849 = scalar_lea.vmem [#allocation1], 197
    %v850 = vld [vmem:[%s849] ss:$8 sm:$0xf]
    %s851 = scalar_lea.vmem [#allocation1], 197
    %v852 = vld [vmem:[%s851] ss:$8 sm:$0xf0]
    %vm853 = vcmask 1047556
    %v854 = vsel %vm853, %v852, %v850
    %855 = vrot.lane.b32.xlu0 %v854, 32
    %v856 = vpop.permute.xlu0 %855
    %vm857 = vcmask 523520
    %s858 = scalar_lea.vmem [#allocation0], 56
    %859 = vst.msk [vmem:[%s858] sm:$0xff] %vm857, %v856
    %s861 = smul.u32 4, 2
    %s862 = sshllo.u32 0, %s861
    %s863 = sshrl.u32 %s861, 1
    %v864 = vld [vmem:[#allocation0] sm:%s862]
    %v865 = vpack.c.bf16 0.0, %v864
    %s866 = sshllo.u32 0, %s863
    %867 = vst [vmem:[%s1] sm:%s866] %v865
    %s868 = scalar_lea.vmem [#allocation0], 8
    %v869 = vld [vmem:[%s868] sm:%s862]
    %v870 = vpack.c.bf16 0.0, %v869
    %s871 = sshllo.u32 0, %s863
    %s872 = scalar_lea.vmem %s1, 4
    %873 = vst [vmem:[%s872] sm:%s871] %v870
    %s874 = scalar_lea.vmem [#allocation0], 16
    %v875 = vld [vmem:[%s874] sm:%s862]
    %v876 = vpack.c.bf16 0.0, %v875
    %s877 = sshllo.u32 0, %s863
    %s878 = smul.addr 4, 2
    %s879 = scalar_lea.vmem %s1, %s878
    %880 = vst [vmem:[%s879] sm:%s877] %v876
    %s881 = scalar_lea.vmem [#allocation0], 24
    %v882 = vld [vmem:[%s881] sm:%s862]
    %v883 = vpack.c.bf16 0.0, %v882
    %s884 = sshllo.u32 0, %s863
    %s885 = smul.addr 4, 3
    %s886 = scalar_lea.vmem %s1, %s885
    %887 = vst [vmem:[%s886] sm:%s884] %v883
    %s888 = scalar_lea.vmem [#allocation0], 32
    %v889 = vld [vmem:[%s888] sm:%s862]
    %v890 = vpack.c.bf16 0.0, %v889
    %s891 = sshllo.u32 0, %s863
    %s892 = smul.addr 4, 4
    %s893 = scalar_lea.vmem %s1, %s892
    %894 = vst [vmem:[%s893] sm:%s891] %v890
    %s895 = scalar_lea.vmem [#allocation0], 40
    %v896 = vld [vmem:[%s895] sm:%s862]
    %v897 = vpack.c.bf16 0.0, %v896
    %s898 = sshllo.u32 0, %s863
    %s899 = smul.addr 4, 5
    %s900 = scalar_lea.vmem %s1, %s899
    %901 = vst [vmem:[%s900] sm:%s898] %v897
    %s902 = scalar_lea.vmem [#allocation0], 48
    %v903 = vld [vmem:[%s902] sm:%s862]
    %v904 = vpack.c.bf16 0.0, %v903
    %s905 = sshllo.u32 0, %s863
    %s906 = smul.addr 4, 6
    %s907 = scalar_lea.vmem %s1, %s906
    %908 = vst [vmem:[%s907] sm:%s905] %v904
    %s909 = scalar_lea.vmem [#allocation0], 56
    %v910 = vld [vmem:[%s909] sm:%s862]
    %v911 = vpack.c.bf16 0.0, %v910
    %s912 = sshllo.u32 0, %s863
    %s913 = smul.addr 4, 7
    %s914 = scalar_lea.vmem %s1, %s913
    %915 = vst [vmem:[%s914] sm:%s912] %v911

// kernel: tile.23
$region0: #{tile.23}
  #allocation0 [shape = 's32[1]{0}', space=sflag, size = 0x4, scoped, tag = 'scoped memory for tile.23']
  %s0 = inlined_call_operand.vmem [shape: f32[32], index: 0, kind: input, shape index: {}]
  %s1 = inlined_call_operand.vmem [shape: f32[8,32], index: 1, kind: output, shape index: {}]
  // Predicated region
  $region2: #{tile.23} parent=0 // pred_check
    _
  $region3: #{tile.23} parent=0 // pred_check_branch
    %3 = sbr.rel (0) target = $region5
  $region4: #{tile.23} parent=0 // pred_region
    _
  $region5: #{tile.23} parent=0 // pred_fallthru
    _
  %v4 = vld [vmem:[%s0] ss:$0 sm:$0xff]
  %5 = vst [vmem:[%s1] sm:$0xff] %v4

// kernel: tile.24
$region0: #{tile.24}
  %s0 = inlined_call_operand.vmem [shape: f32[8,32], index: 0, kind: input, shape index: {}]
  %s1 = inlined_call_operand.vmem [shape: f32[1,256], index: 1, kind: output, shape index: {}]
  $region1: #{tile.24} parent=0
    #allocation0 [shape = 'u8[8192]{0}', space=vmem, size = 0x2000, scoped, tag = 'scoped mem for output reshape']
    %s2 = smov 3
    %v3 = vld [vmem:[%s0] ss:$4 sm:%s2]
    %vm4 = vcmask 261120
    %5 = vst.msk [vmem:[#allocation0] ss:$8 sm:$0x3] %vm4, %v3
    %s6 = scalar_lea.vmem %s0, 3
    %s7 = smov 3
    %v8 = vld [vmem:[%s6] ss:$4 sm:%s7]
    %9 = vrot.lane.b32.xlu0 %v8, 96
    %v10 = vpop.permute.xlu0 %9
    %vm11 = vcmask 1048320
    %12 = vst.msk [vmem:[#allocation0] ss:$8 sm:$0x3] %vm11, %v10
    %s13 = scalar_lea.vmem %s0, 2
    %s14 = smov 3
    %v15 = vld [vmem:[%s13] ss:$4 sm:%s14]
    %16 = vrot.lane.b32.xlu0 %v15, 64
    %v17 = vpop.permute.xlu0 %16
    %vm18 = vcmask 785920
    %19 = vst.msk [vmem:[#allocation0] ss:$8 sm:$0x3] %vm18, %v17
    %s20 = scalar_lea.vmem %s0, 1
    %s21 = smov 3
    %v22 = vld [vmem:[%s20] ss:$4 sm:%s21]
    %23 = vrot.lane.b32.xlu0 %v22, 32
    %v24 = vpop.permute.xlu0 %23
    %vm25 = vcmask 523520
    %26 = vst.msk [vmem:[#allocation0] ss:$8 sm:$0x3] %vm25, %v24
    %s28 = sshllo.u32 0, 1
    %v30 = vld [vmem:[#allocation0] sm:%s28]
    %s31 = sshllo.u32 0, 1
    %32 = vst [vmem:[%s1] sm:%s31] %v30
    %s33 = scalar_lea.vmem [#allocation0], 8
    %v34 = vld [vmem:[%s33] sm:%s28]
    %s35 = sshllo.u32 0, 1
    %s36 = scalar_lea.vmem %s1, 1
    %37 = vst [vmem:[%s36] sm:%s35] %v34

// kernel: se_residual_block.1
$region0: #{se_residual_block.1}
  #allocation0 [shape = 'u32[]', space=smem, size = 0x4, offset = 0x4, fixed_abs, tag = 'smem constant byte address 0x4 - core index']
  #allocation1 [shape = 'u32[144,128]{1,0:T(1,128)}', space=vmem, size = 0x12000, scoped, tag = 'internal scratch']
  #allocation2 [shape = 'bf16[32,256]{1,0:T(16,128)(2,1)}', space=vmem, size = 0x4000, scoped, tag = 'scratch operand']
  #allocation3 [shape = 'f32[32,256]{1,0:T(8,128)}', space=vmem, size = 0x8000, scoped, tag = 'scratch operand']
  %s0 = inlined_call_operand.vmem [shape: f32[8,8,256], index: 0, kind: input, shape index: {}]
  %s1 = inlined_call_operand.vmem [shape: bf16[3,256,256], index: 1, kind: input, shape index: {}]
  %s2 = inlined_call_operand.vmem [shape: f32[1,256], index: 2, kind: input, shape index: {}]
  %s3 = inlined_call_operand.vmem [shape: bf16[3,256,256], index: 3, kind: input, shape index: {}]
  %s4 = inlined_call_operand.vmem [shape: f32[1,256], index: 4, kind: input, shape index: {}]
  %s5 = inlined_call_operand.vmem [shape: f32[256,128], index: 5, kind: input, shape index: {}]
  %s6 = inlined_call_operand.vmem [shape: f32[128,256], index: 6, kind: input, shape index: {}]
  %s7 = inlined_call_operand.vmem [shape: f32[8,8,256], index: 7, kind: output, shape index: {}]
  %s8 = sld [smem:[#allocation0]]
  $region61: #{se_residual_block.1} parent=0
    _
  %s10 = ssub.s32 1, %s8
  %s11 = scalar_select 0, %s10, %s8
  loop: start=0, step=1, limit=4
  $region2: #{se_residual_block.1} parent=0 // loop_pre_header
    _
  $region3: #{se_residual_block.1} parent=0 // loop_header
    %s13 = sphi 0, %s17
    %p14 = scmp.ge.s32.totalorder %s13, 4
    %s23 = sphi 0, %s25
    %s26 = sphi 0, %s23
    %s27 = sphi 0, %s26
    %s43 = sphi 0, %s27
    %s47 = sphi 0, %s47
    %s49 = sphi 0, %s47
    %s50 = sphi 0, %s49
    %s64 = sphi 0, %s50
    %s68 = sphi 0, %s68
    %s70 = sphi 0, %s68
    %s71 = sphi 0, %s70
    %s85 = sphi 0, %s71
    %s89 = sphi 0, %s89
    %s91 = sphi 0, %s89
    %s92 = sphi 0, %s91
    %s106 = sphi 0, %s92
    %s110 = sphi 0, %s110
    %s112 = sphi 0, %s110
    %s113 = sphi 0, %s112
    %s127 = sphi 0, %s113
    %s131 = sphi 0, %s131
    %s133 = sphi 0, %s131
    %s134 = sphi 0, %s133
    %s148 = sphi 0, %s134
    %s152 = sphi 0, %s152
    %s154 = sphi 0, %s152
    %s155 = sphi 0, %s154
    %s169 = sphi 0, %s155
    %s175 = sphi 0, %s177
    %s178 = sphi 0, %s175
    %s179 = sphi 0, %s178
    %s195 = sphi 0, %s179
  $region4: #{se_residual_block.1} parent=0 // loop_header_branch
    %16 = sbr.rel (%p14) target = $region8
  $region5: #{se_residual_block.1} parent=0 // loop_body
    %s18 = ssub.s32 %s13, 1
    %s19 = ssub.s32 %s13, 2
    %s20 = sadd.s32 %s13, 1
    %s21 = ssub.s32 %s13, %s20
    %p22 = scmp.eq.s32.totalorder %s21, 0
    %s24 = sadd.s32 %s23, 1
    %s25 = scalar_select %p22, %s23, %s24
    %p28 = pneg %p22
    %p29 = scmp.eq.s32.totalorder %s13, 1
    %p30 = por %p28, %p29
    %p31 = scmp.ne.s32.totalorder %s23, %s26
    %p32 = scmp.eq.s32.totalorder %s13, 0
    %p33 = por %p31, %p32
    %p34 = scmp.ne.s32.totalorder %s23, %s26
    %p35 = scmp.eq.s32.totalorder %s18, 1
    %p36 = por %p34, %p35
    %p37 = scmp.ne.s32.totalorder %s26, %s27
    %p38 = scmp.eq.s32.totalorder %s18, 0
    %p39 = por %p37, %p38
    %p40 = scmp.ne.s32.totalorder %s26, %s27
    %p41 = scmp.eq.s32.totalorder %s19, 1
    %p42 = por %p40, %p41
    %p44 = scmp.ne.s32.totalorder %s27, %s43
    %p45 = scmp.eq.s32.totalorder %s19, 0
    %p46 = por %p44, %p45
    %s48 = sadd.s32 %s47, 1
    %p51 = scmp.eq.s32.totalorder %s13, 1
    %p52 = scmp.ne.s32.totalorder %s47, %s49
    %p53 = scmp.eq.s32.totalorder %s13, 0
    %p54 = por %p52, %p53
    %p55 = scmp.ne.s32.totalorder %s47, %s49
    %p56 = scmp.eq.s32.totalorder %s18, 1
    %p57 = por %p55, %p56
    %p58 = scmp.ne.s32.totalorder %s49, %s50
    %p59 = scmp.eq.s32.totalorder %s18, 0
    %p60 = por %p58, %p59
    %p61 = scmp.ne.s32.totalorder %s49, %s50
    %p62 = scmp.eq.s32.totalorder %s19, 1
    %p63 = por %p61, %p62
    %p65 = scmp.ne.s32.totalorder %s50, %s64
    %p66 = scmp.eq.s32.totalorder %s19, 0
    %p67 = por %p65, %p66
    %s69 = sadd.s32 %s68, 1
    %p72 = scmp.eq.s32.totalorder %s13, 1
    %p73 = scmp.ne.s32.totalorder %s68, %s70
    %p74 = scmp.eq.s32.totalorder %s13, 0
    %p75 = por %p73, %p74
    %p76 = scmp.ne.s32.totalorder %s68, %s70
    %p77 = scmp.eq.s32.totalorder %s18, 1
    %p78 = por %p76, %p77
    %p79 = scmp.ne.s32.totalorder %s70, %s71
    %p80 = scmp.eq.s32.totalorder %s18, 0
    %p81 = por %p79, %p80
    %p82 = scmp.ne.s32.totalorder %s70, %s71
    %p83 = scmp.eq.s32.totalorder %s19, 1
    %p84 = por %p82, %p83
    %p86 = scmp.ne.s32.totalorder %s71, %s85
    %p87 = scmp.eq.s32.totalorder %s19, 0
    %p88 = por %p86, %p87
    %s90 = sadd.s32 %s89, 1
    %p93 = scmp.eq.s32.totalorder %s13, 1
    %p94 = scmp.ne.s32.totalorder %s89, %s91
    %p95 = scmp.eq.s32.totalorder %s13, 0
    %p96 = por %p94, %p95
    %p97 = scmp.ne.s32.totalorder %s89, %s91
    %p98 = scmp.eq.s32.totalorder %s18, 1
    %p99 = por %p97, %p98
    %p100 = scmp.ne.s32.totalorder %s91, %s92
    %p101 = scmp.eq.s32.totalorder %s18, 0
    %p102 = por %p100, %p101
    %p103 = scmp.ne.s32.totalorder %s91, %s92
    %p104 = scmp.eq.s32.totalorder %s19, 1
    %p105 = por %p103, %p104
    %p107 = scmp.ne.s32.totalorder %s92, %s106
    %p108 = scmp.eq.s32.totalorder %s19, 0
    %p109 = por %p107, %p108
    %s111 = sadd.s32 %s110, 1
    %p114 = scmp.eq.s32.totalorder %s13, 1
    %p115 = scmp.ne.s32.totalorder %s110, %s112
    %p116 = scmp.eq.s32.totalorder %s13, 0
    %p117 = por %p115, %p116
    %p118 = scmp.ne.s32.totalorder %s110, %s112
    %p119 = scmp.eq.s32.totalorder %s18, 1
    %p120 = por %p118, %p119
    %p121 = scmp.ne.s32.totalorder %s112, %s113
    %p122 = scmp.eq.s32.totalorder %s18, 0
    %p123 = por %p121, %p122
    %p124 = scmp.ne.s32.totalorder %s112, %s113
    %p125 = scmp.eq.s32.totalorder %s19, 1
    %p126 = por %p124, %p125
    %p128 = scmp.ne.s32.totalorder %s113, %s127
    %p129 = scmp.eq.s32.totalorder %s19, 0
    %p130 = por %p128, %p129
    %s132 = sadd.s32 %s131, 1
    %p135 = scmp.eq.s32.totalorder %s13, 1
    %p136 = scmp.ne.s32.totalorder %s131, %s133
    %p137 = scmp.eq.s32.totalorder %s13, 0
    %p138 = por %p136, %p137
    %p139 = scmp.ne.s32.totalorder %s131, %s133
    %p140 = scmp.eq.s32.totalorder %s18, 1
    %p141 = por %p139, %p140
    %p142 = scmp.ne.s32.totalorder %s133, %s134
    %p143 = scmp.eq.s32.totalorder %s18, 0
    %p144 = por %p142, %p143
    %p145 = scmp.ne.s32.totalorder %s133, %s134
    %p146 = scmp.eq.s32.totalorder %s19, 1
    %p147 = por %p145, %p146
    %p149 = scmp.ne.s32.totalorder %s134, %s148
    %p150 = scmp.eq.s32.totalorder %s19, 0
    %p151 = por %p149, %p150
    %s153 = sadd.s32 %s152, 1
    %p156 = scmp.eq.s32.totalorder %s13, 1
    %p157 = scmp.ne.s32.totalorder %s152, %s154
    %p158 = scmp.eq.s32.totalorder %s13, 0
    %p159 = por %p157, %p158
    %p160 = scmp.ne.s32.totalorder %s152, %s154
    %p161 = scmp.eq.s32.totalorder %s18, 1
    %p162 = por %p160, %p161
    %p163 = scmp.ne.s32.totalorder %s154, %s155
    %p164 = scmp.eq.s32.totalorder %s18, 0
    %p165 = por %p163, %p164
    %p166 = scmp.ne.s32.totalorder %s154, %s155
    %p167 = scmp.eq.s32.totalorder %s19, 1
    %p168 = por %p166, %p167
    %p170 = scmp.ne.s32.totalorder %s155, %s169
    %p171 = scmp.eq.s32.totalorder %s19, 0
    %p172 = por %p170, %p171
    %s173 = ssub.s32 %s13, %s20
    %p174 = scmp.eq.s32.totalorder %s173, 0
    %s176 = sadd.s32 %s175, 1
    %s177 = scalar_select %p174, %s175, %s176
    %p180 = pneg %p174
    %p181 = scmp.eq.s32.totalorder %s13, 1
    %p182 = por %p180, %p181
    %p183 = scmp.ne.s32.totalorder %s175, %s178
    %p184 = scmp.eq.s32.totalorder %s13, 0
    %p185 = por %p183, %p184
    %p186 = scmp.ne.s32.totalorder %s175, %s178
    %p187 = scmp.eq.s32.totalorder %s18, 1
    %p188 = por %p186, %p187
    %p189 = scmp.ne.s32.totalorder %s178, %s179
    %p190 = scmp.eq.s32.totalorder %s18, 0
    %p191 = por %p189, %p190
    %p192 = scmp.ne.s32.totalorder %s178, %s179
    %p193 = scmp.eq.s32.totalorder %s19, 1
    %p194 = por %p192, %p193
    %p196 = scmp.ne.s32.totalorder %s179, %s195
    %p197 = scmp.eq.s32.totalorder %s19, 0
    %p198 = por %p196, %p197
    %p199 = scmp.le.s32.totalorder 1, %s13
    %p200 = scmp.lt.s32.totalorder %s13, 3
    %p201 = pnand %p199, %p200
    %p202 = pneg %p201
    // Predicated region
    $region9: #{se_residual_block.1} parent=5 // pred_check
      _
    $region10: #{se_residual_block.1} parent=5 // pred_check_branch
      %204 = sbr.rel (%p201) target = $region12
    $region11: #{se_residual_block.1} parent=5 // pred_region
      %s205 = ssub.s32 %s13, 1
      // Predicated region
      $region13: #{se_residual_block.1} parent=11 // pred_check
        %p206 = pneg %p60
      $region14: #{se_residual_block.1} parent=11 // pred_check_branch
        %208 = sbr.rel (%p206) target = $region16
      $region15: #{se_residual_block.1} parent=11 // pred_region
        _
      $region16: #{se_residual_block.1} parent=11 // pred_fallthru
        _
      // Predicated region
      $region17: #{se_residual_block.1} parent=11 // pred_check
        %p209 = pneg %p81
      $region18: #{se_residual_block.1} parent=11 // pred_check_branch
        %211 = sbr.rel (%p209) target = $region20
      $region19: #{se_residual_block.1} parent=11 // pred_region
        _
      $region20: #{se_residual_block.1} parent=11 // pred_fallthru
        _
      // Predicated region
      $region21: #{se_residual_block.1} parent=11 // pred_check
        %p212 = pneg %p102
      $region22: #{se_residual_block.1} parent=11 // pred_check_branch
        %214 = sbr.rel (%p212) target = $region24
      $region23: #{se_residual_block.1} parent=11 // pred_region
        _
      $region24: #{se_residual_block.1} parent=11 // pred_fallthru
        _
      // Predicated region
      $region25: #{se_residual_block.1} parent=11 // pred_check
        %p215 = pneg %p123
      $region26: #{se_residual_block.1} parent=11 // pred_check_branch
        %217 = sbr.rel (%p215) target = $region28
      $region27: #{se_residual_block.1} parent=11 // pred_region
        _
      $region28: #{se_residual_block.1} parent=11 // pred_fallthru
        _
      // Predicated region
      $region29: #{se_residual_block.1} parent=11 // pred_check
        %p218 = pneg %p144
      $region30: #{se_residual_block.1} parent=11 // pred_check_branch
        %220 = sbr.rel (%p218) target = $region32
      $region31: #{se_residual_block.1} parent=11 // pred_region
        _
      $region32: #{se_residual_block.1} parent=11 // pred_fallthru
        _
      // Predicated region
      $region33: #{se_residual_block.1} parent=11 // pred_check
        %p221 = pneg %p165
      $region34: #{se_residual_block.1} parent=11 // pred_check_branch
        %223 = sbr.rel (%p221) target = $region36
      $region35: #{se_residual_block.1} parent=11 // pred_region
        _
      $region36: #{se_residual_block.1} parent=11 // pred_fallthru
        _
    $region12: #{se_residual_block.1} parent=5 // pred_fallthru
      _
    %p224 = scmp.lt.s32.totalorder %s13, 2
    // Predicated region
    $region37: #{se_residual_block.1} parent=5 // pred_check
      %p225 = pneg %p224
    $region38: #{se_residual_block.1} parent=5 // pred_check_branch
      %227 = sbr.rel (%p225) target = $region40
    $region39: #{se_residual_block.1} parent=5 // pred_region
      // Predicated region
      $region41: #{se_residual_block.1} parent=39 // pred_check
        %p228 = pneg %p33
      $region42: #{se_residual_block.1} parent=39 // pred_check_branch
        %230 = sbr.rel (%p228) target = $region44
      $region43: #{se_residual_block.1} parent=39 // pred_region
        %s231 = smul.u32 4, %s13
        %p232 = scmp.lt.s32.totalorder %s231, 7
        %s233 = scalar_select %p232, %s231, 7
        %s234 = smul.addr %s233, 2
        %s235 = smul.addr %s234, 8
        %s236 = scalar_lea.vmem %s0, %s235
        %s237 = smul.u32 4, %s13
      $region44: #{se_residual_block.1} parent=39 // pred_fallthru
        _
    $region40: #{se_residual_block.1} parent=5 // pred_fallthru
      _
    %p238 = scmp.le.s32.totalorder 1, %s13
    %p239 = scmp.lt.s32.totalorder %s13, 3
    %p240 = pnand %p238, %p239
    %p241 = pneg %p240
    // Predicated region
    $region45: #{se_residual_block.1} parent=5 // pred_check
      _
    $region46: #{se_residual_block.1} parent=5 // pred_check_branch
      %243 = sbr.rel (%p240) target = $region48
    $region47: #{se_residual_block.1} parent=5 // pred_region
      %s244 = ssub.s32 %s13, 1
      %s245 = smul.u32 4, %s18
      %p246 = scmp.lt.s32.totalorder %s245, 7
      %s247 = scalar_select %p246, %s245, 7
      %s248 = smul.addr %s247, 2
      %s249 = smul.addr %s248, 8
      %s250 = scalar_lea.vmem %s0, %s249
      %p251 = pneg %p39
      %p252 = pneg %p36
      %p253 = pneg %p60
      %p254 = pneg %p57
      %p255 = pneg %p81
      %p256 = pneg %p78
      %p257 = pneg %p102
      %p258 = pneg %p99
      %p259 = pneg %p123
      %p260 = pneg %p120
      %p261 = pneg %p144
      %p262 = pneg %p141
      %p263 = pneg %p165
      %p264 = pneg %p162
      %p265 = pneg %p191
      %p266 = pneg %p188
      %s267 = smul.u32 4, %s18
      %p268 = scmp.lt.s32.totalorder %s267, 7
      %s269 = scalar_select %p268, %s267, 7
      %s270 = smul.addr %s269, 2
      %s271 = smul.addr %s270, 8
      %s272 = scalar_lea.vmem %s7, %s271
      %s273 = smul.u32 4, %s18
      %p274 = scmp.lt.s32.totalorder %s273, 7
      %s275 = scalar_select %p274, %s273, 7
      %s276 = smul.addr %s275, 2
      %s277 = smul.addr %s276, 8
      %s278 = scalar_lea.vmem %s0, %s277
      %s279 = smul.u32 4, %s18
      %s280 = smul.u32 4, %s18
      %p281 = scmp.lt.s32.totalorder %s280, 7
      %s282 = scalar_select %p281, %s280, 7
      %s283 = smul.addr %s282, 2
      %s284 = smul.addr %s283, 8
      %s285 = scalar_lea.vmem %s7, %s284
      %s286 = smul.u32 4, %s18
      %v287 = vlaneseq
      %v288 = vshrl.u32 %v287, 7
      %v289 = vadd.s32 %v288, 8
      %v290 = vadd.s32 %v288, 16
      %v291 = vadd.s32 %v288, 24
      %vm292 = vcmp.lt.s32.totalorder %v288, 0
      %v293 = vsub.s32 0, %v288
      %v294 = vsel %vm292, %v293, %v288
      %v295 = vshrl.u32 %v294, 3
      %v296 = vand.u32 %v294, 7
      %v297 = vsub.s32 0, %v296
      %v298 = vsel %vm292, %v297, %v296
      %vm299 = vcmp.lt.s32.totalorder %v289, 0
      %v300 = vsub.s32 0, %v289
      %v301 = vsel %vm299, %v300, %v289
      %v302 = vshrl.u32 %v301, 3
      %v303 = vand.u32 %v301, 7
      %v304 = vsub.s32 0, %v303
      %v305 = vsel %vm299, %v304, %v303
      %vm306 = vcmp.lt.s32.totalorder %v290, 0
      %v307 = vsub.s32 0, %v290
      %v308 = vsel %vm306, %v307, %v290
      %v309 = vshrl.u32 %v308, 3
      %v310 = vand.u32 %v308, 7
      %v311 = vsub.s32 0, %v310
      %v312 = vsel %vm306, %v311, %v310
      %vm313 = vcmp.lt.s32.totalorder %v291, 0
      %v314 = vsub.s32 0, %v291
      %v315 = vsel %vm313, %v314, %v291
      %v316 = vshrl.u32 %v315, 3
      %v317 = vand.u32 %v315, 7
      %v318 = vsub.s32 0, %v317
      %v319 = vsel %vm313, %v318, %v317
      %vm320 = vcmp.ne.s32.totalorder %v298, 0
      %vm321 = vcmp.ne.s32.totalorder %v305, 0
      %vm322 = vcmp.ne.s32.totalorder %v312, 0
      %vm323 = vcmp.ne.s32.totalorder %v319, 0
      %vm324 = vcmp.lt.s32.totalorder %v298, 0
      %vm325 = vcmp.lt.s32.totalorder %v305, 0
      %vm326 = vcmp.lt.s32.totalorder %v312, 0
      %vm327 = vcmp.lt.s32.totalorder %v319, 0
      %vm328 = vmand %vm324, %vm320
      %vm329 = vmand %vm325, %vm321
      %vm330 = vmand %vm326, %vm322
      %vm331 = vmand %vm327, %vm323
      %v332 = vadd.s32 %v298, 8
      %v333 = vadd.s32 %v305, 8
      %v334 = vadd.s32 %v312, 8
      %v335 = vadd.s32 %v319, 8
      %v336 = vsel %vm328, %v332, %v298
      %v337 = vsel %vm329, %v333, %v305
      %v338 = vsel %vm330, %v334, %v312
      %v339 = vsel %vm331, %v335, %v319
      %vm340 = vcmp.ne.s32.totalorder %v336, 0
      %vm341 = vcmp.ne.s32.totalorder %v337, 0
      %vm342 = vcmp.ne.s32.totalorder %v338, 0
      %vm343 = vcmp.ne.s32.totalorder %v339, 0
      %v344 = vsel %vm340, 1.0, 0.0
      %v345 = vsel %vm341, 1.0, 0.0
      %v346 = vsel %vm342, 1.0, 0.0
      %v347 = vsel %vm343, 1.0, 0.0
      %vm348 = vcmp.ne.s32.totalorder %v336, 7
      %vm349 = vcmp.ne.s32.totalorder %v337, 7
      %vm350 = vcmp.ne.s32.totalorder %v338, 7
      %vm351 = vcmp.ne.s32.totalorder %v339, 7
      %v352 = vsel %vm348, 1.0, 0.0
      %v353 = vsel %vm349, 1.0, 0.0
      %v354 = vsel %vm350, 1.0, 0.0
      %v355 = vsel %vm351, 1.0, 0.0
      %v356 = vld [vmem:[%s278] sm:$0xff]
      %v357 = vld [vmem:[%s278 + $0x8] sm:$0xff]
      %v358 = vld [vmem:[%s278 + $0x10] sm:$0xff]
      %v359 = vld [vmem:[%s278 + $0x18] sm:$0xff]
      %v360 = vld [vmem:[%s278 + $0x20] sm:$0xff]
      %v361 = vld [vmem:[%s278 + $0x28] sm:$0xff]
      %v362 = vld [vmem:[%s278 + $0x30] sm:$0xff]
      %v363 = vld [vmem:[%s278 + $0x38] sm:$0xff]
      %v364 = vpack.c.bf16 %v358, %v356
      %v365 = vpack.c.bf16 %v359, %v357
      %v366 = vpack.c.bf16 %v362, %v360
      %v367 = vpack.c.bf16 %v363, %v361
      %368 = vst [vmem:[#allocation2] sm:$0xff] %v364
      %369 = vst [vmem:[#allocation2 + $0x8] sm:$0xff] %v365
      %370 = vst [vmem:[#allocation2 + $0x10] sm:$0xff] %v366
      %371 = vst [vmem:[#allocation2 + $0x18] sm:$0xff] %v367
      %v372 = vld [vmem:[#allocation2] sm:$0xff]
      %v373 = vld [vmem:[#allocation2 + $0x8] sm:$0xff]
      %v374 = vld [vmem:[#allocation2 + $0x10] sm:$0xff]
      %v375 = vld [vmem:[#allocation2 + $0x18] sm:$0xff]
      %s376 = scalar_lea.vmem %s1, 256
      %v377 = vld [vmem:[%s376] sm:$0xff]
      %v378 = vld [vmem:[%s376 + $0x8] sm:$0xff]
      %v379 = vld [vmem:[%s376 + $0x10] sm:$0xff]
      %v380 = vld [vmem:[%s376 + $0x18] sm:$0xff]
      %v381 = vld [vmem:[%s376 + $0x20] sm:$0xff]
      %v382 = vld [vmem:[%s376 + $0x28] sm:$0xff]
      %v383 = vld [vmem:[%s376 + $0x30] sm:$0xff]
      %v384 = vld [vmem:[%s376 + $0x38] sm:$0xff]
      %v385 = vld [vmem:[%s376 + $0x40] sm:$0xff]
      %v386 = vld [vmem:[%s376 + $0x48] sm:$0xff]
      %v387 = vld [vmem:[%s376 + $0x50] sm:$0xff]
      %v388 = vld [vmem:[%s376 + $0x58] sm:$0xff]
      %v389 = vld [vmem:[%s376 + $0x60] sm:$0xff]
      %v390 = vld [vmem:[%s376 + $0x68] sm:$0xff]
      %v391 = vld [vmem:[%s376 + $0x70] sm:$0xff]
      %v392 = vld [vmem:[%s376 + $0x78] sm:$0xff]
      %v393 = vld [vmem:[%s376 + $0x80] sm:$0xff]
      %v394 = vld [vmem:[%s376 + $0x88] sm:$0xff]
      %v395 = vld [vmem:[%s376 + $0x90] sm:$0xff]
      %v396 = vld [vmem:[%s376 + $0x98] sm:$0xff]
      %v397 = vld [vmem:[%s376 + $0xa0] sm:$0xff]
      %v398 = vld [vmem:[%s376 + $0xa8] sm:$0xff]
      %v399 = vld [vmem:[%s376 + $0xb0] sm:$0xff]
      %v400 = vld [vmem:[%s376 + $0xb8] sm:$0xff]
      %v401 = vld [vmem:[%s376 + $0xc0] sm:$0xff]
      %v402 = vld [vmem:[%s376 + $0xc8] sm:$0xff]
      %v403 = vld [vmem:[%s376 + $0xd0] sm:$0xff]
      %v404 = vld [vmem:[%s376 + $0xd8] sm:$0xff]
      %v405 = vld [vmem:[%s376 + $0xe0] sm:$0xff]
      %v406 = vld [vmem:[%s376 + $0xe8] sm:$0xff]
      %v407 = vld [vmem:[%s376 + $0xf0] sm:$0xff]
      %v408 = vld [vmem:[%s376 + $0xf8] sm:$0xff]
      %v441 = vunpack.c.l.b16 %v377
      %v442 = vunpack.c.h.b16 %v377
      %v443 = vunpack.c.l.b16 %v378
      %v444 = vunpack.c.h.b16 %v378
      %v445 = vunpack.c.l.b16 %v379
      %v446 = vunpack.c.h.b16 %v379
      %v447 = vunpack.c.l.b16 %v380
      %v448 = vunpack.c.h.b16 %v380
      %v449 = vunpack.c.l.b16 %v381
      %v450 = vunpack.c.h.b16 %v381
      %v451 = vunpack.c.l.b16 %v382
      %v452 = vunpack.c.h.b16 %v382
      %v453 = vunpack.c.l.b16 %v383
      %v454 = vunpack.c.h.b16 %v383
      %v455 = vunpack.c.l.b16 %v384
      %v456 = vunpack.c.h.b16 %v384
      %v457 = vunpack.c.l.b16 %v385
      %v458 = vunpack.c.h.b16 %v385
      %v459 = vunpack.c.l.b16 %v386
      %v460 = vunpack.c.h.b16 %v386
      %v461 = vunpack.c.l.b16 %v387
      %v462 = vunpack.c.h.b16 %v387
      %v463 = vunpack.c.l.b16 %v388
      %v464 = vunpack.c.h.b16 %v388
      %v465 = vunpack.c.l.b16 %v389
      %v466 = vunpack.c.h.b16 %v389
      %v467 = vunpack.c.l.b16 %v390
      %v468 = vunpack.c.h.b16 %v390
      %v469 = vunpack.c.l.b16 %v391
      %v470 = vunpack.c.h.b16 %v391
      %v471 = vunpack.c.l.b16 %v392
      %v472 = vunpack.c.h.b16 %v392
      %v473 = vunpack.c.l.b16 %v393
      %v474 = vunpack.c.h.b16 %v393
      %v475 = vunpack.c.l.b16 %v394
      %v476 = vunpack.c.h.b16 %v394
      %v477 = vunpack.c.l.b16 %v395
      %v478 = vunpack.c.h.b16 %v395
      %v479 = vunpack.c.l.b16 %v396
      %v480 = vunpack.c.h.b16 %v396
      %v481 = vunpack.c.l.b16 %v397
      %v482 = vunpack.c.h.b16 %v397
      %v483 = vunpack.c.l.b16 %v398
      %v484 = vunpack.c.h.b16 %v398
      %v485 = vunpack.c.l.b16 %v399
      %v486 = vunpack.c.h.b16 %v399
      %v487 = vunpack.c.l.b16 %v400
      %v488 = vunpack.c.h.b16 %v400
      %v489 = vunpack.c.l.b16 %v401
      %v490 = vunpack.c.h.b16 %v401
      %v491 = vunpack.c.l.b16 %v402
      %v492 = vunpack.c.h.b16 %v402
      %v493 = vunpack.c.l.b16 %v403
      %v494 = vunpack.c.h.b16 %v403
      %v495 = vunpack.c.l.b16 %v404
      %v496 = vunpack.c.h.b16 %v404
      %v497 = vunpack.c.l.b16 %v405
      %v498 = vunpack.c.h.b16 %v405
      %v499 = vunpack.c.l.b16 %v406
      %v500 = vunpack.c.h.b16 %v406
      %v501 = vunpack.c.l.b16 %v407
      %v502 = vunpack.c.h.b16 %v407
      %v503 = vunpack.c.l.b16 %v408
      %v504 = vunpack.c.h.b16 %v408
      %v505 = vpack.c.b16 %v443, %v441
      %v506 = vpack.c.b16 %v444, %v442
      %v507 = vpack.c.b16 %v447, %v445
      %v508 = vpack.c.b16 %v448, %v446
      %v509 = vpack.c.b16 %v451, %v449
      %v510 = vpack.c.b16 %v452, %v450
      %v511 = vpack.c.b16 %v455, %v453
      %v512 = vpack.c.b16 %v456, %v454
      %v513 = vpack.c.b16 %v459, %v457
      %v514 = vpack.c.b16 %v460, %v458
      %v515 = vpack.c.b16 %v463, %v461
      %v516 = vpack.c.b16 %v464, %v462
      %v517 = vpack.c.b16 %v467, %v465
      %v518 = vpack.c.b16 %v468, %v466
      %v519 = vpack.c.b16 %v471, %v469
      %v520 = vpack.c.b16 %v472, %v470
      %v521 = vpack.c.b16 %v475, %v473
      %v522 = vpack.c.b16 %v476, %v474
      %v523 = vpack.c.b16 %v479, %v477
      %v524 = vpack.c.b16 %v480, %v478
      %v525 = vpack.c.b16 %v483, %v481
      %v526 = vpack.c.b16 %v484, %v482
      %v527 = vpack.c.b16 %v487, %v485
      %v528 = vpack.c.b16 %v488, %v486
      %v529 = vpack.c.b16 %v491, %v489
      %v530 = vpack.c.b16 %v492, %v490
      %v531 = vpack.c.b16 %v495, %v493
      %v532 = vpack.c.b16 %v496, %v494
      %v533 = vpack.c.b16 %v499, %v497
      %v534 = vpack.c.b16 %v500, %v498
      %v535 = vpack.c.b16 %v503, %v501
      %v536 = vpack.c.b16 %v504, %v502
      %569 = vmatprep.subr.bf16.mxu0 %v506
      %570 = vmatpush1.bf16.msra.mxu0 %v505
      %571 = vmatprep.subr.bf16.mxu0 %v508
      %572 = vmatpush1.bf16.msra.mxu0 %v507
      %573 = vmatprep.subr.bf16.mxu0 %v510
      %574 = vmatpush1.bf16.msra.mxu0 %v509
      %575 = vmatprep.subr.bf16.mxu0 %v512
      %576 = vmatpush1.bf16.msra.mxu0 %v511
      %577 = vmatprep.subr.bf16.mxu0 %v514
      %578 = vmatpush1.bf16.msra.mxu0 %v513
      %579 = vmatprep.subr.bf16.mxu0 %v516
      %580 = vmatpush1.bf16.msra.mxu0 %v515
      %581 = vmatprep.subr.bf16.mxu0 %v518
      %582 = vmatpush1.bf16.msra.mxu0 %v517
      %583 = vmatprep.subr.bf16.mxu0 %v520
      %584 = vmatpush1.bf16.msra.mxu0 %v519
      %585 = vmatprep.subr.bf16.mxu0 %v522
      %586 = vmatpush1.bf16.msra.mxu0 %v521
      %587 = vmatprep.subr.bf16.mxu0 %v524
      %588 = vmatpush1.bf16.msra.mxu0 %v523
      %589 = vmatprep.subr.bf16.mxu0 %v526
      %590 = vmatpush1.bf16.msra.mxu0 %v525
      %591 = vmatprep.subr.bf16.mxu0 %v528
      %592 = vmatpush1.bf16.msra.mxu0 %v527
      %593 = vmatprep.subr.bf16.mxu0 %v530
      %594 = vmatpush1.bf16.msra.mxu0 %v529
      %595 = vmatprep.subr.bf16.mxu0 %v532
      %596 = vmatpush1.bf16.msra.mxu0 %v531
      %597 = vmatprep.subr.bf16.mxu0 %v534
      %598 = vmatpush1.bf16.msra.mxu0 %v533
      %599 = vmatprep.subr.bf16.mxu0 %v536
      %600 = vmatpush1.bf16.msra.mxu0 %v535
      %601 = vmatprep.mubr.bf16.mxu0 %v373
      %602 = vmatmul.mubr.bf16.gmra.mrb[0].mxu0 %v372
      %v603 = vpop.f32.mrb[0].mxu0
      %v604 = vadd.f32 0.0, %v603
      %v605 = vpop.f32.mrb[0].mxu0
      %v606 = vadd.f32 0.0, %v605
      %v607 = vpop.f32.mrb[0].mxu0
      %v608 = vadd.f32 0.0, %v607
      %v609 = vpop.f32.mrb[0].mxu0
      %v610 = vadd.f32 0.0, %v609
      %611 = vmatprep.mubr.bf16.mxu0 %v375
      %612 = vmatmul.mubr.bf16.gmra.mrb[0].mxu0 %v374
      %v613 = vpop.f32.mrb[0].mxu0
      %v614 = vadd.f32 0.0, %v613
      %v615 = vpop.f32.mrb[0].mxu0
      %v616 = vadd.f32 0.0, %v615
      %v617 = vpop.f32.mrb[0].mxu0
      %v618 = vadd.f32 0.0, %v617
      %v619 = vpop.f32.mrb[0].mxu0
      %v620 = vadd.f32 0.0, %v619
      %621 = vdwg.mxu0
      %622 = vst [vmem:[#allocation3] sm:$0xff] %v604
      %623 = vst [vmem:[#allocation3 + $0x8] sm:$0xff] %v606
      %624 = vst [vmem:[#allocation3 + $0x10] sm:$0xff] %v608
      %625 = vst [vmem:[#allocation3 + $0x18] sm:$0xff] %v610
      %626 = vst [vmem:[#allocation3 + $0x20] sm:$0xff] %v614
      %627 = vst [vmem:[#allocation3 + $0x28] sm:$0xff] %v616
      %628 = vst [vmem:[#allocation3 + $0x30] sm:$0xff] %v618
      %629 = vst [vmem:[#allocation3 + $0x38] sm:$0xff] %v620
      %v630 = vld [vmem:[%s1] sm:$0xff]
      %v631 = vld [vmem:[%s1 + $0x8] sm:$0xff]
      %v632 = vld [vmem:[%s1 + $0x10] sm:$0xff]
      %v633 = vld [vmem:[%s1 + $0x18] sm:$0xff]
      %v634 = vld [vmem:[%s1 + $0x20] sm:$0xff]
      %v635 = vld [vmem:[%s1 + $0x28] sm:$0xff]
      %v636 = vld [vmem:[%s1 + $0x30] sm:$0xff]
      %v637 = vld [vmem:[%s1 + $0x38] sm:$0xff]
      %v638 = vld [vmem:[%s1 + $0x40] sm:$0xff]
      %v639 = vld [vmem:[%s1 + $0x48] sm:$0xff]
      %v640 = vld [vmem:[%s1 + $0x50] sm:$0xff]
      %v641 = vld [vmem:[%s1 + $0x58] sm:$0xff]
      %v642 = vld [vmem:[%s1 + $0x60] sm:$0xff]
      %v643 = vld [vmem:[%s1 + $0x68] sm:$0xff]
      %v644 = vld [vmem:[%s1 + $0x70] sm:$0xff]
      %v645 = vld [vmem:[%s1 + $0x78] sm:$0xff]
      %v646 = vld [vmem:[%s1 + $0x80] sm:$0xff]
      %v647 = vld [vmem:[%s1 + $0x88] sm:$0xff]
      %v648 = vld [vmem:[%s1 + $0x90] sm:$0xff]
      %v649 = vld [vmem:[%s1 + $0x98] sm:$0xff]
      %v650 = vld [vmem:[%s1 + $0xa0] sm:$0xff]
      %v651 = vld [vmem:[%s1 + $0xa8] sm:$0xff]
      %v652 = vld [vmem:[%s1 + $0xb0] sm:$0xff]
      %v653 = vld [vmem:[%s1 + $0xb8] sm:$0xff]
      %v654 = vld [vmem:[%s1 + $0xc0] sm:$0xff]
      %v655 = vld [vmem:[%s1 + $0xc8] sm:$0xff]
      %v656 = vld [vmem:[%s1 + $0xd0] sm:$0xff]
      %v657 = vld [vmem:[%s1 + $0xd8] sm:$0xff]
      %v658 = vld [vmem:[%s1 + $0xe0] sm:$0xff]
      %v659 = vld [vmem:[%s1 + $0xe8] sm:$0xff]
      %v660 = vld [vmem:[%s1 + $0xf0] sm:$0xff]
      %v661 = vld [vmem:[%s1 + $0xf8] sm:$0xff]
      %v694 = vunpack.c.l.b16 %v630
      %v695 = vunpack.c.h.b16 %v630
      %v696 = vunpack.c.l.b16 %v631
      %v697 = vunpack.c.h.b16 %v631
      %v698 = vunpack.c.l.b16 %v632
      %v699 = vunpack.c.h.b16 %v632
      %v700 = vunpack.c.l.b16 %v633
      %v701 = vunpack.c.h.b16 %v633
      %v702 = vunpack.c.l.b16 %v634
      %v703 = vunpack.c.h.b16 %v634
      %v704 = vunpack.c.l.b16 %v635
      %v705 = vunpack.c.h.b16 %v635
      %v706 = vunpack.c.l.b16 %v636
      %v707 = vunpack.c.h.b16 %v636
      %v708 = vunpack.c.l.b16 %v637
      %v709 = vunpack.c.h.b16 %v637
      %v710 = vunpack.c.l.b16 %v638
      %v711 = vunpack.c.h.b16 %v638
      %v712 = vunpack.c.l.b16 %v639
      %v713 = vunpack.c.h.b16 %v639
      %v714 = vunpack.c.l.b16 %v640
      %v715 = vunpack.c.h.b16 %v640
      %v716 = vunpack.c.l.b16 %v641
      %v717 = vunpack.c.h.b16 %v641
      %v718 = vunpack.c.l.b16 %v642
      %v719 = vunpack.c.h.b16 %v642
      %v720 = vunpack.c.l.b16 %v643
      %v721 = vunpack.c.h.b16 %v643
      %v722 = vunpack.c.l.b16 %v644
      %v723 = vunpack.c.h.b16 %v644
      %v724 = vunpack.c.l.b16 %v645
      %v725 = vunpack.c.h.b16 %v645
      %v726 = vunpack.c.l.b16 %v646
      %v727 = vunpack.c.h.b16 %v646
      %v728 = vunpack.c.l.b16 %v647
      %v729 = vunpack.c.h.b16 %v647
      %v730 = vunpack.c.l.b16 %v648
      %v731 = vunpack.c.h.b16 %v648
      %v732 = vunpack.c.l.b16 %v649
      %v733 = vunpack.c.h.b16 %v649
      %v734 = vunpack.c.l.b16 %v650
      %v735 = vunpack.c.h.b16 %v650
      %v736 = vunpack.c.l.b16 %v651
      %v737 = vunpack.c.h.b16 %v651
      %v738 = vunpack.c.l.b16 %v652
      %v739 = vunpack.c.h.b16 %v652
      %v740 = vunpack.c.l.b16 %v653
      %v741 = vunpack.c.h.b16 %v653
      %v742 = vunpack.c.l.b16 %v654
      %v743 = vunpack.c.h.b16 %v654
      %v744 = vunpack.c.l.b16 %v655
      %v745 = vunpack.c.h.b16 %v655
      %v746 = vunpack.c.l.b16 %v656
      %v747 = vunpack.c.h.b16 %v656
      %v748 = vunpack.c.l.b16 %v657
      %v749 = vunpack.c.h.b16 %v657
      %v750 = vunpack.c.l.b16 %v658
      %v751 = vunpack.c.h.b16 %v658
      %v752 = vunpack.c.l.b16 %v659
      %v753 = vunpack.c.h.b16 %v659
      %v754 = vunpack.c.l.b16 %v660
      %v755 = vunpack.c.h.b16 %v660
      %v756 = vunpack.c.l.b16 %v661
      %v757 = vunpack.c.h.b16 %v661
      %v758 = vpack.c.b16 %v696, %v694
      %v759 = vpack.c.b16 %v697, %v695
      %v760 = vpack.c.b16 %v700, %v698
      %v761 = vpack.c.b16 %v701, %v699
      %v762 = vpack.c.b16 %v704, %v702
      %v763 = vpack.c.b16 %v705, %v703
      %v764 = vpack.c.b16 %v708, %v706
      %v765 = vpack.c.b16 %v709, %v707
      %v766 = vpack.c.b16 %v712, %v710
      %v767 = vpack.c.b16 %v713, %v711
      %v768 = vpack.c.b16 %v716, %v714
      %v769 = vpack.c.b16 %v717, %v715
      %v770 = vpack.c.b16 %v720, %v718
      %v771 = vpack.c.b16 %v721, %v719
      %v772 = vpack.c.b16 %v724, %v722
      %v773 = vpack.c.b16 %v725, %v723
      %v774 = vpack.c.b16 %v728, %v726
      %v775 = vpack.c.b16 %v729, %v727
      %v776 = vpack.c.b16 %v732, %v730
      %v777 = vpack.c.b16 %v733, %v731
      %v778 = vpack.c.b16 %v736, %v734
      %v779 = vpack.c.b16 %v737, %v735
      %v780 = vpack.c.b16 %v740, %v738
      %v781 = vpack.c.b16 %v741, %v739
      %v782 = vpack.c.b16 %v744, %v742
      %v783 = vpack.c.b16 %v745, %v743
      %v784 = vpack.c.b16 %v748, %v746
      %v785 = vpack.c.b16 %v749, %v747
      %v786 = vpack.c.b16 %v752, %v750
      %v787 = vpack.c.b16 %v753, %v751
      %v788 = vpack.c.b16 %v756, %v754
      %v789 = vpack.c.b16 %v757, %v755
      %822 = vmatprep.subr.bf16.mxu0 %v759
      %823 = vmatpush1.bf16.msra.mxu0 %v758
      %824 = vmatprep.subr.bf16.mxu0 %v761
      %825 = vmatpush1.bf16.msra.mxu0 %v760
      %826 = vmatprep.subr.bf16.mxu0 %v763
      %827 = vmatpush1.bf16.msra.mxu0 %v762
      %828 = vmatprep.subr.bf16.mxu0 %v765
      %829 = vmatpush1.bf16.msra.mxu0 %v764
      %830 = vmatprep.subr.bf16.mxu0 %v767
      %831 = vmatpush1.bf16.msra.mxu0 %v766
      %832 = vmatprep.subr.bf16.mxu0 %v769
      %833 = vmatpush1.bf16.msra.mxu0 %v768
      %834 = vmatprep.subr.bf16.mxu0 %v771
      %835 = vmatpush1.bf16.msra.mxu0 %v770
      %836 = vmatprep.subr.bf16.mxu0 %v773
      %837 = vmatpush1.bf16.msra.mxu0 %v772
      %838 = vmatprep.subr.bf16.mxu0 %v775
      %839 = vmatpush1.bf16.msra.mxu0 %v774
      %840 = vmatprep.subr.bf16.mxu0 %v777
      %841 = vmatpush1.bf16.msra.mxu0 %v776
      %842 = vmatprep.subr.bf16.mxu0 %v779
      %843 = vmatpush1.bf16.msra.mxu0 %v778
      %844 = vmatprep.subr.bf16.mxu0 %v781
      %845 = vmatpush1.bf16.msra.mxu0 %v780
      %846 = vmatprep.subr.bf16.mxu0 %v783
      %847 = vmatpush1.bf16.msra.mxu0 %v782
      %848 = vmatprep.subr.bf16.mxu0 %v785
      %849 = vmatpush1.bf16.msra.mxu0 %v784
      %850 = vmatprep.subr.bf16.mxu0 %v787
      %851 = vmatpush1.bf16.msra.mxu0 %v786
      %852 = vmatprep.subr.bf16.mxu0 %v789
      %853 = vmatpush1.bf16.msra.mxu0 %v788
      %854 = vmatprep.mubr.bf16.mxu0 %v373
      %855 = vmatmul.mubr.bf16.gmra.mrb[0].mxu0 %v372
      %v856 = vpop.f32.mrb[0].mxu0
      %v857 = vadd.f32 0.0, %v856
      %v858 = vpop.f32.mrb[0].mxu0
      %v859 = vadd.f32 0.0, %v858
      %v860 = vpop.f32.mrb[0].mxu0
      %v861 = vadd.f32 0.0, %v860
      %v862 = vpop.f32.mrb[0].mxu0
      %v863 = vadd.f32 0.0, %v862
      %864 = vmatprep.mubr.bf16.mxu0 %v375
      %865 = vmatmul.mubr.bf16.gmra.mrb[0].mxu0 %v374
      %v866 = vpop.f32.mrb[0].mxu0
      %v867 = vadd.f32 0.0, %v866
      %v868 = vpop.f32.mrb[0].mxu0
      %v869 = vadd.f32 0.0, %v868
      %v870 = vpop.f32.mrb[0].mxu0
      %v871 = vadd.f32 0.0, %v870
      %v872 = vpop.f32.mrb[0].mxu0
      %v873 = vadd.f32 0.0, %v872
      %874 = vdwg.mxu0
      %v875 = vld [vmem:[#allocation3] sm:$0xff]
      %v876 = vld [vmem:[#allocation3 + $0x8] sm:$0xff]
      %v877 = vld [vmem:[#allocation3 + $0x10] sm:$0xff]
      %v878 = vld [vmem:[#allocation3 + $0x18] sm:$0xff]
      %v879 = vld [vmem:[#allocation3 + $0x20] sm:$0xff]
      %v880 = vld [vmem:[#allocation3 + $0x28] sm:$0xff]
      %v881 = vld [vmem:[#allocation3 + $0x30] sm:$0xff]
      %v882 = vld [vmem:[#allocation3 + $0x38] sm:$0xff]
      %v883 = vrot.slane %v857, 7
      %v884 = vrot.slane %v859, 7
      %v885 = vrot.slane %v861, 7
      %v886 = vrot.slane %v863, 7
      %v887 = vrot.slane %v867, 7
      %v888 = vrot.slane %v869, 7
      %v889 = vrot.slane %v871, 7
      %v890 = vrot.slane %v873, 7
      %vm891 = vcmp.lt.s32.totalorder %v288, 1
      %v892 = vsel %vm891, %v887, %v889
      %v893 = vsel %vm891, %v888, %v890
      %v894 = vsel %vm891, %v885, %v887
      %v895 = vsel %vm891, %v886, %v888
      %v896 = vsel %vm891, %v883, %v885
      %v897 = vsel %vm891, %v884, %v886
      %v898 = vsel %vm891, %v889, %v883
      %v899 = vsel %vm891, %v890, %v884
      %v900 = vmul.f32 %v898, %v344
      %v901 = vmul.f32 %v899, %v344
      %v902 = vmul.f32 %v896, %v345
      %v903 = vmul.f32 %v897, %v345
      %v904 = vmul.f32 %v894, %v346
      %v905 = vmul.f32 %v895, %v346
      %v906 = vmul.f32 %v892, %v347
      %v907 = vmul.f32 %v893, %v347
      %v908 = vadd.f32 %v875, %v900
      %v909 = vadd.f32 %v876, %v901
      %v910 = vadd.f32 %v877, %v902
      %v911 = vadd.f32 %v878, %v903
      %v912 = vadd.f32 %v879, %v904
      %v913 = vadd.f32 %v880, %v905
      %v914 = vadd.f32 %v881, %v906
      %v915 = vadd.f32 %v882, %v907
      %916 = vst [vmem:[#allocation3] sm:$0xff] %v908
      %917 = vst [vmem:[#allocation3 + $0x8] sm:$0xff] %v909
      %918 = vst [vmem:[#allocation3 + $0x10] sm:$0xff] %v910
      %919 = vst [vmem:[#allocation3 + $0x18] sm:$0xff] %v911
      %920 = vst [vmem:[#allocation3 + $0x20] sm:$0xff] %v912
      %921 = vst [vmem:[#allocation3 + $0x28] sm:$0xff] %v913
      %922 = vst [vmem:[#allocation3 + $0x30] sm:$0xff] %v914
      %923 = vst [vmem:[#allocation3 + $0x38] sm:$0xff] %v915
      %s924 = scalar_lea.vmem %s1, 512
      %v925 = vld [vmem:[%s924] sm:$0xff]
      %v926 = vld [vmem:[%s924 + $0x8] sm:$0xff]
      %v927 = vld [vmem:[%s924 + $0x10] sm:$0xff]
      %v928 = vld [vmem:[%s924 + $0x18] sm:$0xff]
      %v929 = vld [vmem:[%s924 + $0x20] sm:$0xff]
      %v930 = vld [vmem:[%s924 + $0x28] sm:$0xff]
      %v931 = vld [vmem:[%s924 + $0x30] sm:$0xff]
      %v932 = vld [vmem:[%s924 + $0x38] sm:$0xff]
      %v933 = vld [vmem:[%s924 + $0x40] sm:$0xff]
      %v934 = vld [vmem:[%s924 + $0x48] sm:$0xff]
      %v935 = vld [vmem:[%s924 + $0x50] sm:$0xff]
      %v936 = vld [vmem:[%s924 + $0x58] sm:$0xff]
      %v937 = vld [vmem:[%s924 + $0x60] sm:$0xff]
      %v938 = vld [vmem:[%s924 + $0x68] sm:$0xff]
      %v939 = vld [vmem:[%s924 + $0x70] sm:$0xff]
      %v940 = vld [vmem:[%s924 + $0x78] sm:$0xff]
      %v941 = vld [vmem:[%s924 + $0x80] sm:$0xff]
      %v942 = vld [vmem:[%s924 + $0x88] sm:$0xff]
      %v943 = vld [vmem:[%s924 + $0x90] sm:$0xff]
      %v944 = vld [vmem:[%s924 + $0x98] sm:$0xff]
      %v945 = vld [vmem:[%s924 + $0xa0] sm:$0xff]
      %v946 = vld [vmem:[%s924 + $0xa8] sm:$0xff]
      %v947 = vld [vmem:[%s924 + $0xb0] sm:$0xff]
      %v948 = vld [vmem:[%s924 + $0xb8] sm:$0xff]
      %v949 = vld [vmem:[%s924 + $0xc0] sm:$0xff]
      %v950 = vld [vmem:[%s924 + $0xc8] sm:$0xff]
      %v951 = vld [vmem:[%s924 + $0xd0] sm:$0xff]
      %v952 = vld [vmem:[%s924 + $0xd8] sm:$0xff]
      %v953 = vld [vmem:[%s924 + $0xe0] sm:$0xff]
      %v954 = vld [vmem:[%s924 + $0xe8] sm:$0xff]
      %v955 = vld [vmem:[%s924 + $0xf0] sm:$0xff]
      %v956 = vld [vmem:[%s924 + $0xf8] sm:$0xff]
      %v989 = vunpack.c.l.b16 %v925
      %v990 = vunpack.c.h.b16 %v925
      %v991 = vunpack.c.l.b16 %v926
      %v992 = vunpack.c.h.b16 %v926
      %v993 = vunpack.c.l.b16 %v927
      %v994 = vunpack.c.h.b16 %v927
      %v995 = vunpack.c.l.b16 %v928
      %v996 = vunpack.c.h.b16 %v928
      %v997 = vunpack.c.l.b16 %v929
      %v998 = vunpack.c.h.b16 %v929
      %v999 = vunpack.c.l.b16 %v930
      %v1000 = vunpack.c.h.b16 %v930
      %v1001 = vunpack.c.l.b16 %v931
      %v1002 = vunpack.c.h.b16 %v931
      %v1003 = vunpack.c.l.b16 %v932
      %v1004 = vunpack.c.h.b16 %v932
      %v1005 = vunpack.c.l.b16 %v933
      %v1006 = vunpack.c.h.b16 %v933
      %v1007 = vunpack.c.l.b16 %v934
      %v1008 = vunpack.c.h.b16 %v934
      %v1009 = vunpack.c.l.b16 %v935
      %v1010 = vunpack.c.h.b16 %v935
      %v1011 = vunpack.c.l.b16 %v936
      %v1012 = vunpack.c.h.b16 %v936
      %v1013 = vunpack.c.l.b16 %v937
      %v1014 = vunpack.c.h.b16 %v937
      %v1015 = vunpack.c.l.b16 %v938
      %v1016 = vunpack.c.h.b16 %v938
      %v1017 = vunpack.c.l.b16 %v939
      %v1018 = vunpack.c.h.b16 %v939
      %v1019 = vunpack.c.l.b16 %v940
      %v1020 = vunpack.c.h.b16 %v940
      %v1021 = vunpack.c.l.b16 %v941
      %v1022 = vunpack.c.h.b16 %v941
      %v1023 = vunpack.c.l.b16 %v942
      %v1024 = vunpack.c.h.b16 %v942
      %v1025 = vunpack.c.l.b16 %v943
      %v1026 = vunpack.c.h.b16 %v943
      %v1027 = vunpack.c.l.b16 %v944
      %v1028 = vunpack.c.h.b16 %v944
      %v1029 = vunpack.c.l.b16 %v945
      %v1030 = vunpack.c.h.b16 %v945
      %v1031 = vunpack.c.l.b16 %v946
      %v1032 = vunpack.c.h.b16 %v946
      %v1033 = vunpack.c.l.b16 %v947
      %v1034 = vunpack.c.h.b16 %v947
      %v1035 = vunpack.c.l.b16 %v948
      %v1036 = vunpack.c.h.b16 %v948
      %v1037 = vunpack.c.l.b16 %v949
      %v1038 = vunpack.c.h.b16 %v949
      %v1039 = vunpack.c.l.b16 %v950
      %v1040 = vunpack.c.h.b16 %v950
      %v1041 = vunpack.c.l.b16 %v951
      %v1042 = vunpack.c.h.b16 %v951
      %v1043 = vunpack.c.l.b16 %v952
      %v1044 = vunpack.c.h.b16 %v952
      %v1045 = vunpack.c.l.b16 %v953
      %v1046 = vunpack.c.h.b16 %v953
      %v1047 = vunpack.c.l.b16 %v954
      %v1048 = vunpack.c.h.b16 %v954
      %v1049 = vunpack.c.l.b16 %v955
      %v1050 = vunpack.c.h.b16 %v955
      %v1051 = vunpack.c.l.b16 %v956
      %v1052 = vunpack.c.h.b16 %v956
      %v1053 = vpack.c.b16 %v991, %v989
      %v1054 = vpack.c.b16 %v992, %v990
      %v1055 = vpack.c.b16 %v995, %v993
      %v1056 = vpack.c.b16 %v996, %v994
      %v1057 = vpack.c.b16 %v999, %v997
      %v1058 = vpack.c.b16 %v1000, %v998
      %v1059 = vpack.c.b16 %v1003, %v1001
      %v1060 = vpack.c.b16 %v1004, %v1002
      %v1061 = vpack.c.b16 %v1007, %v1005
      %v1062 = vpack.c.b16 %v1008, %v1006
      %v1063 = vpack.c.b16 %v1011, %v1009
      %v1064 = vpack.c.b16 %v1012, %v1010
      %v1065 = vpack.c.b16 %v1015, %v1013
      %v1066 = vpack.c.b16 %v1016, %v1014
      %v1067 = vpack.c.b16 %v1019, %v1017
      %v1068 = vpack.c.b16 %v1020, %v1018
      %v1069 = vpack.c.b16 %v1023, %v1021
      %v1070 = vpack.c.b16 %v1024, %v1022
      %v1071 = vpack.c.b16 %v1027, %v1025
      %v1072 = vpack.c.b16 %v1028, %v1026
      %v1073 = vpack.c.b16 %v1031, %v1029
      %v1074 = vpack.c.b16 %v1032, %v1030
      %v1075 = vpack.c.b16 %v1035, %v1033
      %v1076 = vpack.c.b16 %v1036, %v1034
      %v1077 = vpack.c.b16 %v1039, %v1037
      %v1078 = vpack.c.b16 %v1040, %v1038
      %v1079 = vpack.c.b16 %v1043, %v1041
      %v1080 = vpack.c.b16 %v1044, %v1042
      %v1081 = vpack.c.b16 %v1047, %v1045
      %v1082 = vpack.c.b16 %v1048, %v1046
      %v1083 = vpack.c.b16 %v1051, %v1049
      %v1084 = vpack.c.b16 %v1052, %v1050
      %1117 = vmatprep.subr.bf16.mxu0 %v1054
      %1118 = vmatpush1.bf16.msra.mxu0 %v1053
      %1119 = vmatprep.subr.bf16.mxu0 %v1056
      %1120 = vmatpush1.bf16.msra.mxu0 %v1055
      %1121 = vmatprep.subr.bf16.mxu0 %v1058
      %1122 = vmatpush1.bf16.msra.mxu0 %v1057
      %1123 = vmatprep.subr.bf16.mxu0 %v1060
      %1124 = vmatpush1.bf16.msra.mxu0 %v1059
      %1125 = vmatprep.subr.bf16.mxu0 %v1062
      %1126 = vmatpush1.bf16.msra.mxu0 %v1061
      %1127 = vmatprep.subr.bf16.mxu0 %v1064
      %1128 = vmatpush1.bf16.msra.mxu0 %v1063
      %1129 = vmatprep.subr.bf16.mxu0 %v1066
      %1130 = vmatpush1.bf16.msra.mxu0 %v1065
      %1131 = vmatprep.subr.bf16.mxu0 %v1068
      %1132 = vmatpush1.bf16.msra.mxu0 %v1067
      %1133 = vmatprep.subr.bf16.mxu0 %v1070
      %1134 = vmatpush1.bf16.msra.mxu0 %v1069
      %1135 = vmatprep.subr.bf16.mxu0 %v1072
      %1136 = vmatpush1.bf16.msra.mxu0 %v1071
      %1137 = vmatprep.subr.bf16.mxu0 %v1074
      %1138 = vmatpush1.bf16.msra.mxu0 %v1073
      %1139 = vmatprep.subr.bf16.mxu0 %v1076
      %1140 = vmatpush1.bf16.msra.mxu0 %v1075
      %1141 = vmatprep.subr.bf16.mxu0 %v1078
      %1142 = vmatpush1.bf16.msra.mxu0 %v1077
      %1143 = vmatprep.subr.bf16.mxu0 %v1080
      %1144 = vmatpush1.bf16.msra.mxu0 %v1079
      %1145 = vmatprep.subr.bf16.mxu0 %v1082
      %1146 = vmatpush1.bf16.msra.mxu0 %v1081
      %1147 = vmatprep.subr.bf16.mxu0 %v1084
      %1148 = vmatpush1.bf16.msra.mxu0 %v1083
      %1149 = vmatprep.mubr.bf16.mxu0 %v373
      %1150 = vmatmul.mubr.bf16.gmra.mrb[0].mxu0 %v372
      %v1151 = vpop.f32.mrb[0].mxu0
      %v1152 = vadd.f32 0.0, %v1151
      %v1153 = vpop.f32.mrb[0].mxu0
      %v1154 = vadd.f32 0.0, %v1153
      %v1155 = vpop.f32.mrb[0].mxu0
      %v1156 = vadd.f32 0.0, %v1155
      %v1157 = vpop.f32.mrb[0].mxu0
      %v1158 = vadd.f32 0.0, %v1157
      %1159 = vmatprep.mubr.bf16.mxu0 %v375
      %1160 = vmatmul.mubr.bf16.gmra.mrb[0].mxu0 %v374
      %v1161 = vpop.f32.mrb[0].mxu0
      %v1162 = vadd.f32 0.0, %v1161
      %v1163 = vpop.f32.mrb[0].mxu0
      %v1164 = vadd.f32 0.0, %v1163
      %v1165 = vpop.f32.mrb[0].mxu0
      %v1166 = vadd.f32 0.0, %v1165
      %v1167 = vpop.f32.mrb[0].mxu0
      %v1168 = vadd.f32 0.0, %v1167
      %1169 = vdwg.mxu0
      %v1170 = vld [vmem:[#allocation3] sm:$0xff]
      %v1171 = vld [vmem:[#allocation3 + $0x8] sm:$0xff]
      %v1172 = vld [vmem:[#allocation3 + $0x10] sm:$0xff]
      %v1173 = vld [vmem:[#allocation3 + $0x18] sm:$0xff]
      %v1174 = vld [vmem:[#allocation3 + $0x20] sm:$0xff]
      %v1175 = vld [vmem:[#allocation3 + $0x28] sm:$0xff]
      %v1176 = vld [vmem:[#allocation3 + $0x30] sm:$0xff]
      %v1177 = vld [vmem:[#allocation3 + $0x38] sm:$0xff]
      %v1178 = vrot.slane %v1152, 1
      %v1179 = vrot.slane %v1154, 1
      %v1180 = vrot.slane %v1156, 1
      %v1181 = vrot.slane %v1158, 1
      %v1182 = vrot.slane %v1162, 1
      %v1183 = vrot.slane %v1164, 1
      %v1184 = vrot.slane %v1166, 1
      %v1185 = vrot.slane %v1168, 1
      %vm1186 = vcmp.lt.s32.totalorder %v288, 7
      %v1187 = vsel %vm1186, %v1182, %v1184
      %v1188 = vsel %vm1186, %v1183, %v1185
      %v1189 = vsel %vm1186, %v1180, %v1182
      %v1190 = vsel %vm1186, %v1181, %v1183
      %v1191 = vsel %vm1186, %v1178, %v1180
      %v1192 = vsel %vm1186, %v1179, %v1181
      %v1193 = vsel %vm1186, %v1184, %v1178
      %v1194 = vsel %vm1186, %v1185, %v1179
      %v1195 = vmul.f32 %v1191, %v352
      %v1196 = vmul.f32 %v1192, %v352
      %v1197 = vmul.f32 %v1189, %v353
      %v1198 = vmul.f32 %v1190, %v353
      %v1199 = vmul.f32 %v1187, %v354
      %v1200 = vmul.f32 %v1188, %v354
      %v1201 = vmul.f32 %v1193, %v355
      %v1202 = vmul.f32 %v1194, %v355
      %v1203 = vadd.f32 %v1170, %v1195
      %v1204 = vadd.f32 %v1171, %v1196
      %v1205 = vadd.f32 %v1172, %v1197
      %v1206 = vadd.f32 %v1173, %v1198
      %v1207 = vadd.f32 %v1174, %v1199
      %v1208 = vadd.f32 %v1175, %v1200
      %v1209 = vadd.f32 %v1176, %v1201
      %v1210 = vadd.f32 %v1177, %v1202
      %1211 = vst [vmem:[#allocation3] sm:$0xff] %v1203
      %1212 = vst [vmem:[#allocation3 + $0x8] sm:$0xff] %v1204
      %1213 = vst [vmem:[#allocation3 + $0x10] sm:$0xff] %v1205
      %1214 = vst [vmem:[#allocation3 + $0x18] sm:$0xff] %v1206
      %1215 = vst [vmem:[#allocation3 + $0x20] sm:$0xff] %v1207
      %1216 = vst [vmem:[#allocation3 + $0x28] sm:$0xff] %v1208
      %1217 = vst [vmem:[#allocation3 + $0x30] sm:$0xff] %v1209
      %1218 = vst [vmem:[#allocation3 + $0x38] sm:$0xff] %v1210
      %v1219 = vld [vmem:[#allocation3] sm:$0xff]
      %v1220 = vld [vmem:[#allocation3 + $0x8] sm:$0xff]
      %v1221 = vld [vmem:[#allocation3 + $0x10] sm:$0xff]
      %v1222 = vld [vmem:[#allocation3 + $0x18] sm:$0xff]
      %v1223 = vld [vmem:[#allocation3 + $0x20] sm:$0xff]
      %v1224 = vld [vmem:[#allocation3 + $0x28] sm:$0xff]
      %v1225 = vld [vmem:[#allocation3 + $0x30] sm:$0xff]
      %v1226 = vld [vmem:[#allocation3 + $0x38] sm:$0xff]
      %v1227 = vld [vmem:[%s2] sm:$0x3]
      %v1229 = vlaneseq
      %v1230 = vshrl.u32 %v1229, 7
      %v1231 = vsub.s32 0, %v1230
      %v1232 = vrot.slane %v1227, %v1231
      %v1233 = vlaneseq
      %v1234 = vshrl.u32 %v1233, 7
      %v1235 = vsub.s32 1, %v1234
      %v1236 = vrot.slane %v1227, %v1235
      %v1239 = vadd.f32 %v1219, %v1232
      %v1240 = vadd.f32 %v1220, %v1236
      %v1241 = vadd.f32 %v1221, %v1232
      %v1242 = vadd.f32 %v1222, %v1236
      %v1243 = vadd.f32 %v1223, %v1232
      %v1244 = vadd.f32 %v1224, %v1236
      %v1245 = vadd.f32 %v1225, %v1232
      %v1246 = vadd.f32 %v1226, %v1236
      %vm1247 = vcmp.gt.f32.partialorder %v1239, 20.0
      %vm1248 = vcmp.gt.f32.partialorder %v1240, 20.0
      %vm1249 = vcmp.gt.f32.partialorder %v1241, 20.0
      %vm1250 = vcmp.gt.f32.partialorder %v1242, 20.0
      %vm1251 = vcmp.gt.f32.partialorder %v1243, 20.0
      %vm1252 = vcmp.gt.f32.partialorder %v1244, 20.0
      %vm1253 = vcmp.gt.f32.partialorder %v1245, 20.0
      %vm1254 = vcmp.gt.f32.partialorder %v1246, 20.0
      %v1255 = vmin.f32 %v1239, 20.0
      %v1256 = vmin.f32 %v1240, 20.0
      %v1257 = vmin.f32 %v1241, 20.0
      %v1258 = vmin.f32 %v1242, 20.0
      %v1259 = vmin.f32 %v1243, 20.0
      %v1260 = vmin.f32 %v1244, 20.0
      %v1261 = vmin.f32 %v1245, 20.0
      %v1262 = vmin.f32 %v1246, 20.0
      %v1263 = vmul.f32 %v1255, 1.442695
      %v1264 = vpow.pop %v1263
      %v1265 = vmul.f32 %v1256, 1.442695
      %v1266 = vpow.pop %v1265
      %v1267 = vmul.f32 %v1257, 1.442695
      %v1268 = vpow.pop %v1267
      %v1269 = vmul.f32 %v1258, 1.442695
      %v1270 = vpow.pop %v1269
      %v1271 = vmul.f32 %v1259, 1.442695
      %v1272 = vpow.pop %v1271
      %v1273 = vmul.f32 %v1260, 1.442695
      %v1274 = vpow.pop %v1273
      %v1275 = vmul.f32 %v1261, 1.442695
      %v1276 = vpow.pop %v1275
      %v1277 = vmul.f32 %v1262, 1.442695
      %v1278 = vpow.pop %v1277
      %v1279 = vadd.f32 %v1264, 1.0
      %v1280 = vlog2.pop %v1279
      %v1281 = vmul.f32 %v1280, 0.6931472
      %v1282 = vmul.f32 -0.5, %v1264
      %v1283 = vadd.f32 %v1282, 1.0
      %v1284 = vmul.f32 %v1283, %v1264
      %v1285 = vand.u32 2147483647, %v1264
      %vm1286 = vcmp.lt.f32.partialorder %v1285, 0.0004427343
      %v1287 = vsel %vm1286, %v1284, %v1281
      %v1288 = vadd.f32 %v1266, 1.0
      %v1289 = vlog2.pop %v1288
      %v1290 = vmul.f32 %v1289, 0.6931472
      %v1291 = vmul.f32 -0.5, %v1266
      %v1292 = vadd.f32 %v1291, 1.0
      %v1293 = vmul.f32 %v1292, %v1266
      %v1294 = vand.u32 2147483647, %v1266
      %vm1295 = vcmp.lt.f32.partialorder %v1294, 0.0004427343
      %v1296 = vsel %vm1295, %v1293, %v1290
      %v1297 = vadd.f32 %v1268, 1.0
      %v1298 = vlog2.pop %v1297
      %v1299 = vmul.f32 %v1298, 0.6931472
      %v1300 = vmul.f32 -0.5, %v1268
      %v1301 = vadd.f32 %v1300, 1.0
      %v1302 = vmul.f32 %v1301, %v1268
      %v1303 = vand.u32 2147483647, %v1268
      %vm1304 = vcmp.lt.f32.partialorder %v1303, 0.0004427343
      %v1305 = vsel %vm1304, %v1302, %v1299
      %v1306 = vadd.f32 %v1270, 1.0
      %v1307 = vlog2.pop %v1306
      %v1308 = vmul.f32 %v1307, 0.6931472
      %v1309 = vmul.f32 -0.5, %v1270
      %v1310 = vadd.f32 %v1309, 1.0
      %v1311 = vmul.f32 %v1310, %v1270
      %v1312 = vand.u32 2147483647, %v1270
      %vm1313 = vcmp.lt.f32.partialorder %v1312, 0.0004427343
      %v1314 = vsel %vm1313, %v1311, %v1308
      %v1315 = vadd.f32 %v1272, 1.0
      %v1316 = vlog2.pop %v1315
      %v1317 = vmul.f32 %v1316, 0.6931472
      %v1318 = vmul.f32 -0.5, %v1272
      %v1319 = vadd.f32 %v1318, 1.0
      %v1320 = vmul.f32 %v1319, %v1272
      %v1321 = vand.u32 2147483647, %v1272
      %vm1322 = vcmp.lt.f32.partialorder %v1321, 0.0004427343
      %v1323 = vsel %vm1322, %v1320, %v1317
      %v1324 = vadd.f32 %v1274, 1.0
      %v1325 = vlog2.pop %v1324
      %v1326 = vmul.f32 %v1325, 0.6931472
      %v1327 = vmul.f32 -0.5, %v1274
      %v1328 = vadd.f32 %v1327, 1.0
      %v1329 = vmul.f32 %v1328, %v1274
      %v1330 = vand.u32 2147483647, %v1274
      %vm1331 = vcmp.lt.f32.partialorder %v1330, 0.0004427343
      %v1332 = vsel %vm1331, %v1329, %v1326
      %v1333 = vadd.f32 %v1276, 1.0
      %v1334 = vlog2.pop %v1333
      %v1335 = vmul.f32 %v1334, 0.6931472
      %v1336 = vmul.f32 -0.5, %v1276
      %v1337 = vadd.f32 %v1336, 1.0
      %v1338 = vmul.f32 %v1337, %v1276
      %v1339 = vand.u32 2147483647, %v1276
      %vm1340 = vcmp.lt.f32.partialorder %v1339, 0.0004427343
      %v1341 = vsel %vm1340, %v1338, %v1335
      %v1342 = vadd.f32 %v1278, 1.0
      %v1343 = vlog2.pop %v1342
      %v1344 = vmul.f32 %v1343, 0.6931472
      %v1345 = vmul.f32 -0.5, %v1278
      %v1346 = vadd.f32 %v1345, 1.0
      %v1347 = vmul.f32 %v1346, %v1278
      %v1348 = vand.u32 2147483647, %v1278
      %vm1349 = vcmp.lt.f32.partialorder %v1348, 0.0004427343
      %v1350 = vsel %vm1349, %v1347, %v1344
      %v1351 = vsel %vm1247, %v1239, %v1287
      %v1352 = vsel %vm1248, %v1240, %v1296
      %v1353 = vsel %vm1249, %v1241, %v1305
      %v1354 = vsel %vm1250, %v1242, %v1314
      %v1355 = vsel %vm1251, %v1243, %v1323
      %v1356 = vsel %vm1252, %v1244, %v1332
      %v1357 = vsel %vm1253, %v1245, %v1341
      %v1358 = vsel %vm1254, %v1246, %v1350
      %v1359 = vtanh.pop %v1351
      %v1360 = vtanh.pop %v1352
      %v1361 = vtanh.pop %v1353
      %v1362 = vtanh.pop %v1354
      %v1363 = vtanh.pop %v1355
      %v1364 = vtanh.pop %v1356
      %v1365 = vtanh.pop %v1357
      %v1366 = vtanh.pop %v1358
      %v1367 = vmul.f32 %v1239, %v1359
      %v1368 = vmul.f32 %v1240, %v1360
      %v1369 = vmul.f32 %v1241, %v1361
      %v1370 = vmul.f32 %v1242, %v1362
      %v1371 = vmul.f32 %v1243, %v1363
      %v1372 = vmul.f32 %v1244, %v1364
      %v1373 = vmul.f32 %v1245, %v1365
      %v1374 = vmul.f32 %v1246, %v1366
      %v1375 = vpack.c.bf16 %v1369, %v1367
      %v1376 = vpack.c.bf16 %v1370, %v1368
      %v1377 = vpack.c.bf16 %v1373, %v1371
      %v1378 = vpack.c.bf16 %v1374, %v1372
      %1379 = vst [vmem:[#allocation2] sm:$0xff] %v1375
      %1380 = vst [vmem:[#allocation2 + $0x8] sm:$0xff] %v1376
      %1381 = vst [vmem:[#allocation2 + $0x10] sm:$0xff] %v1377
      %1382 = vst [vmem:[#allocation2 + $0x18] sm:$0xff] %v1378
      %v1383 = vld [vmem:[#allocation2] sm:$0xff]
      %v1384 = vld [vmem:[#allocation2 + $0x8] sm:$0xff]
      %v1385 = vld [vmem:[#allocation2 + $0x10] sm:$0xff]
      %v1386 = vld [vmem:[#allocation2 + $0x18] sm:$0xff]
      %s1387 = scalar_lea.vmem %s3, 256
      %v1388 = vld [vmem:[%s1387] sm:$0xff]
      %v1389 = vld [vmem:[%s1387 + $0x8] sm:$0xff]
      %v1390 = vld [vmem:[%s1387 + $0x10] sm:$0xff]
      %v1391 = vld [vmem:[%s1387 + $0x18] sm:$0xff]
      %v1392 = vld [vmem:[%s1387 + $0x20] sm:$0xff]
      %v1393 = vld [vmem:[%s1387 + $0x28] sm:$0xff]
      %v1394 = vld [vmem:[%s1387 + $0x30] sm:$0xff]
      %v1395 = vld [vmem:[%s1387 + $0x38] sm:$0xff]
      %v1396 = vld [vmem:[%s1387 + $0x40] sm:$0xff]
      %v1397 = vld [vmem:[%s1387 + $0x48] sm:$0xff]
      %v1398 = vld [vmem:[%s1387 + $0x50] sm:$0xff]
      %v1399 = vld [vmem:[%s1387 + $0x58] sm:$0xff]
      %v1400 = vld [vmem:[%s1387 + $0x60] sm:$0xff]
      %v1401 = vld [vmem:[%s1387 + $0x68] sm:$0xff]
      %v1402 = vld [vmem:[%s1387 + $0x70] sm:$0xff]
      %v1403 = vld [vmem:[%s1387 + $0x78] sm:$0xff]
      %v1404 = vld [vmem:[%s1387 + $0x80] sm:$0xff]
      %v1405 = vld [vmem:[%s1387 + $0x88] sm:$0xff]
      %v1406 = vld [vmem:[%s1387 + $0x90] sm:$0xff]
      %v1407 = vld [vmem:[%s1387 + $0x98] sm:$0xff]
      %v1408 = vld [vmem:[%s1387 + $0xa0] sm:$0xff]
      %v1409 = vld [vmem:[%s1387 + $0xa8] sm:$0xff]
      %v1410 = vld [vmem:[%s1387 + $0xb0] sm:$0xff]
      %v1411 = vld [vmem:[%s1387 + $0xb8] sm:$0xff]
      %v1412 = vld [vmem:[%s1387 + $0xc0] sm:$0xff]
      %v1413 = vld [vmem:[%s1387 + $0xc8] sm:$0xff]
      %v1414 = vld [vmem:[%s1387 + $0xd0] sm:$0xff]
      %v1415 = vld [vmem:[%s1387 + $0xd8] sm:$0xff]
      %v1416 = vld [vmem:[%s1387 + $0xe0] sm:$0xff]
      %v1417 = vld [vmem:[%s1387 + $0xe8] sm:$0xff]
      %v1418 = vld [vmem:[%s1387 + $0xf0] sm:$0xff]
      %v1419 = vld [vmem:[%s1387 + $0xf8] sm:$0xff]
      %v1452 = vunpack.c.l.b16 %v1388
      %v1453 = vunpack.c.h.b16 %v1388
      %v1454 = vunpack.c.l.b16 %v1389
      %v1455 = vunpack.c.h.b16 %v1389
      %v1456 = vunpack.c.l.b16 %v1390
      %v1457 = vunpack.c.h.b16 %v1390
      %v1458 = vunpack.c.l.b16 %v1391
      %v1459 = vunpack.c.h.b16 %v1391
      %v1460 = vunpack.c.l.b16 %v1392
      %v1461 = vunpack.c.h.b16 %v1392
      %v1462 = vunpack.c.l.b16 %v1393
      %v1463 = vunpack.c.h.b16 %v1393
      %v1464 = vunpack.c.l.b16 %v1394
      %v1465 = vunpack.c.h.b16 %v1394
      %v1466 = vunpack.c.l.b16 %v1395
      %v1467 = vunpack.c.h.b16 %v1395
      %v1468 = vunpack.c.l.b16 %v1396
      %v1469 = vunpack.c.h.b16 %v1396
      %v1470 = vunpack.c.l.b16 %v1397
      %v1471 = vunpack.c.h.b16 %v1397
      %v1472 = vunpack.c.l.b16 %v1398
      %v1473 = vunpack.c.h.b16 %v1398
      %v1474 = vunpack.c.l.b16 %v1399
      %v1475 = vunpack.c.h.b16 %v1399
      %v1476 = vunpack.c.l.b16 %v1400
      %v1477 = vunpack.c.h.b16 %v1400
      %v1478 = vunpack.c.l.b16 %v1401
      %v1479 = vunpack.c.h.b16 %v1401
      %v1480 = vunpack.c.l.b16 %v1402
      %v1481 = vunpack.c.h.b16 %v1402
      %v1482 = vunpack.c.l.b16 %v1403
      %v1483 = vunpack.c.h.b16 %v1403
      %v1484 = vunpack.c.l.b16 %v1404
      %v1485 = vunpack.c.h.b16 %v1404
      %v1486 = vunpack.c.l.b16 %v1405
      %v1487 = vunpack.c.h.b16 %v1405
      %v1488 = vunpack.c.l.b16 %v1406
      %v1489 = vunpack.c.h.b16 %v1406
      %v1490 = vunpack.c.l.b16 %v1407
      %v1491 = vunpack.c.h.b16 %v1407
      %v1492 = vunpack.c.l.b16 %v1408
      %v1493 = vunpack.c.h.b16 %v1408
      %v1494 = vunpack.c.l.b16 %v1409
      %v1495 = vunpack.c.h.b16 %v1409
      %v1496 = vunpack.c.l.b16 %v1410
      %v1497 = vunpack.c.h.b16 %v1410
      %v1498 = vunpack.c.l.b16 %v1411
      %v1499 = vunpack.c.h.b16 %v1411
      %v1500 = vunpack.c.l.b16 %v1412
      %v1501 = vunpack.c.h.b16 %v1412
      %v1502 = vunpack.c.l.b16 %v1413
      %v1503 = vunpack.c.h.b16 %v1413
      %v1504 = vunpack.c.l.b16 %v1414
      %v1505 = vunpack.c.h.b16 %v1414
      %v1506 = vunpack.c.l.b16 %v1415
      %v1507 = vunpack.c.h.b16 %v1415
      %v1508 = vunpack.c.l.b16 %v1416
      %v1509 = vunpack.c.h.b16 %v1416
      %v1510 = vunpack.c.l.b16 %v1417
      %v1511 = vunpack.c.h.b16 %v1417
      %v1512 = vunpack.c.l.b16 %v1418
      %v1513 = vunpack.c.h.b16 %v1418
      %v1514 = vunpack.c.l.b16 %v1419
      %v1515 = vunpack.c.h.b16 %v1419
      %v1516 = vpack.c.b16 %v1454, %v1452
      %v1517 = vpack.c.b16 %v1455, %v1453
      %v1518 = vpack.c.b16 %v1458, %v1456
      %v1519 = vpack.c.b16 %v1459, %v1457
      %v1520 = vpack.c.b16 %v1462, %v1460
      %v1521 = vpack.c.b16 %v1463, %v1461
      %v1522 = vpack.c.b16 %v1466, %v1464
      %v1523 = vpack.c.b16 %v1467, %v1465
      %v1524 = vpack.c.b16 %v1470, %v1468
      %v1525 = vpack.c.b16 %v1471, %v1469
      %v1526 = vpack.c.b16 %v1474, %v1472
      %v1527 = vpack.c.b16 %v1475, %v1473
      %v1528 = vpack.c.b16 %v1478, %v1476
      %v1529 = vpack.c.b16 %v1479, %v1477
      %v1530 = vpack.c.b16 %v1482, %v1480
      %v1531 = vpack.c.b16 %v1483, %v1481
      %v1532 = vpack.c.b16 %v1486, %v1484
      %v1533 = vpack.c.b16 %v1487, %v1485
      %v1534 = vpack.c.b16 %v1490, %v1488
      %v1535 = vpack.c.b16 %v1491, %v1489
      %v1536 = vpack.c.b16 %v1494, %v1492
      %v1537 = vpack.c.b16 %v1495, %v1493
      %v1538 = vpack.c.b16 %v1498, %v1496
      %v1539 = vpack.c.b16 %v1499, %v1497
      %v1540 = vpack.c.b16 %v1502, %v1500
      %v1541 = vpack.c.b16 %v1503, %v1501
      %v1542 = vpack.c.b16 %v1506, %v1504
      %v1543 = vpack.c.b16 %v1507, %v1505
      %v1544 = vpack.c.b16 %v1510, %v1508
      %v1545 = vpack.c.b16 %v1511, %v1509
      %v1546 = vpack.c.b16 %v1514, %v1512
      %v1547 = vpack.c.b16 %v1515, %v1513
      %1580 = vmatprep.subr.bf16.mxu0 %v1517
      %1581 = vmatpush1.bf16.msra.mxu0 %v1516
      %1582 = vmatprep.subr.bf16.mxu0 %v1519
      %1583 = vmatpush1.bf16.msra.mxu0 %v1518
      %1584 = vmatprep.subr.bf16.mxu0 %v1521
      %1585 = vmatpush1.bf16.msra.mxu0 %v1520
      %1586 = vmatprep.subr.bf16.mxu0 %v1523
      %1587 = vmatpush1.bf16.msra.mxu0 %v1522
      %1588 = vmatprep.subr.bf16.mxu0 %v1525
      %1589 = vmatpush1.bf16.msra.mxu0 %v1524
      %1590 = vmatprep.subr.bf16.mxu0 %v1527
      %1591 = vmatpush1.bf16.msra.mxu0 %v1526
      %1592 = vmatprep.subr.bf16.mxu0 %v1529
      %1593 = vmatpush1.bf16.msra.mxu0 %v1528
      %1594 = vmatprep.subr.bf16.mxu0 %v1531
      %1595 = vmatpush1.bf16.msra.mxu0 %v1530
      %1596 = vmatprep.subr.bf16.mxu0 %v1533
      %1597 = vmatpush1.bf16.msra.mxu0 %v1532
      %1598 = vmatprep.subr.bf16.mxu0 %v1535
      %1599 = vmatpush1.bf16.msra.mxu0 %v1534
      %1600 = vmatprep.subr.bf16.mxu0 %v1537
      %1601 = vmatpush1.bf16.msra.mxu0 %v1536
      %1602 = vmatprep.subr.bf16.mxu0 %v1539
      %1603 = vmatpush1.bf16.msra.mxu0 %v1538
      %1604 = vmatprep.subr.bf16.mxu0 %v1541
      %1605 = vmatpush1.bf16.msra.mxu0 %v1540
      %1606 = vmatprep.subr.bf16.mxu0 %v1543
      %1607 = vmatpush1.bf16.msra.mxu0 %v1542
      %1608 = vmatprep.subr.bf16.mxu0 %v1545
      %1609 = vmatpush1.bf16.msra.mxu0 %v1544
      %1610 = vmatprep.subr.bf16.mxu0 %v1547
      %1611 = vmatpush1.bf16.msra.mxu0 %v1546
      %1612 = vmatprep.mubr.bf16.mxu0 %v1384
      %1613 = vmatmul.mubr.bf16.gmra.mrb[0].mxu0 %v1383
      %v1614 = vpop.f32.mrb[0].mxu0
      %v1615 = vadd.f32 0.0, %v1614
      %v1616 = vpop.f32.mrb[0].mxu0
      %v1617 = vadd.f32 0.0, %v1616
      %v1618 = vpop.f32.mrb[0].mxu0
      %v1619 = vadd.f32 0.0, %v1618
      %v1620 = vpop.f32.mrb[0].mxu0
      %v1621 = vadd.f32 0.0, %v1620
      %1622 = vmatprep.mubr.bf16.mxu0 %v1386
      %1623 = vmatmul.mubr.bf16.gmra.mrb[0].mxu0 %v1385
      %v1624 = vpop.f32.mrb[0].mxu0
      %v1625 = vadd.f32 0.0, %v1624
      %v1626 = vpop.f32.mrb[0].mxu0
      %v1627 = vadd.f32 0.0, %v1626
      %v1628 = vpop.f32.mrb[0].mxu0
      %v1629 = vadd.f32 0.0, %v1628
      %v1630 = vpop.f32.mrb[0].mxu0
      %v1631 = vadd.f32 0.0, %v1630
      %1632 = vdwg.mxu0
      %1633 = vst [vmem:[#allocation3] sm:$0xff] %v1615
      %1634 = vst [vmem:[#allocation3 + $0x8] sm:$0xff] %v1617
      %1635 = vst [vmem:[#allocation3 + $0x10] sm:$0xff] %v1619
      %1636 = vst [vmem:[#allocation3 + $0x18] sm:$0xff] %v1621
      %1637 = vst [vmem:[#allocation3 + $0x20] sm:$0xff] %v1625
      %1638 = vst [vmem:[#allocation3 + $0x28] sm:$0xff] %v1627
      %1639 = vst [vmem:[#allocation3 + $0x30] sm:$0xff] %v1629
      %1640 = vst [vmem:[#allocation3 + $0x38] sm:$0xff] %v1631
      %v1641 = vld [vmem:[%s3] sm:$0xff]
      %v1642 = vld [vmem:[%s3 + $0x8] sm:$0xff]
      %v1643 = vld [vmem:[%s3 + $0x10] sm:$0xff]
      %v1644 = vld [vmem:[%s3 + $0x18] sm:$0xff]
      %v1645 = vld [vmem:[%s3 + $0x20] sm:$0xff]
      %v1646 = vld [vmem:[%s3 + $0x28] sm:$0xff]
      %v1647 = vld [vmem:[%s3 + $0x30] sm:$0xff]
      %v1648 = vld [vmem:[%s3 + $0x38] sm:$0xff]
      %v1649 = vld [vmem:[%s3 + $0x40] sm:$0xff]
      %v1650 = vld [vmem:[%s3 + $0x48] sm:$0xff]
      %v1651 = vld [vmem:[%s3 + $0x50] sm:$0xff]
      %v1652 = vld [vmem:[%s3 + $0x58] sm:$0xff]
      %v1653 = vld [vmem:[%s3 + $0x60] sm:$0xff]
      %v1654 = vld [vmem:[%s3 + $0x68] sm:$0xff]
      %v1655 = vld [vmem:[%s3 + $0x70] sm:$0xff]
      %v1656 = vld [vmem:[%s3 + $0x78] sm:$0xff]
      %v1657 = vld [vmem:[%s3 + $0x80] sm:$0xff]
      %v1658 = vld [vmem:[%s3 + $0x88] sm:$0xff]
      %v1659 = vld [vmem:[%s3 + $0x90] sm:$0xff]
      %v1660 = vld [vmem:[%s3 + $0x98] sm:$0xff]
      %v1661 = vld [vmem:[%s3 + $0xa0] sm:$0xff]
      %v1662 = vld [vmem:[%s3 + $0xa8] sm:$0xff]
      %v1663 = vld [vmem:[%s3 + $0xb0] sm:$0xff]
      %v1664 = vld [vmem:[%s3 + $0xb8] sm:$0xff]
      %v1665 = vld [vmem:[%s3 + $0xc0] sm:$0xff]
      %v1666 = vld [vmem:[%s3 + $0xc8] sm:$0xff]
      %v1667 = vld [vmem:[%s3 + $0xd0] sm:$0xff]
      %v1668 = vld [vmem:[%s3 + $0xd8] sm:$0xff]
      %v1669 = vld [vmem:[%s3 + $0xe0] sm:$0xff]
      %v1670 = vld [vmem:[%s3 + $0xe8] sm:$0xff]
      %v1671 = vld [vmem:[%s3 + $0xf0] sm:$0xff]
      %v1672 = vld [vmem:[%s3 + $0xf8] sm:$0xff]
      %v1705 = vunpack.c.l.b16 %v1641
      %v1706 = vunpack.c.h.b16 %v1641
      %v1707 = vunpack.c.l.b16 %v1642
      %v1708 = vunpack.c.h.b16 %v1642
      %v1709 = vunpack.c.l.b16 %v1643
      %v1710 = vunpack.c.h.b16 %v1643
      %v1711 = vunpack.c.l.b16 %v1644
      %v1712 = vunpack.c.h.b16 %v1644
      %v1713 = vunpack.c.l.b16 %v1645
      %v1714 = vunpack.c.h.b16 %v1645
      %v1715 = vunpack.c.l.b16 %v1646
      %v1716 = vunpack.c.h.b16 %v1646
      %v1717 = vunpack.c.l.b16 %v1647
      %v1718 = vunpack.c.h.b16 %v1647
      %v1719 = vunpack.c.l.b16 %v1648
      %v1720 = vunpack.c.h.b16 %v1648
      %v1721 = vunpack.c.l.b16 %v1649
      %v1722 = vunpack.c.h.b16 %v1649
      %v1723 = vunpack.c.l.b16 %v1650
      %v1724 = vunpack.c.h.b16 %v1650
      %v1725 = vunpack.c.l.b16 %v1651
      %v1726 = vunpack.c.h.b16 %v1651
      %v1727 = vunpack.c.l.b16 %v1652
      %v1728 = vunpack.c.h.b16 %v1652
      %v1729 = vunpack.c.l.b16 %v1653
      %v1730 = vunpack.c.h.b16 %v1653
      %v1731 = vunpack.c.l.b16 %v1654
      %v1732 = vunpack.c.h.b16 %v1654
      %v1733 = vunpack.c.l.b16 %v1655
      %v1734 = vunpack.c.h.b16 %v1655
      %v1735 = vunpack.c.l.b16 %v1656
      %v1736 = vunpack.c.h.b16 %v1656
      %v1737 = vunpack.c.l.b16 %v1657
      %v1738 = vunpack.c.h.b16 %v1657
      %v1739 = vunpack.c.l.b16 %v1658
      %v1740 = vunpack.c.h.b16 %v1658
      %v1741 = vunpack.c.l.b16 %v1659
      %v1742 = vunpack.c.h.b16 %v1659
      %v1743 = vunpack.c.l.b16 %v1660
      %v1744 = vunpack.c.h.b16 %v1660
      %v1745 = vunpack.c.l.b16 %v1661
      %v1746 = vunpack.c.h.b16 %v1661
      %v1747 = vunpack.c.l.b16 %v1662
      %v1748 = vunpack.c.h.b16 %v1662
      %v1749 = vunpack.c.l.b16 %v1663
      %v1750 = vunpack.c.h.b16 %v1663
      %v1751 = vunpack.c.l.b16 %v1664
      %v1752 = vunpack.c.h.b16 %v1664
      %v1753 = vunpack.c.l.b16 %v1665
      %v1754 = vunpack.c.h.b16 %v1665
      %v1755 = vunpack.c.l.b16 %v1666
      %v1756 = vunpack.c.h.b16 %v1666
      %v1757 = vunpack.c.l.b16 %v1667
      %v1758 = vunpack.c.h.b16 %v1667
      %v1759 = vunpack.c.l.b16 %v1668
      %v1760 = vunpack.c.h.b16 %v1668
      %v1761 = vunpack.c.l.b16 %v1669
      %v1762 = vunpack.c.h.b16 %v1669
      %v1763 = vunpack.c.l.b16 %v1670
      %v1764 = vunpack.c.h.b16 %v1670
      %v1765 = vunpack.c.l.b16 %v1671
      %v1766 = vunpack.c.h.b16 %v1671
      %v1767 = vunpack.c.l.b16 %v1672
      %v1768 = vunpack.c.h.b16 %v1672
      %v1769 = vpack.c.b16 %v1707, %v1705
      %v1770 = vpack.c.b16 %v1708, %v1706
      %v1771 = vpack.c.b16 %v1711, %v1709
      %v1772 = vpack.c.b16 %v1712, %v1710
      %v1773 = vpack.c.b16 %v1715, %v1713
      %v1774 = vpack.c.b16 %v1716, %v1714
      %v1775 = vpack.c.b16 %v1719, %v1717
      %v1776 = vpack.c.b16 %v1720, %v1718
      %v1777 = vpack.c.b16 %v1723, %v1721
      %v1778 = vpack.c.b16 %v1724, %v1722
      %v1779 = vpack.c.b16 %v1727, %v1725
      %v1780 = vpack.c.b16 %v1728, %v1726
      %v1781 = vpack.c.b16 %v1731, %v1729
      %v1782 = vpack.c.b16 %v1732, %v1730
      %v1783 = vpack.c.b16 %v1735, %v1733
      %v1784 = vpack.c.b16 %v1736, %v1734
      %v1785 = vpack.c.b16 %v1739, %v1737
      %v1786 = vpack.c.b16 %v1740, %v1738
      %v1787 = vpack.c.b16 %v1743, %v1741
      %v1788 = vpack.c.b16 %v1744, %v1742
      %v1789 = vpack.c.b16 %v1747, %v1745
      %v1790 = vpack.c.b16 %v1748, %v1746
      %v1791 = vpack.c.b16 %v1751, %v1749
      %v1792 = vpack.c.b16 %v1752, %v1750
      %v1793 = vpack.c.b16 %v1755, %v1753
      %v1794 = vpack.c.b16 %v1756, %v1754
      %v1795 = vpack.c.b16 %v1759, %v1757
      %v1796 = vpack.c.b16 %v1760, %v1758
      %v1797 = vpack.c.b16 %v1763, %v1761
      %v1798 = vpack.c.b16 %v1764, %v1762
      %v1799 = vpack.c.b16 %v1767, %v1765
      %v1800 = vpack.c.b16 %v1768, %v1766
      %1833 = vmatprep.subr.bf16.mxu0 %v1770
      %1834 = vmatpush1.bf16.msra.mxu0 %v1769
      %1835 = vmatprep.subr.bf16.mxu0 %v1772
      %1836 = vmatpush1.bf16.msra.mxu0 %v1771
      %1837 = vmatprep.subr.bf16.mxu0 %v1774
      %1838 = vmatpush1.bf16.msra.mxu0 %v1773
      %1839 = vmatprep.subr.bf16.mxu0 %v1776
      %1840 = vmatpush1.bf16.msra.mxu0 %v1775
      %1841 = vmatprep.subr.bf16.mxu0 %v1778
      %1842 = vmatpush1.bf16.msra.mxu0 %v1777
      %1843 = vmatprep.subr.bf16.mxu0 %v1780
      %1844 = vmatpush1.bf16.msra.mxu0 %v1779
      %1845 = vmatprep.subr.bf16.mxu0 %v1782
      %1846 = vmatpush1.bf16.msra.mxu0 %v1781
      %1847 = vmatprep.subr.bf16.mxu0 %v1784
      %1848 = vmatpush1.bf16.msra.mxu0 %v1783
      %1849 = vmatprep.subr.bf16.mxu0 %v1786
      %1850 = vmatpush1.bf16.msra.mxu0 %v1785
      %1851 = vmatprep.subr.bf16.mxu0 %v1788
      %1852 = vmatpush1.bf16.msra.mxu0 %v1787
      %1853 = vmatprep.subr.bf16.mxu0 %v1790
      %1854 = vmatpush1.bf16.msra.mxu0 %v1789
      %1855 = vmatprep.subr.bf16.mxu0 %v1792
      %1856 = vmatpush1.bf16.msra.mxu0 %v1791
      %1857 = vmatprep.subr.bf16.mxu0 %v1794
      %1858 = vmatpush1.bf16.msra.mxu0 %v1793
      %1859 = vmatprep.subr.bf16.mxu0 %v1796
      %1860 = vmatpush1.bf16.msra.mxu0 %v1795
      %1861 = vmatprep.subr.bf16.mxu0 %v1798
      %1862 = vmatpush1.bf16.msra.mxu0 %v1797
      %1863 = vmatprep.subr.bf16.mxu0 %v1800
      %1864 = vmatpush1.bf16.msra.mxu0 %v1799
      %1865 = vmatprep.mubr.bf16.mxu0 %v1384
      %1866 = vmatmul.mubr.bf16.gmra.mrb[0].mxu0 %v1383
      %v1867 = vpop.f32.mrb[0].mxu0
      %v1868 = vadd.f32 0.0, %v1867
      %v1869 = vpop.f32.mrb[0].mxu0
      %v1870 = vadd.f32 0.0, %v1869
      %v1871 = vpop.f32.mrb[0].mxu0
      %v1872 = vadd.f32 0.0, %v1871
      %v1873 = vpop.f32.mrb[0].mxu0
      %v1874 = vadd.f32 0.0, %v1873
      %1875 = vmatprep.mubr.bf16.mxu0 %v1386
      %1876 = vmatmul.mubr.bf16.gmra.mrb[0].mxu0 %v1385
      %v1877 = vpop.f32.mrb[0].mxu0
      %v1878 = vadd.f32 0.0, %v1877
      %v1879 = vpop.f32.mrb[0].mxu0
      %v1880 = vadd.f32 0.0, %v1879
      %v1881 = vpop.f32.mrb[0].mxu0
      %v1882 = vadd.f32 0.0, %v1881
      %v1883 = vpop.f32.mrb[0].mxu0
      %v1884 = vadd.f32 0.0, %v1883
      %1885 = vdwg.mxu0
      %v1886 = vld [vmem:[#allocation3] sm:$0xff]
      %v1887 = vld [vmem:[#allocation3 + $0x8] sm:$0xff]
      %v1888 = vld [vmem:[#allocation3 + $0x10] sm:$0xff]
      %v1889 = vld [vmem:[#allocation3 + $0x18] sm:$0xff]
      %v1890 = vld [vmem:[#allocation3 + $0x20] sm:$0xff]
      %v1891 = vld [vmem:[#allocation3 + $0x28] sm:$0xff]
      %v1892 = vld [vmem:[#allocation3 + $0x30] sm:$0xff]
      %v1893 = vld [vmem:[#allocation3 + $0x38] sm:$0xff]
      %v1894 = vrot.slane %v1868, 7
      %v1895 = vrot.slane %v1870, 7
      %v1896 = vrot.slane %v1872, 7
      %v1897 = vrot.slane %v1874, 7
      %v1898 = vrot.slane %v1878, 7
      %v1899 = vrot.slane %v1880, 7
      %v1900 = vrot.slane %v1882, 7
      %v1901 = vrot.slane %v1884, 7
      %v1902 = vsel %vm891, %v1898, %v1900
      %v1903 = vsel %vm891, %v1899, %v1901
      %v1904 = vsel %vm891, %v1896, %v1898
      %v1905 = vsel %vm891, %v1897, %v1899
      %v1906 = vsel %vm891, %v1894, %v1896
      %v1907 = vsel %vm891, %v1895, %v1897
      %v1908 = vsel %vm891, %v1900, %v1894
      %v1909 = vsel %vm891, %v1901, %v1895
      %v1910 = vmul.f32 %v1908, %v344
      %v1911 = vmul.f32 %v1909, %v344
      %v1912 = vmul.f32 %v1906, %v345
      %v1913 = vmul.f32 %v1907, %v345
      %v1914 = vmul.f32 %v1904, %v346
      %v1915 = vmul.f32 %v1905, %v346
      %v1916 = vmul.f32 %v1902, %v347
      %v1917 = vmul.f32 %v1903, %v347
      %v1918 = vadd.f32 %v1886, %v1910
      %v1919 = vadd.f32 %v1887, %v1911
      %v1920 = vadd.f32 %v1888, %v1912
      %v1921 = vadd.f32 %v1889, %v1913
      %v1922 = vadd.f32 %v1890, %v1914
      %v1923 = vadd.f32 %v1891, %v1915
      %v1924 = vadd.f32 %v1892, %v1916
      %v1925 = vadd.f32 %v1893, %v1917
      %1926 = vst [vmem:[#allocation3] sm:$0xff] %v1918
      %1927 = vst [vmem:[#allocation3 + $0x8] sm:$0xff] %v1919
      %1928 = vst [vmem:[#allocation3 + $0x10] sm:$0xff] %v1920
      %1929 = vst [vmem:[#allocation3 + $0x18] sm:$0xff] %v1921
      %1930 = vst [vmem:[#allocation3 + $0x20] sm:$0xff] %v1922
      %1931 = vst [vmem:[#allocation3 + $0x28] sm:$0xff] %v1923
      %1932 = vst [vmem:[#allocation3 + $0x30] sm:$0xff] %v1924
      %1933 = vst [vmem:[#allocation3 + $0x38] sm:$0xff] %v1925
      %s1934 = scalar_lea.vmem %s3, 512
      %v1935 = vld [vmem:[%s1934] sm:$0xff]
      %v1936 = vld [vmem:[%s1934 + $0x8] sm:$0xff]
      %v1937 = vld [vmem:[%s1934 + $0x10] sm:$0xff]
      %v1938 = vld [vmem:[%s1934 + $0x18] sm:$0xff]
      %v1939 = vld [vmem:[%s1934 + $0x20] sm:$0xff]
      %v1940 = vld [vmem:[%s1934 + $0x28] sm:$0xff]
      %v1941 = vld [vmem:[%s1934 + $0x30] sm:$0xff]
      %v1942 = vld [vmem:[%s1934 + $0x38] sm:$0xff]
      %v1943 = vld [vmem:[%s1934 + $0x40] sm:$0xff]
      %v1944 = vld [vmem:[%s1934 + $0x48] sm:$0xff]
      %v1945 = vld [vmem:[%s1934 + $0x50] sm:$0xff]
      %v1946 = vld [vmem:[%s1934 + $0x58] sm:$0xff]
      %v1947 = vld [vmem:[%s1934 + $0x60] sm:$0xff]
      %v1948 = vld [vmem:[%s1934 + $0x68] sm:$0xff]
      %v1949 = vld [vmem:[%s1934 + $0x70] sm:$0xff]
      %v1950 = vld [vmem:[%s1934 + $0x78] sm:$0xff]
      %v1951 = vld [vmem:[%s1934 + $0x80] sm:$0xff]
      %v1952 = vld [vmem:[%s1934 + $0x88] sm:$0xff]
      %v1953 = vld [vmem:[%s1934 + $0x90] sm:$0xff]
      %v1954 = vld [vmem:[%s1934 + $0x98] sm:$0xff]
      %v1955 = vld [vmem:[%s1934 + $0xa0] sm:$0xff]
      %v1956 = vld [vmem:[%s1934 + $0xa8] sm:$0xff]
      %v1957 = vld [vmem:[%s1934 + $0xb0] sm:$0xff]
      %v1958 = vld [vmem:[%s1934 + $0xb8] sm:$0xff]
      %v1959 = vld [vmem:[%s1934 + $0xc0] sm:$0xff]
      %v1960 = vld [vmem:[%s1934 + $0xc8] sm:$0xff]
      %v1961 = vld [vmem:[%s1934 + $0xd0] sm:$0xff]
      %v1962 = vld [vmem:[%s1934 + $0xd8] sm:$0xff]
      %v1963 = vld [vmem:[%s1934 + $0xe0] sm:$0xff]
      %v1964 = vld [vmem:[%s1934 + $0xe8] sm:$0xff]
      %v1965 = vld [vmem:[%s1934 + $0xf0] sm:$0xff]
      %v1966 = vld [vmem:[%s1934 + $0xf8] sm:$0xff]
      %v1999 = vunpack.c.l.b16 %v1935
      %v2000 = vunpack.c.h.b16 %v1935
      %v2001 = vunpack.c.l.b16 %v1936
      %v2002 = vunpack.c.h.b16 %v1936
      %v2003 = vunpack.c.l.b16 %v1937
      %v2004 = vunpack.c.h.b16 %v1937
      %v2005 = vunpack.c.l.b16 %v1938
      %v2006 = vunpack.c.h.b16 %v1938
      %v2007 = vunpack.c.l.b16 %v1939
      %v2008 = vunpack.c.h.b16 %v1939
      %v2009 = vunpack.c.l.b16 %v1940
      %v2010 = vunpack.c.h.b16 %v1940
      %v2011 = vunpack.c.l.b16 %v1941
      %v2012 = vunpack.c.h.b16 %v1941
      %v2013 = vunpack.c.l.b16 %v1942
      %v2014 = vunpack.c.h.b16 %v1942
      %v2015 = vunpack.c.l.b16 %v1943
      %v2016 = vunpack.c.h.b16 %v1943
      %v2017 = vunpack.c.l.b16 %v1944
      %v2018 = vunpack.c.h.b16 %v1944
      %v2019 = vunpack.c.l.b16 %v1945
      %v2020 = vunpack.c.h.b16 %v1945
      %v2021 = vunpack.c.l.b16 %v1946
      %v2022 = vunpack.c.h.b16 %v1946
      %v2023 = vunpack.c.l.b16 %v1947
      %v2024 = vunpack.c.h.b16 %v1947
      %v2025 = vunpack.c.l.b16 %v1948
      %v2026 = vunpack.c.h.b16 %v1948
      %v2027 = vunpack.c.l.b16 %v1949
      %v2028 = vunpack.c.h.b16 %v1949
      %v2029 = vunpack.c.l.b16 %v1950
      %v2030 = vunpack.c.h.b16 %v1950
      %v2031 = vunpack.c.l.b16 %v1951
      %v2032 = vunpack.c.h.b16 %v1951
      %v2033 = vunpack.c.l.b16 %v1952
      %v2034 = vunpack.c.h.b16 %v1952
      %v2035 = vunpack.c.l.b16 %v1953
      %v2036 = vunpack.c.h.b16 %v1953
      %v2037 = vunpack.c.l.b16 %v1954
      %v2038 = vunpack.c.h.b16 %v1954
      %v2039 = vunpack.c.l.b16 %v1955
      %v2040 = vunpack.c.h.b16 %v1955
      %v2041 = vunpack.c.l.b16 %v1956
      %v2042 = vunpack.c.h.b16 %v1956
      %v2043 = vunpack.c.l.b16 %v1957
      %v2044 = vunpack.c.h.b16 %v1957
      %v2045 = vunpack.c.l.b16 %v1958
      %v2046 = vunpack.c.h.b16 %v1958
      %v2047 = vunpack.c.l.b16 %v1959
      %v2048 = vunpack.c.h.b16 %v1959
      %v2049 = vunpack.c.l.b16 %v1960
      %v2050 = vunpack.c.h.b16 %v1960
      %v2051 = vunpack.c.l.b16 %v1961
      %v2052 = vunpack.c.h.b16 %v1961
      %v2053 = vunpack.c.l.b16 %v1962
      %v2054 = vunpack.c.h.b16 %v1962
      %v2055 = vunpack.c.l.b16 %v1963
      %v2056 = vunpack.c.h.b16 %v1963
      %v2057 = vunpack.c.l.b16 %v1964
      %v2058 = vunpack.c.h.b16 %v1964
      %v2059 = vunpack.c.l.b16 %v1965
      %v2060 = vunpack.c.h.b16 %v1965
      %v2061 = vunpack.c.l.b16 %v1966
      %v2062 = vunpack.c.h.b16 %v1966
      %v2063 = vpack.c.b16 %v2001, %v1999
      %v2064 = vpack.c.b16 %v2002, %v2000
      %v2065 = vpack.c.b16 %v2005, %v2003
      %v2066 = vpack.c.b16 %v2006, %v2004
      %v2067 = vpack.c.b16 %v2009, %v2007
      %v2068 = vpack.c.b16 %v2010, %v2008
      %v2069 = vpack.c.b16 %v2013, %v2011
      %v2070 = vpack.c.b16 %v2014, %v2012
      %v2071 = vpack.c.b16 %v2017, %v2015
      %v2072 = vpack.c.b16 %v2018, %v2016
      %v2073 = vpack.c.b16 %v2021, %v2019
      %v2074 = vpack.c.b16 %v2022, %v2020
      %v2075 = vpack.c.b16 %v2025, %v2023
      %v2076 = vpack.c.b16 %v2026, %v2024
      %v2077 = vpack.c.b16 %v2029, %v2027
      %v2078 = vpack.c.b16 %v2030, %v2028
      %v2079 = vpack.c.b16 %v2033, %v2031
      %v2080 = vpack.c.b16 %v2034, %v2032
      %v2081 = vpack.c.b16 %v2037, %v2035
      %v2082 = vpack.c.b16 %v2038, %v2036
      %v2083 = vpack.c.b16 %v2041, %v2039
      %v2084 = vpack.c.b16 %v2042, %v2040
      %v2085 = vpack.c.b16 %v2045, %v2043
      %v2086 = vpack.c.b16 %v2046, %v2044
      %v2087 = vpack.c.b16 %v2049, %v2047
      %v2088 = vpack.c.b16 %v2050, %v2048
      %v2089 = vpack.c.b16 %v2053, %v2051
      %v2090 = vpack.c.b16 %v2054, %v2052
      %v2091 = vpack.c.b16 %v2057, %v2055
      %v2092 = vpack.c.b16 %v2058, %v2056
      %v2093 = vpack.c.b16 %v2061, %v2059
      %v2094 = vpack.c.b16 %v2062, %v2060
      %2127 = vmatprep.subr.bf16.mxu0 %v2064
      %2128 = vmatpush1.bf16.msra.mxu0 %v2063
      %2129 = vmatprep.subr.bf16.mxu0 %v2066
      %2130 = vmatpush1.bf16.msra.mxu0 %v2065
      %2131 = vmatprep.subr.bf16.mxu0 %v2068
      %2132 = vmatpush1.bf16.msra.mxu0 %v2067
      %2133 = vmatprep.subr.bf16.mxu0 %v2070
      %2134 = vmatpush1.bf16.msra.mxu0 %v2069
      %2135 = vmatprep.subr.bf16.mxu0 %v2072
      %2136 = vmatpush1.bf16.msra.mxu0 %v2071
      %2137 = vmatprep.subr.bf16.mxu0 %v2074
      %2138 = vmatpush1.bf16.msra.mxu0 %v2073
      %2139 = vmatprep.subr.bf16.mxu0 %v2076
      %2140 = vmatpush1.bf16.msra.mxu0 %v2075
      %2141 = vmatprep.subr.bf16.mxu0 %v2078
      %2142 = vmatpush1.bf16.msra.mxu0 %v2077
      %2143 = vmatprep.subr.bf16.mxu0 %v2080
      %2144 = vmatpush1.bf16.msra.mxu0 %v2079
      %2145 = vmatprep.subr.bf16.mxu0 %v2082
      %2146 = vmatpush1.bf16.msra.mxu0 %v2081
      %2147 = vmatprep.subr.bf16.mxu0 %v2084
      %2148 = vmatpush1.bf16.msra.mxu0 %v2083
      %2149 = vmatprep.subr.bf16.mxu0 %v2086
      %2150 = vmatpush1.bf16.msra.mxu0 %v2085
      %2151 = vmatprep.subr.bf16.mxu0 %v2088
      %2152 = vmatpush1.bf16.msra.mxu0 %v2087
      %2153 = vmatprep.subr.bf16.mxu0 %v2090
      %2154 = vmatpush1.bf16.msra.mxu0 %v2089
      %2155 = vmatprep.subr.bf16.mxu0 %v2092
      %2156 = vmatpush1.bf16.msra.mxu0 %v2091
      %2157 = vmatprep.subr.bf16.mxu0 %v2094
      %2158 = vmatpush1.bf16.msra.mxu0 %v2093
      %2159 = vmatprep.mubr.bf16.mxu0 %v1384
      %2160 = vmatmul.mubr.bf16.gmra.mrb[0].mxu0 %v1383
      %v2161 = vpop.f32.mrb[0].mxu0
      %v2162 = vadd.f32 0.0, %v2161
      %v2163 = vpop.f32.mrb[0].mxu0
      %v2164 = vadd.f32 0.0, %v2163
      %v2165 = vpop.f32.mrb[0].mxu0
      %v2166 = vadd.f32 0.0, %v2165
      %v2167 = vpop.f32.mrb[0].mxu0
      %v2168 = vadd.f32 0.0, %v2167
      %2169 = vmatprep.mubr.bf16.mxu0 %v1386
      %2170 = vmatmul.mubr.bf16.gmra.mrb[0].mxu0 %v1385
      %v2171 = vpop.f32.mrb[0].mxu0
      %v2172 = vadd.f32 0.0, %v2171
      %v2173 = vpop.f32.mrb[0].mxu0
      %v2174 = vadd.f32 0.0, %v2173
      %v2175 = vpop.f32.mrb[0].mxu0
      %v2176 = vadd.f32 0.0, %v2175
      %v2177 = vpop.f32.mrb[0].mxu0
      %v2178 = vadd.f32 0.0, %v2177
      %2179 = vdwg.mxu0
      %v2180 = vld [vmem:[#allocation3] sm:$0xff]
      %v2181 = vld [vmem:[#allocation3 + $0x8] sm:$0xff]
      %v2182 = vld [vmem:[#allocation3 + $0x10] sm:$0xff]
      %v2183 = vld [vmem:[#allocation3 + $0x18] sm:$0xff]
      %v2184 = vld [vmem:[#allocation3 + $0x20] sm:$0xff]
      %v2185 = vld [vmem:[#allocation3 + $0x28] sm:$0xff]
      %v2186 = vld [vmem:[#allocation3 + $0x30] sm:$0xff]
      %v2187 = vld [vmem:[#allocation3 + $0x38] sm:$0xff]
      %v2188 = vrot.slane %v2162, 1
      %v2189 = vrot.slane %v2164, 1
      %v2190 = vrot.slane %v2166, 1
      %v2191 = vrot.slane %v2168, 1
      %v2192 = vrot.slane %v2172, 1
      %v2193 = vrot.slane %v2174, 1
      %v2194 = vrot.slane %v2176, 1
      %v2195 = vrot.slane %v2178, 1
      %v2196 = vsel %vm1186, %v2192, %v2194
      %v2197 = vsel %vm1186, %v2193, %v2195
      %v2198 = vsel %vm1186, %v2190, %v2192
      %v2199 = vsel %vm1186, %v2191, %v2193
      %v2200 = vsel %vm1186, %v2188, %v2190
      %v2201 = vsel %vm1186, %v2189, %v2191
      %v2202 = vsel %vm1186, %v2194, %v2188
      %v2203 = vsel %vm1186, %v2195, %v2189
      %v2204 = vmul.f32 %v2200, %v352
      %v2205 = vmul.f32 %v2201, %v352
      %v2206 = vmul.f32 %v2198, %v353
      %v2207 = vmul.f32 %v2199, %v353
      %v2208 = vmul.f32 %v2196, %v354
      %v2209 = vmul.f32 %v2197, %v354
      %v2210 = vmul.f32 %v2202, %v355
      %v2211 = vmul.f32 %v2203, %v355
      %v2212 = vadd.f32 %v2180, %v2204
      %v2213 = vadd.f32 %v2181, %v2205
      %v2214 = vadd.f32 %v2182, %v2206
      %v2215 = vadd.f32 %v2183, %v2207
      %v2216 = vadd.f32 %v2184, %v2208
      %v2217 = vadd.f32 %v2185, %v2209
      %v2218 = vadd.f32 %v2186, %v2210
      %v2219 = vadd.f32 %v2187, %v2211
      %2220 = vst [vmem:[#allocation3] sm:$0xff] %v2212
      %2221 = vst [vmem:[#allocation3 + $0x8] sm:$0xff] %v2213
      %2222 = vst [vmem:[#allocation3 + $0x10] sm:$0xff] %v2214
      %2223 = vst [vmem:[#allocation3 + $0x18] sm:$0xff] %v2215
      %2224 = vst [vmem:[#allocation3 + $0x20] sm:$0xff] %v2216
      %2225 = vst [vmem:[#allocation3 + $0x28] sm:$0xff] %v2217
      %2226 = vst [vmem:[#allocation3 + $0x30] sm:$0xff] %v2218
      %2227 = vst [vmem:[#allocation3 + $0x38] sm:$0xff] %v2219
      %v2228 = vld [vmem:[#allocation3] sm:$0xff]
      %v2229 = vld [vmem:[#allocation3 + $0x8] sm:$0xff]
      %v2230 = vld [vmem:[#allocation3 + $0x10] sm:$0xff]
      %v2231 = vld [vmem:[#allocation3 + $0x18] sm:$0xff]
      %v2232 = vld [vmem:[#allocation3 + $0x20] sm:$0xff]
      %v2233 = vld [vmem:[#allocation3 + $0x28] sm:$0xff]
      %v2234 = vld [vmem:[#allocation3 + $0x30] sm:$0xff]
      %v2235 = vld [vmem:[#allocation3 + $0x38] sm:$0xff]
      %v2236 = vld [vmem:[%s4] sm:$0x3]
      %v2238 = vlaneseq
      %v2239 = vshrl.u32 %v2238, 7
      %v2240 = vsub.s32 0, %v2239
      %v2241 = vrot.slane %v2236, %v2240
      %v2242 = vlaneseq
      %v2243 = vshrl.u32 %v2242, 7
      %v2244 = vsub.s32 1, %v2243
      %v2245 = vrot.slane %v2236, %v2244
      %v2248 = vadd.f32 %v2228, %v2241
      %v2249 = vadd.f32 %v2229, %v2245
      %v2250 = vadd.f32 %v2230, %v2241
      %v2251 = vadd.f32 %v2231, %v2245
      %v2252 = vadd.f32 %v2232, %v2241
      %v2253 = vadd.f32 %v2233, %v2245
      %v2254 = vadd.f32 %v2234, %v2241
      %v2255 = vadd.f32 %v2235, %v2245
      %2256 = vst [vmem:[#allocation3] sm:$0xff] %v2248
      %2257 = vst [vmem:[#allocation3 + $0x8] sm:$0xff] %v2249
      %2258 = vst [vmem:[#allocation3 + $0x10] sm:$0xff] %v2250
      %2259 = vst [vmem:[#allocation3 + $0x18] sm:$0xff] %v2251
      %2260 = vst [vmem:[#allocation3 + $0x20] sm:$0xff] %v2252
      %2261 = vst [vmem:[#allocation3 + $0x28] sm:$0xff] %v2253
      %2262 = vst [vmem:[#allocation3 + $0x30] sm:$0xff] %v2254
      %2263 = vst [vmem:[#allocation3 + $0x38] sm:$0xff] %v2255
      %v2264 = vld [vmem:[#allocation3] sm:$0xff]
      %v2265 = vld [vmem:[#allocation3 + $0x8] sm:$0xff]
      %v2266 = vld [vmem:[#allocation3 + $0x10] sm:$0xff]
      %v2267 = vld [vmem:[#allocation3 + $0x18] sm:$0xff]
      %v2268 = vld [vmem:[#allocation3 + $0x20] sm:$0xff]
      %v2269 = vld [vmem:[#allocation3 + $0x28] sm:$0xff]
      %v2270 = vld [vmem:[#allocation3 + $0x30] sm:$0xff]
      %v2271 = vld [vmem:[#allocation3 + $0x38] sm:$0xff]
      %v2272 = vrot.slane %v2264, 4
      %v2273 = vadd.f32 %v2264, %v2272
      %v2274 = vrot.slane %v2273, 2
      %v2275 = vadd.f32 %v2273, %v2274
      %v2276 = vrot.slane %v2275, 1
      %v2277 = vadd.f32 %v2275, %v2276
      %v2278 = vrot.slane %v2265, 4
      %v2279 = vadd.f32 %v2265, %v2278
      %v2280 = vrot.slane %v2279, 2
      %v2281 = vadd.f32 %v2279, %v2280
      %v2282 = vrot.slane %v2281, 1
      %v2283 = vadd.f32 %v2281, %v2282
      %v2284 = vrot.slane %v2266, 4
      %v2285 = vadd.f32 %v2266, %v2284
      %v2286 = vrot.slane %v2285, 2
      %v2287 = vadd.f32 %v2285, %v2286
      %v2288 = vrot.slane %v2287, 1
      %v2289 = vadd.f32 %v2287, %v2288
      %v2290 = vrot.slane %v2267, 4
      %v2291 = vadd.f32 %v2267, %v2290
      %v2292 = vrot.slane %v2291, 2
      %v2293 = vadd.f32 %v2291, %v2292
      %v2294 = vrot.slane %v2293, 1
      %v2295 = vadd.f32 %v2293, %v2294
      %v2296 = vrot.slane %v2268, 4
      %v2297 = vadd.f32 %v2268, %v2296
      %v2298 = vrot.slane %v2297, 2
      %v2299 = vadd.f32 %v2297, %v2298
      %v2300 = vrot.slane %v2299, 1
      %v2301 = vadd.f32 %v2299, %v2300
      %v2302 = vrot.slane %v2269, 4
      %v2303 = vadd.f32 %v2269, %v2302
      %v2304 = vrot.slane %v2303, 2
      %v2305 = vadd.f32 %v2303, %v2304
      %v2306 = vrot.slane %v2305, 1
      %v2307 = vadd.f32 %v2305, %v2306
      %v2308 = vrot.slane %v2270, 4
      %v2309 = vadd.f32 %v2270, %v2308
      %v2310 = vrot.slane %v2309, 2
      %v2311 = vadd.f32 %v2309, %v2310
      %v2312 = vrot.slane %v2311, 1
      %v2313 = vadd.f32 %v2311, %v2312
      %v2314 = vrot.slane %v2271, 4
      %v2315 = vadd.f32 %v2271, %v2314
      %v2316 = vrot.slane %v2315, 2
      %v2317 = vadd.f32 %v2315, %v2316
      %v2318 = vrot.slane %v2317, 1
      %v2319 = vadd.f32 %v2317, %v2318
      %v2320 = vld [vmem:[%s5] sm:$0xff]
      %v2321 = vld [vmem:[%s5 + $0x8] sm:$0xff]
      %v2322 = vld [vmem:[%s5 + $0x10] sm:$0xff]
      %v2323 = vld [vmem:[%s5 + $0x18] sm:$0xff]
      %v2324 = vld [vmem:[%s5 + $0x20] sm:$0xff]
      %v2325 = vld [vmem:[%s5 + $0x28] sm:$0xff]
      %v2326 = vld [vmem:[%s5 + $0x30] sm:$0xff]
      %v2327 = vld [vmem:[%s5 + $0x38] sm:$0xff]
      %v2328 = vld [vmem:[%s5 + $0x40] sm:$0xff]
      %v2329 = vld [vmem:[%s5 + $0x48] sm:$0xff]
      %v2330 = vld [vmem:[%s5 + $0x50] sm:$0xff]
      %v2331 = vld [vmem:[%s5 + $0x58] sm:$0xff]
      %v2332 = vld [vmem:[%s5 + $0x60] sm:$0xff]
      %v2333 = vld [vmem:[%s5 + $0x68] sm:$0xff]
      %v2334 = vld [vmem:[%s5 + $0x70] sm:$0xff]
      %v2335 = vld [vmem:[%s5 + $0x78] sm:$0xff]
      %v2336 = vld [vmem:[%s5 + $0x80] sm:$0xff]
      %v2337 = vld [vmem:[%s5 + $0x88] sm:$0xff]
      %v2338 = vld [vmem:[%s5 + $0x90] sm:$0xff]
      %v2339 = vld [vmem:[%s5 + $0x98] sm:$0xff]
      %v2340 = vld [vmem:[%s5 + $0xa0] sm:$0xff]
      %v2341 = vld [vmem:[%s5 + $0xa8] sm:$0xff]
      %v2342 = vld [vmem:[%s5 + $0xb0] sm:$0xff]
      %v2343 = vld [vmem:[%s5 + $0xb8] sm:$0xff]
      %v2344 = vld [vmem:[%s5 + $0xc0] sm:$0xff]
      %v2345 = vld [vmem:[%s5 + $0xc8] sm:$0xff]
      %v2346 = vld [vmem:[%s5 + $0xd0] sm:$0xff]
      %v2347 = vld [vmem:[%s5 + $0xd8] sm:$0xff]
      %v2348 = vld [vmem:[%s5 + $0xe0] sm:$0xff]
      %v2349 = vld [vmem:[%s5 + $0xe8] sm:$0xff]
      %v2350 = vld [vmem:[%s5 + $0xf0] sm:$0xff]
      %v2351 = vld [vmem:[%s5 + $0xf8] sm:$0xff]
      %vm2360 = vcmask 1041409
      %v2361 = vsel %vm2360, %v2289, %v2277
      %vm2362 = vcmask 1042434
      %v2363 = vsel %vm2362, %v2301, %v2361
      %vm2364 = vcmask 1043459
      %v2365 = vsel %vm2364, %v2313, %v2363
      %v2366 = vsel %vm2360, %v2295, %v2283
      %v2367 = vsel %vm2362, %v2307, %v2366
      %v2368 = vsel %vm2364, %v2319, %v2367
      %2371 = vmatprep.subr.mxu0 0.0
      %2372 = vmatpush1.msra.mxu0 %v2320
      %2373 = vmatprep.subr.mxu0 0.0
      %2374 = vmatpush1.msra.mxu0 %v2321
      %2375 = vmatprep.subr.mxu0 0.0
      %2376 = vmatpush1.msra.mxu0 %v2322
      %2377 = vmatprep.subr.mxu0 0.0
      %2378 = vmatpush1.msra.mxu0 %v2323
      %2379 = vmatprep.subr.mxu0 0.0
      %2380 = vmatpush1.msra.mxu0 %v2324
      %2381 = vmatprep.subr.mxu0 0.0
      %2382 = vmatpush1.msra.mxu0 %v2325
      %2383 = vmatprep.subr.mxu0 0.0
      %2384 = vmatpush1.msra.mxu0 %v2326
      %2385 = vmatprep.subr.mxu0 0.0
      %2386 = vmatpush1.msra.mxu0 %v2327
      %2387 = vmatprep.subr.mxu0 0.0
      %2388 = vmatpush1.msra.mxu0 %v2328
      %2389 = vmatprep.subr.mxu0 0.0
      %2390 = vmatpush1.msra.mxu0 %v2329
      %2391 = vmatprep.subr.mxu0 0.0
      %2392 = vmatpush1.msra.mxu0 %v2330
      %2393 = vmatprep.subr.mxu0 0.0
      %2394 = vmatpush1.msra.mxu0 %v2331
      %2395 = vmatprep.subr.mxu0 0.0
      %2396 = vmatpush1.msra.mxu0 %v2332
      %2397 = vmatprep.subr.mxu0 0.0
      %2398 = vmatpush1.msra.mxu0 %v2333
      %2399 = vmatprep.subr.mxu0 0.0
      %2400 = vmatpush1.msra.mxu0 %v2334
      %2401 = vmatprep.subr.mxu0 0.0
      %2402 = vmatpush1.msra.mxu0 %v2335
      %2403 = vmatprep.subr.mxu0 0.0
      %2404 = vmatpush1.msra.mxu0 %v2336
      %2405 = vmatprep.subr.mxu0 0.0
      %2406 = vmatpush1.msra.mxu0 %v2337
      %2407 = vmatprep.subr.mxu0 0.0
      %2408 = vmatpush1.msra.mxu0 %v2338
      %2409 = vmatprep.subr.mxu0 0.0
      %2410 = vmatpush1.msra.mxu0 %v2339
      %2411 = vmatprep.subr.mxu0 0.0
      %2412 = vmatpush1.msra.mxu0 %v2340
      %2413 = vmatprep.subr.mxu0 0.0
      %2414 = vmatpush1.msra.mxu0 %v2341
      %2415 = vmatprep.subr.mxu0 0.0
      %2416 = vmatpush1.msra.mxu0 %v2342
      %2417 = vmatprep.subr.mxu0 0.0
      %2418 = vmatpush1.msra.mxu0 %v2343
      %2419 = vmatprep.subr.mxu0 0.0
      %2420 = vmatpush1.msra.mxu0 %v2344
      %2421 = vmatprep.subr.mxu0 0.0
      %2422 = vmatpush1.msra.mxu0 %v2345
      %2423 = vmatprep.subr.mxu0 0.0
      %2424 = vmatpush1.msra.mxu0 %v2346
      %2425 = vmatprep.subr.mxu0 0.0
      %2426 = vmatpush1.msra.mxu0 %v2347
      %2427 = vmatprep.subr.mxu0 0.0
      %2428 = vmatpush1.msra.mxu0 %v2348
      %2429 = vmatprep.subr.mxu0 0.0
      %2430 = vmatpush1.msra.mxu0 %v2349
      %2431 = vmatprep.subr.mxu0 0.0
      %2432 = vmatpush1.msra.mxu0 %v2350
      %2433 = vmatprep.subr.mxu0 0.0
      %2434 = vmatpush1.msra.mxu0 %v2351
      %2435 = vmatprep.mubr.f32.mxu0 %v2368
      %2436 = vmatmul.mubr.f32.gmra.mrb[0].mxu0 %v2365
      %v2437 = vpop.f32.mrb[0].mxu0
      %v2438 = vadd.f32 0.0, %v2437
      %v2439 = vpop.f32.mrb[0].mxu0
      %2440 = vdwg.mxu0
      %v2441 = vmax.f32 %v2438, 0.0
      %v2442 = vld [vmem:[%s6] sm:$0xff]
      %v2443 = vld [vmem:[%s6 + $0x8] sm:$0xff]
      %v2444 = vld [vmem:[%s6 + $0x10] sm:$0xff]
      %v2445 = vld [vmem:[%s6 + $0x18] sm:$0xff]
      %v2446 = vld [vmem:[%s6 + $0x20] sm:$0xff]
      %v2447 = vld [vmem:[%s6 + $0x28] sm:$0xff]
      %v2448 = vld [vmem:[%s6 + $0x30] sm:$0xff]
      %v2449 = vld [vmem:[%s6 + $0x38] sm:$0xff]
      %v2450 = vld [vmem:[%s6 + $0x40] sm:$0xff]
      %v2451 = vld [vmem:[%s6 + $0x48] sm:$0xff]
      %v2452 = vld [vmem:[%s6 + $0x50] sm:$0xff]
      %v2453 = vld [vmem:[%s6 + $0x58] sm:$0xff]
      %v2454 = vld [vmem:[%s6 + $0x60] sm:$0xff]
      %v2455 = vld [vmem:[%s6 + $0x68] sm:$0xff]
      %v2456 = vld [vmem:[%s6 + $0x70] sm:$0xff]
      %v2457 = vld [vmem:[%s6 + $0x78] sm:$0xff]
      %v2458 = vld [vmem:[%s6 + $0x80] sm:$0xff]
      %v2459 = vld [vmem:[%s6 + $0x88] sm:$0xff]
      %v2460 = vld [vmem:[%s6 + $0x90] sm:$0xff]
      %v2461 = vld [vmem:[%s6 + $0x98] sm:$0xff]
      %v2462 = vld [vmem:[%s6 + $0xa0] sm:$0xff]
      %v2463 = vld [vmem:[%s6 + $0xa8] sm:$0xff]
      %v2464 = vld [vmem:[%s6 + $0xb0] sm:$0xff]
      %v2465 = vld [vmem:[%s6 + $0xb8] sm:$0xff]
      %v2466 = vld [vmem:[%s6 + $0xc0] sm:$0xff]
      %v2467 = vld [vmem:[%s6 + $0xc8] sm:$0xff]
      %v2468 = vld [vmem:[%s6 + $0xd0] sm:$0xff]
      %v2469 = vld [vmem:[%s6 + $0xd8] sm:$0xff]
      %v2470 = vld [vmem:[%s6 + $0xe0] sm:$0xff]
      %v2471 = vld [vmem:[%s6 + $0xe8] sm:$0xff]
      %v2472 = vld [vmem:[%s6 + $0xf0] sm:$0xff]
      %v2473 = vld [vmem:[%s6 + $0xf8] sm:$0xff]
      %2474 = vmatprep.subr.mxu0 %v2443
      %2475 = vmatpush1.msra.mxu0 %v2442
      %2476 = vmatprep.subr.mxu0 %v2445
      %2477 = vmatpush1.msra.mxu0 %v2444
      %2478 = vmatprep.subr.mxu0 %v2447
      %2479 = vmatpush1.msra.mxu0 %v2446
      %2480 = vmatprep.subr.mxu0 %v2449
      %2481 = vmatpush1.msra.mxu0 %v2448
      %2482 = vmatprep.subr.mxu0 %v2451
      %2483 = vmatpush1.msra.mxu0 %v2450
      %2484 = vmatprep.subr.mxu0 %v2453
      %2485 = vmatpush1.msra.mxu0 %v2452
      %2486 = vmatprep.subr.mxu0 %v2455
      %2487 = vmatpush1.msra.mxu0 %v2454
      %2488 = vmatprep.subr.mxu0 %v2457
      %2489 = vmatpush1.msra.mxu0 %v2456
      %2490 = vmatprep.subr.mxu0 %v2459
      %2491 = vmatpush1.msra.mxu0 %v2458
      %2492 = vmatprep.subr.mxu0 %v2461
      %2493 = vmatpush1.msra.mxu0 %v2460
      %2494 = vmatprep.subr.mxu0 %v2463
      %2495 = vmatpush1.msra.mxu0 %v2462
      %2496 = vmatprep.subr.mxu0 %v2465
      %2497 = vmatpush1.msra.mxu0 %v2464
      %2498 = vmatprep.subr.mxu0 %v2467
      %2499 = vmatpush1.msra.mxu0 %v2466
      %2500 = vmatprep.subr.mxu0 %v2469
      %2501 = vmatpush1.msra.mxu0 %v2468
      %2502 = vmatprep.subr.mxu0 %v2471
      %2503 = vmatpush1.msra.mxu0 %v2470
      %2504 = vmatprep.subr.mxu0 %v2473
      %2505 = vmatpush1.msra.mxu0 %v2472
      %2506 = vmatprep.subr.mxu0 0.0
      %2507 = vmatpush1.msra.mxu0 0.0
      %2508 = vmatprep.subr.mxu0 0.0
      %2509 = vmatpush1.msra.mxu0 0.0
      %2510 = vmatprep.subr.mxu0 0.0
      %2511 = vmatpush1.msra.mxu0 0.0
      %2512 = vmatprep.subr.mxu0 0.0
      %2513 = vmatpush1.msra.mxu0 0.0
      %2514 = vmatprep.subr.mxu0 0.0
      %2515 = vmatpush1.msra.mxu0 0.0
      %2516 = vmatprep.subr.mxu0 0.0
      %2517 = vmatpush1.msra.mxu0 0.0
      %2518 = vmatprep.subr.mxu0 0.0
      %2519 = vmatpush1.msra.mxu0 0.0
      %2520 = vmatprep.subr.mxu0 0.0
      %2521 = vmatpush1.msra.mxu0 0.0
      %2522 = vmatprep.subr.mxu0 0.0
      %2523 = vmatpush1.msra.mxu0 0.0
      %2524 = vmatprep.subr.mxu0 0.0
      %2525 = vmatpush1.msra.mxu0 0.0
      %2526 = vmatprep.subr.mxu0 0.0
      %2527 = vmatpush1.msra.mxu0 0.0
      %2528 = vmatprep.subr.mxu0 0.0
      %2529 = vmatpush1.msra.mxu0 0.0
      %2530 = vmatprep.subr.mxu0 0.0
      %2531 = vmatpush1.msra.mxu0 0.0
      %2532 = vmatprep.subr.mxu0 0.0
      %2533 = vmatpush1.msra.mxu0 0.0
      %2534 = vmatprep.subr.mxu0 0.0
      %2535 = vmatpush1.msra.mxu0 0.0
      %2536 = vmatprep.subr.mxu0 0.0
      %2537 = vmatpush1.msra.mxu0 0.0
      %2538 = vmatprep.mubr.f32.mxu0 0.0
      %2539 = vmatmul.mubr.f32.gmra.mrb[0].mxu0 %v2441
      %v2540 = vpop.f32.mrb[0].mxu0
      %v2541 = vadd.f32 0.0, %v2540
      %v2542 = vpop.f32.mrb[0].mxu0
      %v2543 = vadd.f32 0.0, %v2542
      %2544 = vdwg.mxu0
      %v2545 = vxor.u32 %v2541, 2147483648
      %v2546 = vxor.u32 %v2543, 2147483648
      %v2547 = vmul.f32 %v2545, 1.442695
      %v2548 = vpow.pop %v2547
      %v2549 = vmul.f32 %v2546, 1.442695
      %v2550 = vpow.pop %v2549
      %v2551 = vadd.f32 %v2548, 1.0
      %v2552 = vadd.f32 %v2550, 1.0
      %v2553 = vrcp.pop %v2551
      %v2554 = vmul.f32 1.0, %v2553
      %v2555 = vrcp.pop %v2552
      %v2556 = vmul.f32 1.0, %v2555
      %v2559 = vcombine.low %v2554, %v2556
      %v2561 = vunpack.c.l.s4 1966171168
      %v2562 = vunpack.c.0.s8 %v2561
      %v2563 = vlaneseq
      %v2564 = vshrl.u32 %v2563, 7
      %v2565 = vsub.s32 %v2562, %v2564
      %v2566 = vrot.slane %v2559, %v2565
      %v2567 = vcombine.high %v2566, %v2566
      %v2569 = vunpack.c.l.s4 1966171168
      %v2570 = vunpack.c.0.s8 %v2569
      %v2571 = vlaneseq
      %v2572 = vshrl.u32 %v2571, 7
      %v2573 = vsub.s32 %v2570, %v2572
      %v2574 = vrot.slane %v2566, %v2573
      %v2576 = vunpack.c.l.s4 1966171168
      %v2577 = vunpack.c.0.s8 %v2576
      %v2578 = vlaneseq
      %v2579 = vshrl.u32 %v2578, 7
      %v2580 = vsub.s32 %v2577, %v2579
      %v2581 = vrot.slane %v2567, %v2580
      %v2582 = vcombine.high %v2574, %v2574
      %v2583 = vcombine.high %v2581, %v2581
      %v2584 = vlaneseq
      %v2585 = vshrl.u32 %v2584, 7
      %v2586 = vsub.s32 0, %v2585
      %v2587 = vrot.slane %v2574, %v2586
      %v2588 = vlaneseq
      %v2589 = vshrl.u32 %v2588, 7
      %v2590 = vsub.s32 1, %v2589
      %v2591 = vrot.slane %v2574, %v2590
      %v2592 = vlaneseq
      %v2593 = vshrl.u32 %v2592, 7
      %v2594 = vsub.s32 0, %v2593
      %v2595 = vrot.slane %v2581, %v2594
      %v2596 = vlaneseq
      %v2597 = vshrl.u32 %v2596, 7
      %v2598 = vsub.s32 1, %v2597
      %v2599 = vrot.slane %v2581, %v2598
      %v2600 = vlaneseq
      %v2601 = vshrl.u32 %v2600, 7
      %v2602 = vsub.s32 0, %v2601
      %v2603 = vrot.slane %v2582, %v2602
      %v2604 = vlaneseq
      %v2605 = vshrl.u32 %v2604, 7
      %v2606 = vsub.s32 1, %v2605
      %v2607 = vrot.slane %v2582, %v2606
      %v2608 = vlaneseq
      %v2609 = vshrl.u32 %v2608, 7
      %v2610 = vsub.s32 0, %v2609
      %v2611 = vrot.slane %v2583, %v2610
      %v2612 = vlaneseq
      %v2613 = vshrl.u32 %v2612, 7
      %v2614 = vsub.s32 1, %v2613
      %v2615 = vrot.slane %v2583, %v2614
      %v2624 = vmul.f32 %v2264, %v2587
      %v2625 = vmul.f32 %v2265, %v2591
      %v2626 = vmul.f32 %v2266, %v2595
      %v2627 = vmul.f32 %v2267, %v2599
      %v2628 = vmul.f32 %v2268, %v2603
      %v2629 = vmul.f32 %v2269, %v2607
      %v2630 = vmul.f32 %v2270, %v2611
      %v2631 = vmul.f32 %v2271, %v2615
      %v2632 = vld [vmem:[%s278] sm:$0xff]
      %v2633 = vld [vmem:[%s278 + $0x8] sm:$0xff]
      %v2634 = vld [vmem:[%s278 + $0x10] sm:$0xff]
      %v2635 = vld [vmem:[%s278 + $0x18] sm:$0xff]
      %v2636 = vld [vmem:[%s278 + $0x20] sm:$0xff]
      %v2637 = vld [vmem:[%s278 + $0x28] sm:$0xff]
      %v2638 = vld [vmem:[%s278 + $0x30] sm:$0xff]
      %v2639 = vld [vmem:[%s278 + $0x38] sm:$0xff]
      %v2640 = vadd.f32 %v2624, %v2632
      %v2641 = vadd.f32 %v2625, %v2633
      %v2642 = vadd.f32 %v2626, %v2634
      %v2643 = vadd.f32 %v2627, %v2635
      %v2644 = vadd.f32 %v2628, %v2636
      %v2645 = vadd.f32 %v2629, %v2637
      %v2646 = vadd.f32 %v2630, %v2638
      %v2647 = vadd.f32 %v2631, %v2639
      %vm2648 = vcmp.gt.f32.partialorder %v2640, 20.0
      %vm2649 = vcmp.gt.f32.partialorder %v2641, 20.0
      %vm2650 = vcmp.gt.f32.partialorder %v2642, 20.0
      %vm2651 = vcmp.gt.f32.partialorder %v2643, 20.0
      %vm2652 = vcmp.gt.f32.partialorder %v2644, 20.0
      %vm2653 = vcmp.gt.f32.partialorder %v2645, 20.0
      %vm2654 = vcmp.gt.f32.partialorder %v2646, 20.0
      %vm2655 = vcmp.gt.f32.partialorder %v2647, 20.0
      %v2656 = vmin.f32 %v2640, 20.0
      %v2657 = vmin.f32 %v2641, 20.0
      %v2658 = vmin.f32 %v2642, 20.0
      %v2659 = vmin.f32 %v2643, 20.0
      %v2660 = vmin.f32 %v2644, 20.0
      %v2661 = vmin.f32 %v2645, 20.0
      %v2662 = vmin.f32 %v2646, 20.0
      %v2663 = vmin.f32 %v2647, 20.0
      %v2664 = vmul.f32 %v2656, 1.442695
      %v2665 = vpow.pop %v2664
      %v2666 = vmul.f32 %v2657, 1.442695
      %v2667 = vpow.pop %v2666
      %v2668 = vmul.f32 %v2658, 1.442695
      %v2669 = vpow.pop %v2668
      %v2670 = vmul.f32 %v2659, 1.442695
      %v2671 = vpow.pop %v2670
      %v2672 = vmul.f32 %v2660, 1.442695
      %v2673 = vpow.pop %v2672
      %v2674 = vmul.f32 %v2661, 1.442695
      %v2675 = vpow.pop %v2674
      %v2676 = vmul.f32 %v2662, 1.442695
      %v2677 = vpow.pop %v2676
      %v2678 = vmul.f32 %v2663, 1.442695
      %v2679 = vpow.pop %v2678
      %v2680 = vadd.f32 %v2665, 1.0
      %v2681 = vlog2.pop %v2680
      %v2682 = vmul.f32 %v2681, 0.6931472
      %v2683 = vmul.f32 -0.5, %v2665
      %v2684 = vadd.f32 %v2683, 1.0
      %v2685 = vmul.f32 %v2684, %v2665
      %v2686 = vand.u32 2147483647, %v2665
      %vm2687 = vcmp.lt.f32.partialorder %v2686, 0.0004427343
      %v2688 = vsel %vm2687, %v2685, %v2682
      %v2689 = vadd.f32 %v2667, 1.0
      %v2690 = vlog2.pop %v2689
      %v2691 = vmul.f32 %v2690, 0.6931472
      %v2692 = vmul.f32 -0.5, %v2667
      %v2693 = vadd.f32 %v2692, 1.0
      %v2694 = vmul.f32 %v2693, %v2667
      %v2695 = vand.u32 2147483647, %v2667
      %vm2696 = vcmp.lt.f32.partialorder %v2695, 0.0004427343
      %v2697 = vsel %vm2696, %v2694, %v2691
      %v2698 = vadd.f32 %v2669, 1.0
      %v2699 = vlog2.pop %v2698
      %v2700 = vmul.f32 %v2699, 0.6931472
      %v2701 = vmul.f32 -0.5, %v2669
      %v2702 = vadd.f32 %v2701, 1.0
      %v2703 = vmul.f32 %v2702, %v2669
      %v2704 = vand.u32 2147483647, %v2669
      %vm2705 = vcmp.lt.f32.partialorder %v2704, 0.0004427343
      %v2706 = vsel %vm2705, %v2703, %v2700
      %v2707 = vadd.f32 %v2671, 1.0
      %v2708 = vlog2.pop %v2707
      %v2709 = vmul.f32 %v2708, 0.6931472
      %v2710 = vmul.f32 -0.5, %v2671
      %v2711 = vadd.f32 %v2710, 1.0
      %v2712 = vmul.f32 %v2711, %v2671
      %v2713 = vand.u32 2147483647, %v2671
      %vm2714 = vcmp.lt.f32.partialorder %v2713, 0.0004427343
      %v2715 = vsel %vm2714, %v2712, %v2709
      %v2716 = vadd.f32 %v2673, 1.0
      %v2717 = vlog2.pop %v2716
      %v2718 = vmul.f32 %v2717, 0.6931472
      %v2719 = vmul.f32 -0.5, %v2673
      %v2720 = vadd.f32 %v2719, 1.0
      %v2721 = vmul.f32 %v2720, %v2673
      %v2722 = vand.u32 2147483647, %v2673
      %vm2723 = vcmp.lt.f32.partialorder %v2722, 0.0004427343
      %v2724 = vsel %vm2723, %v2721, %v2718
      %v2725 = vadd.f32 %v2675, 1.0
      %v2726 = vlog2.pop %v2725
      %v2727 = vmul.f32 %v2726, 0.6931472
      %v2728 = vmul.f32 -0.5, %v2675
      %v2729 = vadd.f32 %v2728, 1.0
      %v2730 = vmul.f32 %v2729, %v2675
      %v2731 = vand.u32 2147483647, %v2675
      %vm2732 = vcmp.lt.f32.partialorder %v2731, 0.0004427343
      %v2733 = vsel %vm2732, %v2730, %v2727
      %v2734 = vadd.f32 %v2677, 1.0
      %v2735 = vlog2.pop %v2734
      %v2736 = vmul.f32 %v2735, 0.6931472
      %v2737 = vmul.f32 -0.5, %v2677
      %v2738 = vadd.f32 %v2737, 1.0
      %v2739 = vmul.f32 %v2738, %v2677
      %v2740 = vand.u32 2147483647, %v2677
      %vm2741 = vcmp.lt.f32.partialorder %v2740, 0.0004427343
      %v2742 = vsel %vm2741, %v2739, %v2736
      %v2743 = vadd.f32 %v2679, 1.0
      %v2744 = vlog2.pop %v2743
      %v2745 = vmul.f32 %v2744, 0.6931472
      %v2746 = vmul.f32 -0.5, %v2679
      %v2747 = vadd.f32 %v2746, 1.0
      %v2748 = vmul.f32 %v2747, %v2679
      %v2749 = vand.u32 2147483647, %v2679
      %vm2750 = vcmp.lt.f32.partialorder %v2749, 0.0004427343
      %v2751 = vsel %vm2750, %v2748, %v2745
      %v2752 = vsel %vm2648, %v2640, %v2688
      %v2753 = vsel %vm2649, %v2641, %v2697
      %v2754 = vsel %vm2650, %v2642, %v2706
      %v2755 = vsel %vm2651, %v2643, %v2715
      %v2756 = vsel %vm2652, %v2644, %v2724
      %v2757 = vsel %vm2653, %v2645, %v2733
      %v2758 = vsel %vm2654, %v2646, %v2742
      %v2759 = vsel %vm2655, %v2647, %v2751
      %v2760 = vtanh.pop %v2752
      %v2761 = vtanh.pop %v2753
      %v2762 = vtanh.pop %v2754
      %v2763 = vtanh.pop %v2755
      %v2764 = vtanh.pop %v2756
      %v2765 = vtanh.pop %v2757
      %v2766 = vtanh.pop %v2758
      %v2767 = vtanh.pop %v2759
      %v2768 = vmul.f32 %v2640, %v2760
      %v2769 = vmul.f32 %v2641, %v2761
      %v2770 = vmul.f32 %v2642, %v2762
      %v2771 = vmul.f32 %v2643, %v2763
      %v2772 = vmul.f32 %v2644, %v2764
      %v2773 = vmul.f32 %v2645, %v2765
      %v2774 = vmul.f32 %v2646, %v2766
      %v2775 = vmul.f32 %v2647, %v2767
      %2776 = vst [vmem:[%s285] sm:$0xff] %v2768
      %2777 = vst [vmem:[%s285 + $0x8] sm:$0xff] %v2769
      %2778 = vst [vmem:[%s285 + $0x10] sm:$0xff] %v2770
      %2779 = vst [vmem:[%s285 + $0x18] sm:$0xff] %v2771
      %2780 = vst [vmem:[%s285 + $0x20] sm:$0xff] %v2772
      %2781 = vst [vmem:[%s285 + $0x28] sm:$0xff] %v2773
      %2782 = vst [vmem:[%s285 + $0x30] sm:$0xff] %v2774
      %2783 = vst [vmem:[%s285 + $0x38] sm:$0xff] %v2775
      %s2784 = smul.u32 4, %s18
      %p2785 = scmp.lt.s32.totalorder %s2784, 7
      %s2786 = scalar_select %p2785, %s2784, 7
      %s2787 = smul.addr %s2786, 2
      %s2788 = smul.addr %s2787, 8
      %s2789 = scalar_lea.vmem %s7, %s2788
      // Predicated region
      $region49: #{se_residual_block.1} parent=47 // pred_check
        %p2790 = pneg %p188
      $region50: #{se_residual_block.1} parent=47 // pred_check_branch
        %2792 = sbr.rel (%p2790) target = $region52
      $region51: #{se_residual_block.1} parent=47 // pred_region
        %s2793 = smul.u32 4, %s18
      $region52: #{se_residual_block.1} parent=47 // pred_fallthru
        _
    $region48: #{se_residual_block.1} parent=5 // pred_fallthru
      _
    %p2794 = scmp.le.s32.totalorder 2, %s13
    // Predicated region
    $region53: #{se_residual_block.1} parent=5 // pred_check
      %p2795 = pneg %p2794
    $region54: #{se_residual_block.1} parent=5 // pred_check_branch
      %2797 = sbr.rel (%p2795) target = $region56
    $region55: #{se_residual_block.1} parent=5 // pred_region
      %s2798 = ssub.s32 %s13, 2
      // Predicated region
      $region57: #{se_residual_block.1} parent=55 // pred_check
        %p2799 = pneg %p194
      $region58: #{se_residual_block.1} parent=55 // pred_check_branch
        %2801 = sbr.rel (%p2799) target = $region60
      $region59: #{se_residual_block.1} parent=55 // pred_region
        %s2802 = smul.u32 4, %s19
        %p2803 = scmp.lt.s32.totalorder %s2802, 7
        %s2804 = scalar_select %p2803, %s2802, 7
        %s2805 = smul.addr %s2804, 2
        %s2806 = smul.addr %s2805, 8
        %s2807 = scalar_lea.vmem %s7, %s2806
      $region60: #{se_residual_block.1} parent=55 // pred_fallthru
        _
    $region56: #{se_residual_block.1} parent=5 // pred_fallthru
      _
  $region6: #{se_residual_block.1} parent=0 // loop_footer
    %s17 = sadd.s32 1, %s13
  $region7: #{se_residual_block.1} parent=0 // loop_footer_branch
    %12 = sbr.rel target = $region3
  $region8: #{se_residual_block.1} parent=0 // loop_exit
    _

</llo_original>
